<compile_context>
chip_gen: v7x
topology: tpu7x:2x2x1
jax: 0.10.0
libtpu: 0.0.40
codegen_flags: <defaults>
</compile_context>

<pallas_src>
import functools
import math

import numpy as np
import jax
import jax.numpy as jnp
from jax.experimental import pallas as pl
from jax.experimental.pallas import tpu as pltpu

EPS = 1e-5          # nn.BatchNorm2d default eps
KSIZE = 5
STRIDE = 2
LANE = 128


def _conv_out(size, k=KSIZE, s=STRIDE):
    return (size - (k - 1) - 1) // s + 1


def _round_up(x, m):
    return ((x + m - 1) // m) * m


# --------------------------------------------------------------------------- #
# Fused Pallas kernel: conv1+bn1+relu -> conv2+bn2+relu -> conv3+bn3+relu -> head
# All activations stay as values; only plain 2-D GEMMs, adds and ReLU inside.
# --------------------------------------------------------------------------- #
def _dqn_kernel(x_ref, wc1_ref, hs1_ref, b1_ref, wc2_ref, hs2_ref, b2_ref,
                wc3_ref, hs3_ref, b3_ref, rsel_ref, wh_ref, bh_ref, out_ref,
                *, n_taps, head_rows):
    act = x_ref[...]                                             # (N*H, W)  layer-0 input
    for wc_ref, hs_ref, b_ref in ((wc1_ref, hs1_ref, b1_ref),
                                  (wc2_ref, hs2_ref, b2_ref),
                                  (wc3_ref, hs3_ref, b3_ref)):
        acc = None
        for i in range(n_taps):                                  # 5 kernel rows, static loop
            # gather rows h = 2a + i for every (n, a) with a constant 0/1 matrix
            rows_i = jnp.dot(hs_ref[i], act, preferred_element_type=jnp.float32)
            # width taps + Cin folded into the weight -> lane-dense (Rout, P) result
            term = jnp.dot(rows_i, wc_ref[i], preferred_element_type=jnp.float32)
            acc = term if acc is None else acc + term
        act = jnp.maximum(acc + b_ref[...], 0.0)                 # bias + ReLU epilogue

    # head: gather the Ho3 spatial rows per sample, then one lane-dense GEMM each
    acc = None
    for a in range(head_rows):
        g_a = jnp.dot(rsel_ref[a], act, preferred_element_type=jnp.float32)   # (N, P3)
        term = jnp.dot(g_a, wh_ref[a], preferred_element_type=jnp.float32)    # (N, OPAD)
        acc = term if acc is None else acc + term
    out_ref[...] = acc + bh_ref[...]


# --------------------------------------------------------------------------- #
# Wrapper: host-side weight folding / padding, single pallas_call
# --------------------------------------------------------------------------- #
def dqn_forward_pallas(x_nchw, params):
    N, Cin, H, W = x_nchw.shape
    assert Cin == 1

    # static per-layer geometry
    chans = [1, 16, 32, 32]
    geom = []
    h, w, kp = H, W, W                  # kp = lane width of this layer's input (W*C)
    for li in range(3):
        C, Co = chans[li], chans[li + 1]
        Ho, Wo = _conv_out(h), _conv_out(w)
        assert Ho >= 1 and Wo >= 1, "input spatial size too small for 3 conv layers"
        P = _round_up(Wo * Co, LANE)    # lane-dense output width of this layer
        geom.append(dict(H=h, W=w, C=C, Co=Co, Ho=Ho, Wo=Wo, Kp=kp, P=P))
        h, w, kp = Ho, Wo, P
    Ho3, Wo3, Co3 = geom[2]["Ho"], geom[2]["Wo"], geom[2]["Co"]
    outputs = params["head"]["b"].shape[0]
    OPAD = _round_up(outputs, LANE)

    # fold BN (eval mode) into conv weights; fold width taps + Cin into one
    # (Kp, P) GEMM weight per kernel row i; build per-channel bias rows.
    def fold_conv(li):
        L = geom[li]
        p = params[f"conv{li + 1}"]
        bn = params[f"bn{li + 1}"]
        scale = bn["gamma"] / jnp.sqrt(bn["var"] + EPS)
        wf = (p["w"] * scale[:, None, None, None]).astype(jnp.float32)   # (Co, C, 5, 5)
        bias = ((p["b"] - bn["mean"]) * scale + bn["beta"]).astype(jnp.float32)

        # Ssel[j, w, b] = 1 iff w == 2*b + j  (static 0/1 constant, trace-time numpy)
        ssel = np.zeros((KSIZE, L["W"], L["Wo"]), np.float32)
        for j in range(KSIZE):
            for b in range(L["Wo"]):
                ssel[j, STRIDE * b + j, b] = 1.0
        # blocks[i, w, c, b, o] = wf[o, c, i, w - 2b]  (zero outside the 5-tap window)
        blocks = jnp.einsum("jwb,ocij->iwcbo", jnp.asarray(ssel), wf,
                            precision=jax.lax.Precision.HIGHEST)
        blocks = blocks.reshape(KSIZE, L["W"] * L["C"], L["Wo"] * L["Co"])
        wc = jnp.zeros((KSIZE, L["Kp"], L["P"]), jnp.float32)
        wc = wc.at[:, :L["W"] * L["C"], :L["Wo"] * L["Co"]].set(blocks)
        brow = jnp.zeros((1, L["P"]), jnp.float32)
        brow = brow.at[0, :L["Wo"] * L["Co"]].set(jnp.tile(bias, (L["Wo"],)))
        return wc, brow

    wc1, b1 = fold_conv(0)
    wc2, b2 = fold_conv(1)
    wc3, b3 = fold_conv(2)

    # constant stride-2 row-selection matrices: HSel[i, n*Ho+a, n*H + 2a + i] = 1
    def make_hsel(li):
        L = geom[li]
        m = np.zeros((KSIZE, N * L["Ho"], N * L["H"]), np.float32)
        for i in range(KSIZE):
            for n in range(N):
                for a in range(L["Ho"]):
                    m[i, n * L["Ho"] + a, n * L["H"] + STRIDE * a + i] = 1.0
        return jnp.asarray(m)

    hs1, hs2, hs3 = (make_hsel(i) for i in range(3))

    # head: fold torch's NCHW x.view(n,-1) order (f = co*S3 + a*Wo3 + b) into weights
    whr = params["head"]["w"].reshape(outputs, Co3, Ho3, Wo3).astype(jnp.float32)
    whr = jnp.transpose(whr, (2, 3, 1, 0)).reshape(Ho3, Wo3 * Co3, outputs)
    wh = jnp.zeros((Ho3, geom[2]["P"], OPAD), jnp.float32)
    wh = wh.at[:, :Wo3 * Co3, :outputs].set(whr)
    bh = jnp.zeros((1, OPAD), jnp.float32).at[0, :outputs].set(
        params["head"]["b"].astype(jnp.float32))

    rsel = np.zeros((Ho3, N, N * Ho3), np.float32)   # rsel[a, n, n*Ho3+a] = 1
    for a in range(Ho3):
        for n in range(N):
            rsel[a, n, n * Ho3 + a] = 1.0
    rsel = jnp.asarray(rsel)

    # input: NCHW (C=1) -> (N*H, W)
    x0 = x_nchw.astype(jnp.float32).reshape(N * H, W)

    inputs = (x0, wc1, hs1, b1, wc2, hs2, b2, wc3, hs3, b3, rsel, wh, bh)

    def fullspec(a):
        r = a.ndim
        return pl.BlockSpec(a.shape, lambda i, _r=r: (0,) * _r)

    kernel = functools.partial(_dqn_kernel, n_taps=KSIZE, head_rows=Ho3)

    out = pl.pallas_call(
        kernel,
        out_shape=jax.ShapeDtypeStruct((N, OPAD), jnp.float32),
        grid=(1,),
        in_specs=[fullspec(a) for a in inputs],
        out_specs=pl.BlockSpec((N, OPAD), lambda i: (0, 0)),
        compiler_params=pltpu.CompilerParams(
            dimension_semantics=("arbitrary",),
            vmem_limit_bytes=16 * 1024 * 1024,
        ),
    )(*inputs)
    return out[:, :outputs]


# --------------------------------------------------------------------------- #
# Pure-JAX reference (eval-mode BN), for correctness checking
# --------------------------------------------------------------------------- #
def dqn_forward_reference(x_nchw, params):
    x = x_nchw
    for l in ("1", "2", "3"):
        p = params["conv" + l]
        bn = params["bn" + l]
        y = jax.lax.conv_general_dilated(
            x, p["w"], window_strides=(2, 2), padding="VALID",
            dimension_numbers=("NCHW", "OIHW", "NCHW"),
            precision=jax.lax.Precision.HIGHEST,
        )
        y = y + p["b"][None, :, None, None]
        y = (y - bn["mean"][None, :, None, None]) / jnp.sqrt(
            bn["var"][None, :, None, None] + EPS
        )
        y = y * bn["gamma"][None, :, None, None] + bn["beta"][None, :, None, None]
        x = jnp.maximum(y, 0.0)
    feat = x.reshape(x.shape[0], -1)
    return (
        jnp.dot(feat, params["head"]["w"].T, precision=jax.lax.Precision.HIGHEST)
        + params["head"]["b"]
    )


# --------------------------------------------------------------------------- #
# Deterministic parameter init (shapes from DQN.__init__)
# --------------------------------------------------------------------------- #
def init_params(key, h, w, outputs):
    convw = _conv_out(_conv_out(_conv_out(w)))
    convh = _conv_out(_conv_out(_conv_out(h)))
    linear_input_size = convw * convh * 32

    keys = iter(jax.random.split(key, 32))
    params = {}

    def conv_params(cout, cin, k):
        fan_in = cin * k * k
        bound = 1.0 / math.sqrt(fan_in)
        wgt = jax.random.uniform(next(keys), (cout, cin, k, k), jnp.float32, -bound, bound)
        b = jax.random.uniform(next(keys), (cout,), jnp.float32, -bound, bound)
        return {"w": wgt, "b": b}

    def bn_params(c):
        return {
            "gamma": jax.random.uniform(next(keys), (c,), jnp.float32, 0.5, 1.5),
            "beta": 0.1 * jax.random.normal(next(keys), (c,), jnp.float32),
            "mean": 0.1 * jax.random.normal(next(keys), (c,), jnp.float32),
            "var": jax.random.uniform(next(keys), (c,), jnp.float32, 0.5, 1.5),
        }

    params["conv1"] = conv_params(16, 1, 5)
    params["bn1"] = bn_params(16)
    params["conv2"] = conv_params(32, 16, 5)
    params["bn2"] = bn_params(32)
    params["conv3"] = conv_params(32, 32, 5)
    params["bn3"] = bn_params(32)

    bound = 1.0 / math.sqrt(linear_input_size)
    params["head"] = {
        "w": jax.random.uniform(
            next(keys), (outputs, linear_input_size), jnp.float32, -bound, bound
        ),
        "b": jax.random.uniform(next(keys), (outputs,), jnp.float32, -bound, bound),
    }
    return params


if __name__ == "__main__":
    key = jax.random.PRNGKey(0)
    k_x, k_p = jax.random.split(key)

    batch, h, w, outputs = 2, 40, 40, 4  # 40 -> 18 -> 7 -> 2 spatial; head in = 2*2*32 = 128
    x = jax.random.normal(k_x, (batch, 1, h, w), jnp.float32)
    params = init_params(k_p, h, w, outputs)

    fwd = jax.jit(dqn_forward_pallas)
    out = jax.block_until_ready(fwd(x, params))
    assert out.shape == (batch, outputs), out.shape

    ref = jax.block_until_ready(dqn_forward_reference(x, params))
    if not bool(jnp.allclose(out, ref, rtol=2e-2, atol=2e-2)):
        raise AssertionError(
            f"Pallas output mismatch vs reference; max abs diff = "
            f"{float(jnp.max(jnp.abs(out - ref)))}"
        )

    print("KERNEL_OK")
</pallas_src>

<mosaic_0001>
module attributes {stable_mosaic.version = 11 : i64} {
  func.func @_dqn_kernel(%arg0: i32, %arg1: memref<80x40xf32, #tpu.memory_space<vmem>>, %arg2: memref<5x40x384xf32, #tpu.memory_space<vmem>>, %arg3: memref<5x36x80xf32, #tpu.memory_space<vmem>>, %arg4: memref<1x384xf32, #tpu.memory_space<vmem>>, %arg5: memref<5x384x256xf32, #tpu.memory_space<vmem>>, %arg6: memref<5x14x36xf32, #tpu.memory_space<vmem>>, %arg7: memref<1x256xf32, #tpu.memory_space<vmem>>, %arg8: memref<5x256x128xf32, #tpu.memory_space<vmem>>, %arg9: memref<5x4x14xf32, #tpu.memory_space<vmem>>, %arg10: memref<1x128xf32, #tpu.memory_space<vmem>>, %arg11: memref<2x2x4xf32, #tpu.memory_space<vmem>>, %arg12: memref<2x128x128xf32, #tpu.memory_space<vmem>>, %arg13: memref<1x128xf32, #tpu.memory_space<vmem>>, %arg14: memref<2x128xf32, #tpu.memory_space<vmem>>) attributes {dimension_semantics = [#tpu.dimension_semantics<arbitrary>], iteration_bounds = array<i64: 1>, scalar_prefetch = 0 : i64, scratch_operands = 0 : i64, tpu.core_type = #tpu.core_type<tc>, window_params = [{pipeline_mode = #tpu.pipeline_mode<synchronous>, transform_indices = @transform_0, window_bounds = array<i64: 80, 40>}, {pipeline_mode = #tpu.pipeline_mode<synchronous>, transform_indices = @transform_1, window_bounds = array<i64: 5, 40, 384>}, {pipeline_mode = #tpu.pipeline_mode<synchronous>, transform_indices = @transform_2, window_bounds = array<i64: 5, 36, 80>}, {pipeline_mode = #tpu.pipeline_mode<synchronous>, transform_indices = @transform_3, window_bounds = array<i64: 1, 384>}, {pipeline_mode = #tpu.pipeline_mode<synchronous>, transform_indices = @transform_4, window_bounds = array<i64: 5, 384, 256>}, {pipeline_mode = #tpu.pipeline_mode<synchronous>, transform_indices = @transform_5, window_bounds = array<i64: 5, 14, 36>}, {pipeline_mode = #tpu.pipeline_mode<synchronous>, transform_indices = @transform_6, window_bounds = array<i64: 1, 256>}, {pipeline_mode = #tpu.pipeline_mode<synchronous>, transform_indices = @transform_7, window_bounds = array<i64: 5, 256, 128>}, {pipeline_mode = #tpu.pipeline_mode<synchronous>, transform_indices = @transform_8, window_bounds = array<i64: 5, 4, 14>}, {pipeline_mode = #tpu.pipeline_mode<synchronous>, transform_indices = @transform_9, window_bounds = array<i64: 1, 128>}, {pipeline_mode = #tpu.pipeline_mode<synchronous>, transform_indices = @transform_10, window_bounds = array<i64: 2, 2, 4>}, {pipeline_mode = #tpu.pipeline_mode<synchronous>, transform_indices = @transform_11, window_bounds = array<i64: 2, 128, 128>}, {pipeline_mode = #tpu.pipeline_mode<synchronous>, transform_indices = @transform_12, window_bounds = array<i64: 1, 128>}, {pipeline_mode = #tpu.pipeline_mode<synchronous>, transform_indices = @transform_13, window_bounds = array<i64: 2, 128>}]} {
    %c0 = arith.constant 0 : index
    %c0_0 = arith.constant 0 : index
    %0 = vector.load %arg1[%c0, %c0_0] : memref<80x40xf32, #tpu.memory_space<vmem>>, vector<80x40xf32>
    %c0_1 = arith.constant 0 : index
    %c0_2 = arith.constant 0 : index
    %c0_3 = arith.constant 0 : index
    %1 = vector.load %arg3[%c0_1, %c0_2, %c0_3] : memref<5x36x80xf32, #tpu.memory_space<vmem>>, vector<1x36x80xf32>
    %2 = vector.shape_cast %1 : vector<1x36x80xf32> to vector<36x80xf32>
    %cst = arith.constant dense<0.000000e+00> : vector<36x40xf32>
    %3 = tpu.matmul %2, %0, %cst {dimension_numbers = #tpu.dot_dimension_numbers<[1], [0], [0], [1], [0, 0, 1, 1], [], []>} : vector<36x80xf32>, vector<80x40xf32>, vector<36x40xf32> -> vector<36x40xf32>
    %c0_4 = arith.constant 0 : index
    %c0_5 = arith.constant 0 : index
    %c0_6 = arith.constant 0 : index
    %4 = vector.load %arg2[%c0_4, %c0_5, %c0_6] : memref<5x40x384xf32, #tpu.memory_space<vmem>>, vector<1x40x384xf32>
    %5 = vector.shape_cast %4 : vector<1x40x384xf32> to vector<40x384xf32>
    %cst_7 = arith.constant dense<0.000000e+00> : vector<36x384xf32>
    %6 = tpu.matmul %3, %5, %cst_7 {dimension_numbers = #tpu.dot_dimension_numbers<[1], [0], [0], [1], [0, 0, 1, 1], [], []>} : vector<36x40xf32>, vector<40x384xf32>, vector<36x384xf32> -> vector<36x384xf32>
    %c1 = arith.constant 1 : index
    %c0_8 = arith.constant 0 : index
    %c0_9 = arith.constant 0 : index
    %7 = vector.load %arg3[%c1, %c0_8, %c0_9] : memref<5x36x80xf32, #tpu.memory_space<vmem>>, vector<1x36x80xf32>
    %8 = vector.shape_cast %7 : vector<1x36x80xf32> to vector<36x80xf32>
    %cst_10 = arith.constant dense<0.000000e+00> : vector<36x40xf32>
    %9 = tpu.matmul %8, %0, %cst_10 {dimension_numbers = #tpu.dot_dimension_numbers<[1], [0], [0], [1], [0, 0, 1, 1], [], []>} : vector<36x80xf32>, vector<80x40xf32>, vector<36x40xf32> -> vector<36x40xf32>
    %c1_11 = arith.constant 1 : index
    %c0_12 = arith.constant 0 : index
    %c0_13 = arith.constant 0 : index
    %10 = vector.load %arg2[%c1_11, %c0_12, %c0_13] : memref<5x40x384xf32, #tpu.memory_space<vmem>>, vector<1x40x384xf32>
    %11 = vector.shape_cast %10 : vector<1x40x384xf32> to vector<40x384xf32>
    %cst_14 = arith.constant dense<0.000000e+00> : vector<36x384xf32>
    %12 = tpu.matmul %9, %11, %cst_14 {dimension_numbers = #tpu.dot_dimension_numbers<[1], [0], [0], [1], [0, 0, 1, 1], [], []>} : vector<36x40xf32>, vector<40x384xf32>, vector<36x384xf32> -> vector<36x384xf32>
    %13 = arith.addf %6, %12 : vector<36x384xf32>
    %c2 = arith.constant 2 : index
    %c0_15 = arith.constant 0 : index
    %c0_16 = arith.constant 0 : index
    %14 = vector.load %arg3[%c2, %c0_15, %c0_16] : memref<5x36x80xf32, #tpu.memory_space<vmem>>, vector<1x36x80xf32>
    %15 = vector.shape_cast %14 : vector<1x36x80xf32> to vector<36x80xf32>
    %cst_17 = arith.constant dense<0.000000e+00> : vector<36x40xf32>
    %16 = tpu.matmul %15, %0, %cst_17 {dimension_numbers = #tpu.dot_dimension_numbers<[1], [0], [0], [1], [0, 0, 1, 1], [], []>} : vector<36x80xf32>, vector<80x40xf32>, vector<36x40xf32> -> vector<36x40xf32>
    %c2_18 = arith.constant 2 : index
    %c0_19 = arith.constant 0 : index
    %c0_20 = arith.constant 0 : index
    %17 = vector.load %arg2[%c2_18, %c0_19, %c0_20] : memref<5x40x384xf32, #tpu.memory_space<vmem>>, vector<1x40x384xf32>
    %18 = vector.shape_cast %17 : vector<1x40x384xf32> to vector<40x384xf32>
    %cst_21 = arith.constant dense<0.000000e+00> : vector<36x384xf32>
    %19 = tpu.matmul %16, %18, %cst_21 {dimension_numbers = #tpu.dot_dimension_numbers<[1], [0], [0], [1], [0, 0, 1, 1], [], []>} : vector<36x40xf32>, vector<40x384xf32>, vector<36x384xf32> -> vector<36x384xf32>
    %20 = arith.addf %13, %19 : vector<36x384xf32>
    %c3 = arith.constant 3 : index
    %c0_22 = arith.constant 0 : index
    %c0_23 = arith.constant 0 : index
    %21 = vector.load %arg3[%c3, %c0_22, %c0_23] : memref<5x36x80xf32, #tpu.memory_space<vmem>>, vector<1x36x80xf32>
    %22 = vector.shape_cast %21 : vector<1x36x80xf32> to vector<36x80xf32>
    %cst_24 = arith.constant dense<0.000000e+00> : vector<36x40xf32>
    %23 = tpu.matmul %22, %0, %cst_24 {dimension_numbers = #tpu.dot_dimension_numbers<[1], [0], [0], [1], [0, 0, 1, 1], [], []>} : vector<36x80xf32>, vector<80x40xf32>, vector<36x40xf32> -> vector<36x40xf32>
    %c3_25 = arith.constant 3 : index
    %c0_26 = arith.constant 0 : index
    %c0_27 = arith.constant 0 : index
    %24 = vector.load %arg2[%c3_25, %c0_26, %c0_27] : memref<5x40x384xf32, #tpu.memory_space<vmem>>, vector<1x40x384xf32>
    %25 = vector.shape_cast %24 : vector<1x40x384xf32> to vector<40x384xf32>
    %cst_28 = arith.constant dense<0.000000e+00> : vector<36x384xf32>
    %26 = tpu.matmul %23, %25, %cst_28 {dimension_numbers = #tpu.dot_dimension_numbers<[1], [0], [0], [1], [0, 0, 1, 1], [], []>} : vector<36x40xf32>, vector<40x384xf32>, vector<36x384xf32> -> vector<36x384xf32>
    %27 = arith.addf %20, %26 : vector<36x384xf32>
    %c4 = arith.constant 4 : index
    %c0_29 = arith.constant 0 : index
    %c0_30 = arith.constant 0 : index
    %28 = vector.load %arg3[%c4, %c0_29, %c0_30] : memref<5x36x80xf32, #tpu.memory_space<vmem>>, vector<1x36x80xf32>
    %29 = vector.shape_cast %28 : vector<1x36x80xf32> to vector<36x80xf32>
    %cst_31 = arith.constant dense<0.000000e+00> : vector<36x40xf32>
    %30 = tpu.matmul %29, %0, %cst_31 {dimension_numbers = #tpu.dot_dimension_numbers<[1], [0], [0], [1], [0, 0, 1, 1], [], []>} : vector<36x80xf32>, vector<80x40xf32>, vector<36x40xf32> -> vector<36x40xf32>
    %c4_32 = arith.constant 4 : index
    %c0_33 = arith.constant 0 : index
    %c0_34 = arith.constant 0 : index
    %31 = vector.load %arg2[%c4_32, %c0_33, %c0_34] : memref<5x40x384xf32, #tpu.memory_space<vmem>>, vector<1x40x384xf32>
    %32 = vector.shape_cast %31 : vector<1x40x384xf32> to vector<40x384xf32>
    %cst_35 = arith.constant dense<0.000000e+00> : vector<36x384xf32>
    %33 = tpu.matmul %30, %32, %cst_35 {dimension_numbers = #tpu.dot_dimension_numbers<[1], [0], [0], [1], [0, 0, 1, 1], [], []>} : vector<36x40xf32>, vector<40x384xf32>, vector<36x384xf32> -> vector<36x384xf32>
    %34 = arith.addf %27, %33 : vector<36x384xf32>
    %c0_36 = arith.constant 0 : index
    %c0_37 = arith.constant 0 : index
    %35 = vector.load %arg4[%c0_36, %c0_37] : memref<1x384xf32, #tpu.memory_space<vmem>>, vector<1x384xf32>
    %36 = vector.broadcast %35 : vector<1x384xf32> to vector<36x384xf32>
    %37 = arith.addf %34, %36 : vector<36x384xf32>
    %cst_38 = arith.constant 0.000000e+00 : f32
    %38 = vector.broadcast %cst_38 : f32 to vector<36x384xf32>
    %39 = arith.maximumf %37, %38 : vector<36x384xf32>
    %c0_39 = arith.constant 0 : index
    %c0_40 = arith.constant 0 : index
    %c0_41 = arith.constant 0 : index
    %40 = vector.load %arg6[%c0_39, %c0_40, %c0_41] : memref<5x14x36xf32, #tpu.memory_space<vmem>>, vector<1x14x36xf32>
    %41 = vector.shape_cast %40 : vector<1x14x36xf32> to vector<14x36xf32>
    %cst_42 = arith.constant dense<0.000000e+00> : vector<14x384xf32>
    %42 = tpu.matmul %41, %39, %cst_42 {dimension_numbers = #tpu.dot_dimension_numbers<[1], [0], [0], [1], [0, 0, 1, 1], [], []>} : vector<14x36xf32>, vector<36x384xf32>, vector<14x384xf32> -> vector<14x384xf32>
    %c0_43 = arith.constant 0 : index
    %c0_44 = arith.constant 0 : index
    %c0_45 = arith.constant 0 : index
    %43 = vector.load %arg5[%c0_43, %c0_44, %c0_45] : memref<5x384x256xf32, #tpu.memory_space<vmem>>, vector<1x384x256xf32>
    %44 = vector.shape_cast %43 : vector<1x384x256xf32> to vector<384x256xf32>
    %cst_46 = arith.constant dense<0.000000e+00> : vector<14x256xf32>
    %45 = tpu.matmul %42, %44, %cst_46 {dimension_numbers = #tpu.dot_dimension_numbers<[1], [0], [0], [1], [0, 0, 1, 1], [], []>} : vector<14x384xf32>, vector<384x256xf32>, vector<14x256xf32> -> vector<14x256xf32>
    %c1_47 = arith.constant 1 : index
    %c0_48 = arith.constant 0 : index
    %c0_49 = arith.constant 0 : index
    %46 = vector.load %arg6[%c1_47, %c0_48, %c0_49] : memref<5x14x36xf32, #tpu.memory_space<vmem>>, vector<1x14x36xf32>
    %47 = vector.shape_cast %46 : vector<1x14x36xf32> to vector<14x36xf32>
    %cst_50 = arith.constant dense<0.000000e+00> : vector<14x384xf32>
    %48 = tpu.matmul %47, %39, %cst_50 {dimension_numbers = #tpu.dot_dimension_numbers<[1], [0], [0], [1], [0, 0, 1, 1], [], []>} : vector<14x36xf32>, vector<36x384xf32>, vector<14x384xf32> -> vector<14x384xf32>
    %c1_51 = arith.constant 1 : index
    %c0_52 = arith.constant 0 : index
    %c0_53 = arith.constant 0 : index
    %49 = vector.load %arg5[%c1_51, %c0_52, %c0_53] : memref<5x384x256xf32, #tpu.memory_space<vmem>>, vector<1x384x256xf32>
    %50 = vector.shape_cast %49 : vector<1x384x256xf32> to vector<384x256xf32>
    %cst_54 = arith.constant dense<0.000000e+00> : vector<14x256xf32>
    %51 = tpu.matmul %48, %50, %cst_54 {dimension_numbers = #tpu.dot_dimension_numbers<[1], [0], [0], [1], [0, 0, 1, 1], [], []>} : vector<14x384xf32>, vector<384x256xf32>, vector<14x256xf32> -> vector<14x256xf32>
    %52 = arith.addf %45, %51 : vector<14x256xf32>
    %c2_55 = arith.constant 2 : index
    %c0_56 = arith.constant 0 : index
    %c0_57 = arith.constant 0 : index
    %53 = vector.load %arg6[%c2_55, %c0_56, %c0_57] : memref<5x14x36xf32, #tpu.memory_space<vmem>>, vector<1x14x36xf32>
    %54 = vector.shape_cast %53 : vector<1x14x36xf32> to vector<14x36xf32>
    %cst_58 = arith.constant dense<0.000000e+00> : vector<14x384xf32>
    %55 = tpu.matmul %54, %39, %cst_58 {dimension_numbers = #tpu.dot_dimension_numbers<[1], [0], [0], [1], [0, 0, 1, 1], [], []>} : vector<14x36xf32>, vector<36x384xf32>, vector<14x384xf32> -> vector<14x384xf32>
    %c2_59 = arith.constant 2 : index
    %c0_60 = arith.constant 0 : index
    %c0_61 = arith.constant 0 : index
    %56 = vector.load %arg5[%c2_59, %c0_60, %c0_61] : memref<5x384x256xf32, #tpu.memory_space<vmem>>, vector<1x384x256xf32>
    %57 = vector.shape_cast %56 : vector<1x384x256xf32> to vector<384x256xf32>
    %cst_62 = arith.constant dense<0.000000e+00> : vector<14x256xf32>
    %58 = tpu.matmul %55, %57, %cst_62 {dimension_numbers = #tpu.dot_dimension_numbers<[1], [0], [0], [1], [0, 0, 1, 1], [], []>} : vector<14x384xf32>, vector<384x256xf32>, vector<14x256xf32> -> vector<14x256xf32>
    %59 = arith.addf %52, %58 : vector<14x256xf32>
    %c3_63 = arith.constant 3 : index
    %c0_64 = arith.constant 0 : index
    %c0_65 = arith.constant 0 : index
    %60 = vector.load %arg6[%c3_63, %c0_64, %c0_65] : memref<5x14x36xf32, #tpu.memory_space<vmem>>, vector<1x14x36xf32>
    %61 = vector.shape_cast %60 : vector<1x14x36xf32> to vector<14x36xf32>
    %cst_66 = arith.constant dense<0.000000e+00> : vector<14x384xf32>
    %62 = tpu.matmul %61, %39, %cst_66 {dimension_numbers = #tpu.dot_dimension_numbers<[1], [0], [0], [1], [0, 0, 1, 1], [], []>} : vector<14x36xf32>, vector<36x384xf32>, vector<14x384xf32> -> vector<14x384xf32>
    %c3_67 = arith.constant 3 : index
    %c0_68 = arith.constant 0 : index
    %c0_69 = arith.constant 0 : index
    %63 = vector.load %arg5[%c3_67, %c0_68, %c0_69] : memref<5x384x256xf32, #tpu.memory_space<vmem>>, vector<1x384x256xf32>
    %64 = vector.shape_cast %63 : vector<1x384x256xf32> to vector<384x256xf32>
    %cst_70 = arith.constant dense<0.000000e+00> : vector<14x256xf32>
    %65 = tpu.matmul %62, %64, %cst_70 {dimension_numbers = #tpu.dot_dimension_numbers<[1], [0], [0], [1], [0, 0, 1, 1], [], []>} : vector<14x384xf32>, vector<384x256xf32>, vector<14x256xf32> -> vector<14x256xf32>
    %66 = arith.addf %59, %65 : vector<14x256xf32>
    %c4_71 = arith.constant 4 : index
    %c0_72 = arith.constant 0 : index
    %c0_73 = arith.constant 0 : index
    %67 = vector.load %arg6[%c4_71, %c0_72, %c0_73] : memref<5x14x36xf32, #tpu.memory_space<vmem>>, vector<1x14x36xf32>
    %68 = vector.shape_cast %67 : vector<1x14x36xf32> to vector<14x36xf32>
    %cst_74 = arith.constant dense<0.000000e+00> : vector<14x384xf32>
    %69 = tpu.matmul %68, %39, %cst_74 {dimension_numbers = #tpu.dot_dimension_numbers<[1], [0], [0], [1], [0, 0, 1, 1], [], []>} : vector<14x36xf32>, vector<36x384xf32>, vector<14x384xf32> -> vector<14x384xf32>
    %c4_75 = arith.constant 4 : index
    %c0_76 = arith.constant 0 : index
    %c0_77 = arith.constant 0 : index
    %70 = vector.load %arg5[%c4_75, %c0_76, %c0_77] : memref<5x384x256xf32, #tpu.memory_space<vmem>>, vector<1x384x256xf32>
    %71 = vector.shape_cast %70 : vector<1x384x256xf32> to vector<384x256xf32>
    %cst_78 = arith.constant dense<0.000000e+00> : vector<14x256xf32>
    %72 = tpu.matmul %69, %71, %cst_78 {dimension_numbers = #tpu.dot_dimension_numbers<[1], [0], [0], [1], [0, 0, 1, 1], [], []>} : vector<14x384xf32>, vector<384x256xf32>, vector<14x256xf32> -> vector<14x256xf32>
    %73 = arith.addf %66, %72 : vector<14x256xf32>
    %c0_79 = arith.constant 0 : index
    %c0_80 = arith.constant 0 : index
    %74 = vector.load %arg7[%c0_79, %c0_80] : memref<1x256xf32, #tpu.memory_space<vmem>>, vector<1x256xf32>
    %75 = vector.broadcast %74 : vector<1x256xf32> to vector<14x256xf32>
    %76 = arith.addf %73, %75 : vector<14x256xf32>
    %cst_81 = arith.constant 0.000000e+00 : f32
    %77 = vector.broadcast %cst_81 : f32 to vector<14x256xf32>
    %78 = arith.maximumf %76, %77 : vector<14x256xf32>
    %c0_82 = arith.constant 0 : index
    %c0_83 = arith.constant 0 : index
    %c0_84 = arith.constant 0 : index
    %79 = vector.load %arg9[%c0_82, %c0_83, %c0_84] : memref<5x4x14xf32, #tpu.memory_space<vmem>>, vector<1x4x14xf32>
    %80 = vector.shape_cast %79 : vector<1x4x14xf32> to vector<4x14xf32>
    %cst_85 = arith.constant dense<0.000000e+00> : vector<4x256xf32>
    %81 = tpu.matmul %80, %78, %cst_85 {dimension_numbers = #tpu.dot_dimension_numbers<[1], [0], [0], [1], [0, 0, 1, 1], [], []>} : vector<4x14xf32>, vector<14x256xf32>, vector<4x256xf32> -> vector<4x256xf32>
    %c0_86 = arith.constant 0 : index
    %c0_87 = arith.constant 0 : index
    %c0_88 = arith.constant 0 : index
    %82 = vector.load %arg8[%c0_86, %c0_87, %c0_88] : memref<5x256x128xf32, #tpu.memory_space<vmem>>, vector<1x256x128xf32>
    %83 = vector.shape_cast %82 : vector<1x256x128xf32> to vector<256x128xf32>
    %cst_89 = arith.constant dense<0.000000e+00> : vector<4x128xf32>
    %84 = tpu.matmul %81, %83, %cst_89 {dimension_numbers = #tpu.dot_dimension_numbers<[1], [0], [0], [1], [0, 0, 1, 1], [], []>} : vector<4x256xf32>, vector<256x128xf32>, vector<4x128xf32> -> vector<4x128xf32>
    %c1_90 = arith.constant 1 : index
    %c0_91 = arith.constant 0 : index
    %c0_92 = arith.constant 0 : index
    %85 = vector.load %arg9[%c1_90, %c0_91, %c0_92] : memref<5x4x14xf32, #tpu.memory_space<vmem>>, vector<1x4x14xf32>
    %86 = vector.shape_cast %85 : vector<1x4x14xf32> to vector<4x14xf32>
    %cst_93 = arith.constant dense<0.000000e+00> : vector<4x256xf32>
    %87 = tpu.matmul %86, %78, %cst_93 {dimension_numbers = #tpu.dot_dimension_numbers<[1], [0], [0], [1], [0, 0, 1, 1], [], []>} : vector<4x14xf32>, vector<14x256xf32>, vector<4x256xf32> -> vector<4x256xf32>
    %c1_94 = arith.constant 1 : index
    %c0_95 = arith.constant 0 : index
    %c0_96 = arith.constant 0 : index
    %88 = vector.load %arg8[%c1_94, %c0_95, %c0_96] : memref<5x256x128xf32, #tpu.memory_space<vmem>>, vector<1x256x128xf32>
    %89 = vector.shape_cast %88 : vector<1x256x128xf32> to vector<256x128xf32>
    %cst_97 = arith.constant dense<0.000000e+00> : vector<4x128xf32>
    %90 = tpu.matmul %87, %89, %cst_97 {dimension_numbers = #tpu.dot_dimension_numbers<[1], [0], [0], [1], [0, 0, 1, 1], [], []>} : vector<4x256xf32>, vector<256x128xf32>, vector<4x128xf32> -> vector<4x128xf32>
    %91 = arith.addf %84, %90 : vector<4x128xf32>
    %c2_98 = arith.constant 2 : index
    %c0_99 = arith.constant 0 : index
    %c0_100 = arith.constant 0 : index
    %92 = vector.load %arg9[%c2_98, %c0_99, %c0_100] : memref<5x4x14xf32, #tpu.memory_space<vmem>>, vector<1x4x14xf32>
    %93 = vector.shape_cast %92 : vector<1x4x14xf32> to vector<4x14xf32>
    %cst_101 = arith.constant dense<0.000000e+00> : vector<4x256xf32>
    %94 = tpu.matmul %93, %78, %cst_101 {dimension_numbers = #tpu.dot_dimension_numbers<[1], [0], [0], [1], [0, 0, 1, 1], [], []>} : vector<4x14xf32>, vector<14x256xf32>, vector<4x256xf32> -> vector<4x256xf32>
    %c2_102 = arith.constant 2 : index
    %c0_103 = arith.constant 0 : index
    %c0_104 = arith.constant 0 : index
    %95 = vector.load %arg8[%c2_102, %c0_103, %c0_104] : memref<5x256x128xf32, #tpu.memory_space<vmem>>, vector<1x256x128xf32>
    %96 = vector.shape_cast %95 : vector<1x256x128xf32> to vector<256x128xf32>
    %cst_105 = arith.constant dense<0.000000e+00> : vector<4x128xf32>
    %97 = tpu.matmul %94, %96, %cst_105 {dimension_numbers = #tpu.dot_dimension_numbers<[1], [0], [0], [1], [0, 0, 1, 1], [], []>} : vector<4x256xf32>, vector<256x128xf32>, vector<4x128xf32> -> vector<4x128xf32>
    %98 = arith.addf %91, %97 : vector<4x128xf32>
    %c3_106 = arith.constant 3 : index
    %c0_107 = arith.constant 0 : index
    %c0_108 = arith.constant 0 : index
    %99 = vector.load %arg9[%c3_106, %c0_107, %c0_108] : memref<5x4x14xf32, #tpu.memory_space<vmem>>, vector<1x4x14xf32>
    %100 = vector.shape_cast %99 : vector<1x4x14xf32> to vector<4x14xf32>
    %cst_109 = arith.constant dense<0.000000e+00> : vector<4x256xf32>
    %101 = tpu.matmul %100, %78, %cst_109 {dimension_numbers = #tpu.dot_dimension_numbers<[1], [0], [0], [1], [0, 0, 1, 1], [], []>} : vector<4x14xf32>, vector<14x256xf32>, vector<4x256xf32> -> vector<4x256xf32>
    %c3_110 = arith.constant 3 : index
    %c0_111 = arith.constant 0 : index
    %c0_112 = arith.constant 0 : index
    %102 = vector.load %arg8[%c3_110, %c0_111, %c0_112] : memref<5x256x128xf32, #tpu.memory_space<vmem>>, vector<1x256x128xf32>
    %103 = vector.shape_cast %102 : vector<1x256x128xf32> to vector<256x128xf32>
    %cst_113 = arith.constant dense<0.000000e+00> : vector<4x128xf32>
    %104 = tpu.matmul %101, %103, %cst_113 {dimension_numbers = #tpu.dot_dimension_numbers<[1], [0], [0], [1], [0, 0, 1, 1], [], []>} : vector<4x256xf32>, vector<256x128xf32>, vector<4x128xf32> -> vector<4x128xf32>
    %105 = arith.addf %98, %104 : vector<4x128xf32>
    %c4_114 = arith.constant 4 : index
    %c0_115 = arith.constant 0 : index
    %c0_116 = arith.constant 0 : index
    %106 = vector.load %arg9[%c4_114, %c0_115, %c0_116] : memref<5x4x14xf32, #tpu.memory_space<vmem>>, vector<1x4x14xf32>
    %107 = vector.shape_cast %106 : vector<1x4x14xf32> to vector<4x14xf32>
    %cst_117 = arith.constant dense<0.000000e+00> : vector<4x256xf32>
    %108 = tpu.matmul %107, %78, %cst_117 {dimension_numbers = #tpu.dot_dimension_numbers<[1], [0], [0], [1], [0, 0, 1, 1], [], []>} : vector<4x14xf32>, vector<14x256xf32>, vector<4x256xf32> -> vector<4x256xf32>
    %c4_118 = arith.constant 4 : index
    %c0_119 = arith.constant 0 : index
    %c0_120 = arith.constant 0 : index
    %109 = vector.load %arg8[%c4_118, %c0_119, %c0_120] : memref<5x256x128xf32, #tpu.memory_space<vmem>>, vector<1x256x128xf32>
    %110 = vector.shape_cast %109 : vector<1x256x128xf32> to vector<256x128xf32>
    %cst_121 = arith.constant dense<0.000000e+00> : vector<4x128xf32>
    %111 = tpu.matmul %108, %110, %cst_121 {dimension_numbers = #tpu.dot_dimension_numbers<[1], [0], [0], [1], [0, 0, 1, 1], [], []>} : vector<4x256xf32>, vector<256x128xf32>, vector<4x128xf32> -> vector<4x128xf32>
    %112 = arith.addf %105, %111 : vector<4x128xf32>
    %c0_122 = arith.constant 0 : index
    %c0_123 = arith.constant 0 : index
    %113 = vector.load %arg10[%c0_122, %c0_123] : memref<1x128xf32, #tpu.memory_space<vmem>>, vector<1x128xf32>
    %114 = vector.broadcast %113 : vector<1x128xf32> to vector<4x128xf32>
    %115 = arith.addf %112, %114 : vector<4x128xf32>
    %cst_124 = arith.constant 0.000000e+00 : f32
    %116 = vector.broadcast %cst_124 : f32 to vector<4x128xf32>
    %117 = arith.maximumf %115, %116 : vector<4x128xf32>
    %c0_125 = arith.constant 0 : index
    %c0_126 = arith.constant 0 : index
    %c0_127 = arith.constant 0 : index
    %118 = vector.load %arg11[%c0_125, %c0_126, %c0_127] : memref<2x2x4xf32, #tpu.memory_space<vmem>>, vector<1x2x4xf32>
    %119 = vector.shape_cast %118 : vector<1x2x4xf32> to vector<2x4xf32>
    %cst_128 = arith.constant dense<0.000000e+00> : vector<2x128xf32>
    %120 = tpu.matmul %119, %117, %cst_128 {dimension_numbers = #tpu.dot_dimension_numbers<[1], [0], [0], [1], [0, 0, 1, 1], [], []>} : vector<2x4xf32>, vector<4x128xf32>, vector<2x128xf32> -> vector<2x128xf32>
    %c0_129 = arith.constant 0 : index
    %c0_130 = arith.constant 0 : index
    %c0_131 = arith.constant 0 : index
    %121 = vector.load %arg12[%c0_129, %c0_130, %c0_131] : memref<2x128x128xf32, #tpu.memory_space<vmem>>, vector<1x128x128xf32>
    %122 = vector.shape_cast %121 : vector<1x128x128xf32> to vector<128x128xf32>
    %cst_132 = arith.constant dense<0.000000e+00> : vector<2x128xf32>
    %123 = tpu.matmul %120, %122, %cst_132 {dimension_numbers = #tpu.dot_dimension_numbers<[1], [0], [0], [1], [0, 0, 1, 1], [], []>} : vector<2x128xf32>, vector<128x128xf32>, vector<2x128xf32> -> vector<2x128xf32>
    %c1_133 = arith.constant 1 : index
    %c0_134 = arith.constant 0 : index
    %c0_135 = arith.constant 0 : index
    %124 = vector.load %arg11[%c1_133, %c0_134, %c0_135] : memref<2x2x4xf32, #tpu.memory_space<vmem>>, vector<1x2x4xf32>
    %125 = vector.shape_cast %124 : vector<1x2x4xf32> to vector<2x4xf32>
    %cst_136 = arith.constant dense<0.000000e+00> : vector<2x128xf32>
    %126 = tpu.matmul %125, %117, %cst_136 {dimension_numbers = #tpu.dot_dimension_numbers<[1], [0], [0], [1], [0, 0, 1, 1], [], []>} : vector<2x4xf32>, vector<4x128xf32>, vector<2x128xf32> -> vector<2x128xf32>
    %c1_137 = arith.constant 1 : index
    %c0_138 = arith.constant 0 : index
    %c0_139 = arith.constant 0 : index
    %127 = vector.load %arg12[%c1_137, %c0_138, %c0_139] : memref<2x128x128xf32, #tpu.memory_space<vmem>>, vector<1x128x128xf32>
    %128 = vector.shape_cast %127 : vector<1x128x128xf32> to vector<128x128xf32>
    %cst_140 = arith.constant dense<0.000000e+00> : vector<2x128xf32>
    %129 = tpu.matmul %126, %128, %cst_140 {dimension_numbers = #tpu.dot_dimension_numbers<[1], [0], [0], [1], [0, 0, 1, 1], [], []>} : vector<2x128xf32>, vector<128x128xf32>, vector<2x128xf32> -> vector<2x128xf32>
    %130 = arith.addf %123, %129 : vector<2x128xf32>
    %c0_141 = arith.constant 0 : index
    %c0_142 = arith.constant 0 : index
    %131 = vector.load %arg13[%c0_141, %c0_142] : memref<1x128xf32, #tpu.memory_space<vmem>>, vector<1x128xf32>
    %132 = vector.broadcast %131 : vector<1x128xf32> to vector<2x128xf32>
    %133 = arith.addf %130, %132 : vector<2x128xf32>
    %c0_143 = arith.constant 0 : index
    %c0_144 = arith.constant 0 : index
    %134 = vector.load %arg14[%c0_143, %c0_144] : memref<2x128xf32, #tpu.memory_space<vmem>>, vector<2x128xf32>
    tpu.vector_store %arg14[%c0_143, %c0_144], %133 {strides = array<i32>} : memref<2x128xf32, #tpu.memory_space<vmem>>, vector<2x128xf32>,
    return
  }
  func.func @transform_0(%arg0: i32) -> (i32, i32) {
    %c0_i32 = arith.constant 0 : i32
    %c0_i32_0 = arith.constant 0 : i32
    %c0_i32_1 = arith.constant 0 : i32
    return %c0_i32, %c0_i32_0 : i32, i32
  }
  func.func @transform_1(%arg0: i32) -> (i32, i32, i32) {
    %c0_i32 = arith.constant 0 : i32
    %c0_i32_0 = arith.constant 0 : i32
    %c0_i32_1 = arith.constant 0 : i32
    %c0_i32_2 = arith.constant 0 : i32
    return %c0_i32, %c0_i32_0, %c0_i32_1 : i32, i32, i32
  }
  func.func @transform_2(%arg0: i32) -> (i32, i32, i32) {
    %c0_i32 = arith.constant 0 : i32
    %c0_i32_0 = arith.constant 0 : i32
    %c0_i32_1 = arith.constant 0 : i32
    %c0_i32_2 = arith.constant 0 : i32
    return %c0_i32, %c0_i32_0, %c0_i32_1 : i32, i32, i32
  }
  func.func @transform_3(%arg0: i32) -> (i32, i32) {
    %c0_i32 = arith.constant 0 : i32
    %c0_i32_0 = arith.constant 0 : i32
    %c0_i32_1 = arith.constant 0 : i32
    return %c0_i32, %c0_i32_0 : i32, i32
  }
  func.func @transform_4(%arg0: i32) -> (i32, i32, i32) {
    %c0_i32 = arith.constant 0 : i32
    %c0_i32_0 = arith.constant 0 : i32
    %c0_i32_1 = arith.constant 0 : i32
    %c0_i32_2 = arith.constant 0 : i32
    return %c0_i32, %c0_i32_0, %c0_i32_1 : i32, i32, i32
  }
  func.func @transform_5(%arg0: i32) -> (i32, i32, i32) {
    %c0_i32 = arith.constant 0 : i32
    %c0_i32_0 = arith.constant 0 : i32
    %c0_i32_1 = arith.constant 0 : i32
    %c0_i32_2 = arith.constant 0 : i32
    return %c0_i32, %c0_i32_0, %c0_i32_1 : i32, i32, i32
  }
  func.func @transform_6(%arg0: i32) -> (i32, i32) {
    %c0_i32 = arith.constant 0 : i32
    %c0_i32_0 = arith.constant 0 : i32
    %c0_i32_1 = arith.constant 0 : i32
    return %c0_i32, %c0_i32_0 : i32, i32
  }
  func.func @transform_7(%arg0: i32) -> (i32, i32, i32) {
    %c0_i32 = arith.constant 0 : i32
    %c0_i32_0 = arith.constant 0 : i32
    %c0_i32_1 = arith.constant 0 : i32
    %c0_i32_2 = arith.constant 0 : i32
    return %c0_i32, %c0_i32_0, %c0_i32_1 : i32, i32, i32
  }
  func.func @transform_8(%arg0: i32) -> (i32, i32, i32) {
    %c0_i32 = arith.constant 0 : i32
    %c0_i32_0 = arith.constant 0 : i32
    %c0_i32_1 = arith.constant 0 : i32
    %c0_i32_2 = arith.constant 0 : i32
    return %c0_i32, %c0_i32_0, %c0_i32_1 : i32, i32, i32
  }
  func.func @transform_9(%arg0: i32) -> (i32, i32) {
    %c0_i32 = arith.constant 0 : i32
    %c0_i32_0 = arith.constant 0 : i32
    %c0_i32_1 = arith.constant 0 : i32
    return %c0_i32, %c0_i32_0 : i32, i32
  }
  func.func @transform_10(%arg0: i32) -> (i32, i32, i32) {
    %c0_i32 = arith.constant 0 : i32
    %c0_i32_0 = arith.constant 0 : i32
    %c0_i32_1 = arith.constant 0 : i32
    %c0_i32_2 = arith.constant 0 : i32
    return %c0_i32, %c0_i32_0, %c0_i32_1 : i32, i32, i32
  }
  func.func @transform_11(%arg0: i32) -> (i32, i32, i32) {
    %c0_i32 = arith.constant 0 : i32
    %c0_i32_0 = arith.constant 0 : i32
    %c0_i32_1 = arith.constant 0 : i32
    %c0_i32_2 = arith.constant 0 : i32
    return %c0_i32, %c0_i32_0, %c0_i32_1 : i32, i32, i32
  }
  func.func @transform_12(%arg0: i32) -> (i32, i32) {
    %c0_i32 = arith.constant 0 : i32
    %c0_i32_0 = arith.constant 0 : i32
    %c0_i32_1 = arith.constant 0 : i32
    return %c0_i32, %c0_i32_0 : i32, i32
  }
  func.func @transform_13(%arg0: i32) -> (i32, i32) {
    %c0_i32 = arith.constant 0 : i32
    %c0_i32_0 = arith.constant 0 : i32
    %c0_i32_1 = arith.constant 0 : i32
    return %c0_i32, %c0_i32_0 : i32, i32
  }
}

</mosaic_0001>

<llo_original>
// kernel: dqn_forward_pallas.1
$region0: #{dqn_forward_pallas.1}
  #allocation0 [shape = 'u32[]', space=smem, size = 0x4, offset = 0x4, fixed_abs, tag = 'smem constant byte address 0x4 - core index']
  #allocation1 [shape = 'u32[144,128]{1,0:T(1,128)}', space=vmem, size = 0x12000, scoped, tag = 'internal scratch']
  %s0 = inlined_call_operand.vmem [shape: f32[80,40], index: 0, kind: input, shape index: {}]
  %s1 = inlined_call_operand.vmem [shape: f32[5,40,384], index: 1, kind: input, shape index: {}]
  %s2 = inlined_call_operand.vmem [shape: f32[5,36,80], index: 2, kind: input, shape index: {}]
  %s3 = inlined_call_operand.vmem [shape: f32[1,384], index: 3, kind: input, shape index: {}]
  %s4 = inlined_call_operand.vmem [shape: f32[5,384,256], index: 4, kind: input, shape index: {}]
  %s5 = inlined_call_operand.vmem [shape: f32[5,14,36], index: 5, kind: input, shape index: {}]
  %s6 = inlined_call_operand.vmem [shape: f32[1,256], index: 6, kind: input, shape index: {}]
  %s7 = inlined_call_operand.vmem [shape: f32[5,256,128], index: 7, kind: input, shape index: {}]
  %s8 = inlined_call_operand.vmem [shape: f32[5,4,14], index: 8, kind: input, shape index: {}]
  %s9 = inlined_call_operand.vmem [shape: f32[1,128], index: 9, kind: input, shape index: {}]
  %s10 = inlined_call_operand.vmem [shape: f32[2,2,4], index: 10, kind: input, shape index: {}]
  %s11 = inlined_call_operand.vmem [shape: f32[2,128,128], index: 11, kind: input, shape index: {}]
  %s12 = inlined_call_operand.vmem [shape: f32[1,128], index: 12, kind: input, shape index: {}]
  %s13 = inlined_call_operand.hbm [shape: f32[2,128], index: 13, kind: output, shape index: {}]
  %s14 = sld [smem:[#allocation0]]
  $region62: #{dqn_forward_pallas.1} parent=0
    _
  %s16 = ssub.s32 1, %s14
  %s17 = scalar_select 0, %s16, %s14
  $region1: #{dqn_forward_pallas.1} parent=0
    #allocation2 [shape = 'u8[1024]{0}', space=vmem, size = 0x400, scoped, tag = 'output window, operand 0, single buffered']
    #allocation3 [shape = 's32[1]{0}', space=sflag, size = 0x4, scoped, tag = 'scoped memory for dqn_forward_pallas.1']
    %18 = vsyncpa [#allocation3], 0
    // Predicated region
    $region2: #{dqn_forward_pallas.1} parent=1 // pred_check
      _
    $region3: #{dqn_forward_pallas.1} parent=1 // pred_check_branch
      %20 = sbr.rel (0) target = $region5
    $region4: #{dqn_forward_pallas.1} parent=1 // pred_region
      _
    $region5: #{dqn_forward_pallas.1} parent=1 // pred_fallthru
      _
    // Predicated region
    $region6: #{dqn_forward_pallas.1} parent=1 // pred_check
      _
    $region7: #{dqn_forward_pallas.1} parent=1 // pred_check_branch
      %22 = sbr.rel (0) target = $region9
    $region8: #{dqn_forward_pallas.1} parent=1 // pred_region
      _
    $region9: #{dqn_forward_pallas.1} parent=1 // pred_fallthru
      _
    // Predicated region
    $region10: #{dqn_forward_pallas.1} parent=1 // pred_check
      _
    $region11: #{dqn_forward_pallas.1} parent=1 // pred_check_branch
      %24 = sbr.rel (0) target = $region13
    $region12: #{dqn_forward_pallas.1} parent=1 // pred_region
      _
    $region13: #{dqn_forward_pallas.1} parent=1 // pred_fallthru
      _
    // Predicated region
    $region14: #{dqn_forward_pallas.1} parent=1 // pred_check
      _
    $region15: #{dqn_forward_pallas.1} parent=1 // pred_check_branch
      %26 = sbr.rel (0) target = $region17
    $region16: #{dqn_forward_pallas.1} parent=1 // pred_region
      _
    $region17: #{dqn_forward_pallas.1} parent=1 // pred_fallthru
      _
    // Predicated region
    $region18: #{dqn_forward_pallas.1} parent=1 // pred_check
      _
    $region19: #{dqn_forward_pallas.1} parent=1 // pred_check_branch
      %28 = sbr.rel (0) target = $region21
    $region20: #{dqn_forward_pallas.1} parent=1 // pred_region
      _
    $region21: #{dqn_forward_pallas.1} parent=1 // pred_fallthru
      _
    // Predicated region
    $region22: #{dqn_forward_pallas.1} parent=1 // pred_check
      _
    $region23: #{dqn_forward_pallas.1} parent=1 // pred_check_branch
      %30 = sbr.rel (0) target = $region25
    $region24: #{dqn_forward_pallas.1} parent=1 // pred_region
      _
    $region25: #{dqn_forward_pallas.1} parent=1 // pred_fallthru
      _
    // Predicated region
    $region26: #{dqn_forward_pallas.1} parent=1 // pred_check
      _
    $region27: #{dqn_forward_pallas.1} parent=1 // pred_check_branch
      %32 = sbr.rel (0) target = $region29
    $region28: #{dqn_forward_pallas.1} parent=1 // pred_region
      _
    $region29: #{dqn_forward_pallas.1} parent=1 // pred_fallthru
      _
    // Predicated region
    $region30: #{dqn_forward_pallas.1} parent=1 // pred_check
      _
    $region31: #{dqn_forward_pallas.1} parent=1 // pred_check_branch
      %34 = sbr.rel (0) target = $region33
    $region32: #{dqn_forward_pallas.1} parent=1 // pred_region
      _
    $region33: #{dqn_forward_pallas.1} parent=1 // pred_fallthru
      _
    // Predicated region
    $region34: #{dqn_forward_pallas.1} parent=1 // pred_check
      _
    $region35: #{dqn_forward_pallas.1} parent=1 // pred_check_branch
      %36 = sbr.rel (0) target = $region37
    $region36: #{dqn_forward_pallas.1} parent=1 // pred_region
      _
    $region37: #{dqn_forward_pallas.1} parent=1 // pred_fallthru
      _
    // Predicated region
    $region38: #{dqn_forward_pallas.1} parent=1 // pred_check
      _
    $region39: #{dqn_forward_pallas.1} parent=1 // pred_check_branch
      %38 = sbr.rel (0) target = $region41
    $region40: #{dqn_forward_pallas.1} parent=1 // pred_region
      _
    $region41: #{dqn_forward_pallas.1} parent=1 // pred_fallthru
      _
    // Predicated region
    $region42: #{dqn_forward_pallas.1} parent=1 // pred_check
      _
    $region43: #{dqn_forward_pallas.1} parent=1 // pred_check_branch
      %40 = sbr.rel (0) target = $region45
    $region44: #{dqn_forward_pallas.1} parent=1 // pred_region
      _
    $region45: #{dqn_forward_pallas.1} parent=1 // pred_fallthru
      _
    // Predicated region
    $region46: #{dqn_forward_pallas.1} parent=1 // pred_check
      _
    $region47: #{dqn_forward_pallas.1} parent=1 // pred_check_branch
      %42 = sbr.rel (0) target = $region49
    $region48: #{dqn_forward_pallas.1} parent=1 // pred_region
      _
    $region49: #{dqn_forward_pallas.1} parent=1 // pred_fallthru
      _
    // Predicated region
    $region50: #{dqn_forward_pallas.1} parent=1 // pred_check
      _
    $region51: #{dqn_forward_pallas.1} parent=1 // pred_check_branch
      %44 = sbr.rel (0) target = $region53
    $region52: #{dqn_forward_pallas.1} parent=1 // pred_region
      _
    $region53: #{dqn_forward_pallas.1} parent=1 // pred_fallthru
      _
    %v45 = vld [vmem:[%s0] sm:$0xff]
    %v46 = vld [vmem:[%s0 + $0x8] sm:$0xff]
    %v47 = vld [vmem:[%s0 + $0x10] sm:$0xff]
    %v48 = vld [vmem:[%s0 + $0x18] sm:$0xff]
    %v49 = vld [vmem:[%s0 + $0x20] sm:$0xff]
    %v50 = vld [vmem:[%s0 + $0x28] sm:$0xff]
    %v51 = vld [vmem:[%s0 + $0x30] sm:$0xff]
    %v52 = vld [vmem:[%s0 + $0x38] sm:$0xff]
    %v53 = vld [vmem:[%s0 + $0x40] sm:$0xff]
    %v54 = vld [vmem:[%s0 + $0x48] sm:$0xff]
    %v55 = vld [vmem:[%s2] sm:$0xff]
    %v56 = vld [vmem:[%s2 + $0x8] sm:$0xff]
    %v57 = vld [vmem:[%s2 + $0x10] sm:$0xff]
    %v58 = vld [vmem:[%s2 + $0x18] sm:$0xff]
    %v59 = vld [vmem:[%s2 + $0x20] sm:$0xf]
    %vm60 = vcmask 654336
    %v62 = vsel %vm60, %v55, 0
    %v65 = vsel %vm60, %v56, 0
    %v68 = vsel %vm60, %v57, 0
    %v71 = vsel %vm60, %v58, 0
    %v74 = vsel %vm60, %v59, 0
    %76 = vmatprep.subr.mxu0 0.0
    %77 = vmatpush1.msra.mxu0 %v45
    %78 = vmatprep.subr.mxu0 0.0
    %79 = vmatpush1.msra.mxu0 %v46
    %80 = vmatprep.subr.mxu0 0.0
    %81 = vmatpush1.msra.mxu0 %v47
    %82 = vmatprep.subr.mxu0 0.0
    %83 = vmatpush1.msra.mxu0 %v48
    %84 = vmatprep.subr.mxu0 0.0
    %85 = vmatpush1.msra.mxu0 %v49
    %86 = vmatprep.subr.mxu0 0.0
    %87 = vmatpush1.msra.mxu0 %v50
    %88 = vmatprep.subr.mxu0 0.0
    %89 = vmatpush1.msra.mxu0 %v51
    %90 = vmatprep.subr.mxu0 0.0
    %91 = vmatpush1.msra.mxu0 %v52
    %92 = vmatprep.subr.mxu0 0.0
    %93 = vmatpush1.msra.mxu0 %v53
    %94 = vmatprep.subr.mxu0 0.0
    %95 = vmatpush1.msra.mxu0 %v54
    %96 = vmatprep.subr.mxu0 0.0
    %97 = vmatpush1.msra.mxu0 0.0
    %98 = vmatprep.subr.mxu0 0.0
    %99 = vmatpush1.msra.mxu0 0.0
    %100 = vmatprep.subr.mxu0 0.0
    %101 = vmatpush1.msra.mxu0 0.0
    %102 = vmatprep.subr.mxu0 0.0
    %103 = vmatpush1.msra.mxu0 0.0
    %104 = vmatprep.subr.mxu0 0.0
    %105 = vmatpush1.msra.mxu0 0.0
    %106 = vmatprep.subr.mxu0 0.0
    %107 = vmatpush1.msra.mxu0 0.0
    %108 = vmatprep.subr.mxu0 0.0
    %109 = vmatpush1.msra.mxu0 0.0
    %110 = vmatprep.subr.mxu0 0.0
    %111 = vmatpush1.msra.mxu0 0.0
    %112 = vmatprep.subr.mxu0 0.0
    %113 = vmatpush1.msra.mxu0 0.0
    %114 = vmatprep.subr.mxu0 0.0
    %115 = vmatpush1.msra.mxu0 0.0
    %116 = vmatprep.subr.mxu0 0.0
    %117 = vmatpush1.msra.mxu0 0.0
    %118 = vmatprep.subr.mxu0 0.0
    %119 = vmatpush1.msra.mxu0 0.0
    %120 = vmatprep.subr.mxu0 0.0
    %121 = vmatpush1.msra.mxu0 0.0
    %122 = vmatprep.subr.mxu0 0.0
    %123 = vmatpush1.msra.mxu0 0.0
    %124 = vmatprep.subr.mxu0 0.0
    %125 = vmatpush1.msra.mxu0 0.0
    %126 = vmatprep.subr.mxu0 0.0
    %127 = vmatpush1.msra.mxu0 0.0
    %128 = vmatprep.subr.mxu0 0.0
    %129 = vmatpush1.msra.mxu0 0.0
    %130 = vmatprep.subr.mxu0 0.0
    %131 = vmatpush1.msra.mxu0 0.0
    %132 = vmatprep.subr.mxu0 0.0
    %133 = vmatpush1.msra.mxu0 0.0
    %134 = vmatprep.subr.mxu0 0.0
    %135 = vmatpush1.msra.mxu0 0.0
    %136 = vmatprep.subr.mxu0 0.0
    %137 = vmatpush1.msra.mxu0 0.0
    %138 = vmatprep.subr.mxu0 0.0
    %139 = vmatpush1.msra.mxu0 0.0
    %140 = vmatprep.mubr.f32.mxu0 0.0
    %141 = vmatmul.mubr.f32.gmra.mrb[0].mxu0 %v62
    %v142 = vpop.f32.mrb[0].mxu0
    %v143 = vadd.f32 0.0, %v142
    %v144 = vpop.f32.mrb[0].mxu0
    %145 = vmatprep.mubr.f32.mxu0 0.0
    %146 = vmatmul.mubr.f32.gmra.mrb[0].mxu0 %v65
    %v147 = vpop.f32.mrb[0].mxu0
    %v148 = vadd.f32 0.0, %v147
    %v149 = vpop.f32.mrb[0].mxu0
    %150 = vmatprep.mubr.f32.mxu0 0.0
    %151 = vmatmul.mubr.f32.gmra.mrb[0].mxu0 %v68
    %v152 = vpop.f32.mrb[0].mxu0
    %v153 = vadd.f32 0.0, %v152
    %v154 = vpop.f32.mrb[0].mxu0
    %155 = vmatprep.mubr.f32.mxu0 0.0
    %156 = vmatmul.mubr.f32.gmra.mrb[0].mxu0 %v71
    %v157 = vpop.f32.mrb[0].mxu0
    %v158 = vadd.f32 0.0, %v157
    %v159 = vpop.f32.mrb[0].mxu0
    %160 = vmatprep.mubr.f32.mxu0 0.0
    %161 = vmatmul.mubr.f32.gmra.mrb[0].mxu0 %v74
    %v162 = vpop.f32.mrb[0].mxu0
    %v163 = vadd.f32 0.0, %v162
    %v164 = vpop.f32.mrb[0].mxu0
    %165 = vdwg.mxu0
    %v166 = vld [vmem:[%s1] sm:$0xff]
    %v167 = vld [vmem:[%s1 + $0x8] sm:$0xff]
    %v168 = vld [vmem:[%s1 + $0x10] sm:$0xff]
    %v169 = vld [vmem:[%s1 + $0x18] sm:$0xff]
    %v170 = vld [vmem:[%s1 + $0x20] sm:$0xff]
    %v171 = vld [vmem:[%s1 + $0x28] sm:$0xff]
    %v172 = vld [vmem:[%s1 + $0x30] sm:$0xff]
    %v173 = vld [vmem:[%s1 + $0x38] sm:$0xff]
    %v174 = vld [vmem:[%s1 + $0x40] sm:$0xff]
    %v175 = vld [vmem:[%s1 + $0x48] sm:$0xff]
    %v176 = vld [vmem:[%s1 + $0x50] sm:$0xff]
    %v177 = vld [vmem:[%s1 + $0x58] sm:$0xff]
    %v178 = vld [vmem:[%s1 + $0x60] sm:$0xff]
    %v179 = vld [vmem:[%s1 + $0x68] sm:$0xff]
    %v180 = vld [vmem:[%s1 + $0x70] sm:$0xff]
    %s181 = scalar_lea.vmem %s2, 40
    %v182 = vld [vmem:[%s181] sm:$0xff]
    %v183 = vld [vmem:[%s181 + $0x8] sm:$0xff]
    %v184 = vld [vmem:[%s181 + $0x10] sm:$0xff]
    %v185 = vld [vmem:[%s181 + $0x18] sm:$0xff]
    %v186 = vld [vmem:[%s181 + $0x20] sm:$0xf]
    %v188 = vsel %vm60, %v182, 0
    %v191 = vsel %vm60, %v183, 0
    %v194 = vsel %vm60, %v184, 0
    %v197 = vsel %vm60, %v185, 0
    %v200 = vsel %vm60, %v186, 0
    %202 = vmatprep.subr.mxu0 0.0
    %203 = vmatpush1.msra.mxu0 %v45
    %204 = vmatprep.subr.mxu0 0.0
    %205 = vmatpush1.msra.mxu0 %v46
    %206 = vmatprep.subr.mxu0 0.0
    %207 = vmatpush1.msra.mxu0 %v47
    %208 = vmatprep.subr.mxu0 0.0
    %209 = vmatpush1.msra.mxu0 %v48
    %210 = vmatprep.subr.mxu0 0.0
    %211 = vmatpush1.msra.mxu0 %v49
    %212 = vmatprep.subr.mxu0 0.0
    %213 = vmatpush1.msra.mxu0 %v50
    %214 = vmatprep.subr.mxu0 0.0
    %215 = vmatpush1.msra.mxu0 %v51
    %216 = vmatprep.subr.mxu0 0.0
    %217 = vmatpush1.msra.mxu0 %v52
    %218 = vmatprep.subr.mxu0 0.0
    %219 = vmatpush1.msra.mxu0 %v53
    %220 = vmatprep.subr.mxu0 0.0
    %221 = vmatpush1.msra.mxu0 %v54
    %222 = vmatprep.subr.mxu0 0.0
    %223 = vmatpush1.msra.mxu0 0.0
    %224 = vmatprep.subr.mxu0 0.0
    %225 = vmatpush1.msra.mxu0 0.0
    %226 = vmatprep.subr.mxu0 0.0
    %227 = vmatpush1.msra.mxu0 0.0
    %228 = vmatprep.subr.mxu0 0.0
    %229 = vmatpush1.msra.mxu0 0.0
    %230 = vmatprep.subr.mxu0 0.0
    %231 = vmatpush1.msra.mxu0 0.0
    %232 = vmatprep.subr.mxu0 0.0
    %233 = vmatpush1.msra.mxu0 0.0
    %234 = vmatprep.subr.mxu0 0.0
    %235 = vmatpush1.msra.mxu0 0.0
    %236 = vmatprep.subr.mxu0 0.0
    %237 = vmatpush1.msra.mxu0 0.0
    %238 = vmatprep.subr.mxu0 0.0
    %239 = vmatpush1.msra.mxu0 0.0
    %240 = vmatprep.subr.mxu0 0.0
    %241 = vmatpush1.msra.mxu0 0.0
    %242 = vmatprep.subr.mxu0 0.0
    %243 = vmatpush1.msra.mxu0 0.0
    %244 = vmatprep.subr.mxu0 0.0
    %245 = vmatpush1.msra.mxu0 0.0
    %246 = vmatprep.subr.mxu0 0.0
    %247 = vmatpush1.msra.mxu0 0.0
    %248 = vmatprep.subr.mxu0 0.0
    %249 = vmatpush1.msra.mxu0 0.0
    %250 = vmatprep.subr.mxu0 0.0
    %251 = vmatpush1.msra.mxu0 0.0
    %252 = vmatprep.subr.mxu0 0.0
    %253 = vmatpush1.msra.mxu0 0.0
    %254 = vmatprep.subr.mxu0 0.0
    %255 = vmatpush1.msra.mxu0 0.0
    %256 = vmatprep.subr.mxu0 0.0
    %257 = vmatpush1.msra.mxu0 0.0
    %258 = vmatprep.subr.mxu0 0.0
    %259 = vmatpush1.msra.mxu0 0.0
    %260 = vmatprep.subr.mxu0 0.0
    %261 = vmatpush1.msra.mxu0 0.0
    %262 = vmatprep.subr.mxu0 0.0
    %263 = vmatpush1.msra.mxu0 0.0
    %264 = vmatprep.subr.mxu0 0.0
    %265 = vmatpush1.msra.mxu0 0.0
    %266 = vmatprep.mubr.f32.mxu0 0.0
    %267 = vmatmul.mubr.f32.gmra.mrb[0].mxu0 %v188
    %v268 = vpop.f32.mrb[0].mxu0
    %v269 = vadd.f32 0.0, %v268
    %v270 = vpop.f32.mrb[0].mxu0
    %271 = vmatprep.mubr.f32.mxu0 0.0
    %272 = vmatmul.mubr.f32.gmra.mrb[0].mxu0 %v191
    %v273 = vpop.f32.mrb[0].mxu0
    %v274 = vadd.f32 0.0, %v273
    %v275 = vpop.f32.mrb[0].mxu0
    %276 = vmatprep.mubr.f32.mxu0 0.0
    %277 = vmatmul.mubr.f32.gmra.mrb[0].mxu0 %v194
    %v278 = vpop.f32.mrb[0].mxu0
    %v279 = vadd.f32 0.0, %v278
    %v280 = vpop.f32.mrb[0].mxu0
    %281 = vmatprep.mubr.f32.mxu0 0.0
    %282 = vmatmul.mubr.f32.gmra.mrb[0].mxu0 %v197
    %v283 = vpop.f32.mrb[0].mxu0
    %v284 = vadd.f32 0.0, %v283
    %v285 = vpop.f32.mrb[0].mxu0
    %286 = vmatprep.mubr.f32.mxu0 0.0
    %287 = vmatmul.mubr.f32.gmra.mrb[0].mxu0 %v200
    %v288 = vpop.f32.mrb[0].mxu0
    %v289 = vadd.f32 0.0, %v288
    %v290 = vpop.f32.mrb[0].mxu0
    %291 = vdwg.mxu0
    %s292 = scalar_lea.vmem %s1, 120
    %v293 = vld [vmem:[%s292] sm:$0xff]
    %v294 = vld [vmem:[%s292 + $0x8] sm:$0xff]
    %v295 = vld [vmem:[%s292 + $0x10] sm:$0xff]
    %v296 = vld [vmem:[%s292 + $0x18] sm:$0xff]
    %v297 = vld [vmem:[%s292 + $0x20] sm:$0xff]
    %v298 = vld [vmem:[%s292 + $0x28] sm:$0xff]
    %v299 = vld [vmem:[%s292 + $0x30] sm:$0xff]
    %v300 = vld [vmem:[%s292 + $0x38] sm:$0xff]
    %v301 = vld [vmem:[%s292 + $0x40] sm:$0xff]
    %v302 = vld [vmem:[%s292 + $0x48] sm:$0xff]
    %v303 = vld [vmem:[%s292 + $0x50] sm:$0xff]
    %v304 = vld [vmem:[%s292 + $0x58] sm:$0xff]
    %v305 = vld [vmem:[%s292 + $0x60] sm:$0xff]
    %v306 = vld [vmem:[%s292 + $0x68] sm:$0xff]
    %v307 = vld [vmem:[%s292 + $0x70] sm:$0xff]
    %vm308 = vcmask 326656
    %v310 = vsel %vm308, %v269, 0
    %v313 = vsel %vm308, %v274, 0
    %v316 = vsel %vm308, %v279, 0
    %v319 = vsel %vm308, %v284, 0
    %v322 = vsel %vm308, %v289, 0
    %324 = vmatprep.subr.mxu0 %v294
    %325 = vmatpush1.msra.mxu0 %v293
    %326 = vmatprep.subr.mxu0 %v297
    %327 = vmatpush1.msra.mxu0 %v296
    %328 = vmatprep.subr.mxu0 %v300
    %329 = vmatpush1.msra.mxu0 %v299
    %330 = vmatprep.subr.mxu0 %v303
    %331 = vmatpush1.msra.mxu0 %v302
    %332 = vmatprep.subr.mxu0 %v306
    %333 = vmatpush1.msra.mxu0 %v305
    %334 = vmatprep.subr.mxu0 0.0
    %335 = vmatpush1.msra.mxu0 0.0
    %336 = vmatprep.subr.mxu0 0.0
    %337 = vmatpush1.msra.mxu0 0.0
    %338 = vmatprep.subr.mxu0 0.0
    %339 = vmatpush1.msra.mxu0 0.0
    %340 = vmatprep.subr.mxu0 0.0
    %341 = vmatpush1.msra.mxu0 0.0
    %342 = vmatprep.subr.mxu0 0.0
    %343 = vmatpush1.msra.mxu0 0.0
    %344 = vmatprep.subr.mxu0 0.0
    %345 = vmatpush1.msra.mxu0 0.0
    %346 = vmatprep.subr.mxu0 0.0
    %347 = vmatpush1.msra.mxu0 0.0
    %348 = vmatprep.subr.mxu0 0.0
    %349 = vmatpush1.msra.mxu0 0.0
    %350 = vmatprep.subr.mxu0 0.0
    %351 = vmatpush1.msra.mxu0 0.0
    %352 = vmatprep.subr.mxu0 0.0
    %353 = vmatpush1.msra.mxu0 0.0
    %354 = vmatprep.subr.mxu0 0.0
    %355 = vmatpush1.msra.mxu0 0.0
    %356 = vmatprep.subr.mxu0 0.0
    %357 = vmatpush1.msra.mxu0 0.0
    %358 = vmatprep.subr.mxu0 0.0
    %359 = vmatpush1.msra.mxu0 0.0
    %360 = vmatprep.subr.mxu0 0.0
    %361 = vmatpush1.msra.mxu0 0.0
    %362 = vmatprep.subr.mxu0 0.0
    %363 = vmatpush1.msra.mxu0 0.0
    %364 = vmatprep.subr.mxu0 0.0
    %365 = vmatpush1.msra.mxu0 0.0
    %366 = vmatprep.subr.mxu0 0.0
    %367 = vmatpush1.msra.mxu0 0.0
    %368 = vmatprep.subr.mxu0 0.0
    %369 = vmatpush1.msra.mxu0 0.0
    %370 = vmatprep.subr.mxu0 0.0
    %371 = vmatpush1.msra.mxu0 0.0
    %372 = vmatprep.subr.mxu0 0.0
    %373 = vmatpush1.msra.mxu0 0.0
    %374 = vmatprep.subr.mxu0 0.0
    %375 = vmatpush1.msra.mxu0 0.0
    %376 = vmatprep.subr.mxu0 0.0
    %377 = vmatpush1.msra.mxu0 0.0
    %378 = vmatprep.subr.mxu0 0.0
    %379 = vmatpush1.msra.mxu0 0.0
    %380 = vmatprep.subr.mxu0 0.0
    %381 = vmatpush1.msra.mxu0 0.0
    %382 = vmatprep.subr.mxu0 0.0
    %383 = vmatpush1.msra.mxu0 0.0
    %384 = vmatprep.subr.mxu0 0.0
    %385 = vmatpush1.msra.mxu0 0.0
    %386 = vmatprep.subr.mxu0 0.0
    %387 = vmatpush1.msra.mxu0 0.0
    %388 = vmatprep.mubr.f32.mxu0 0.0
    %389 = vmatmul.mubr.f32.gmra.mrb[0].mxu0 %v310
    %v390 = vpop.f32.mrb[0].mxu0
    %v391 = vadd.f32 0.0, %v390
    %v392 = vpop.f32.mrb[0].mxu0
    %v393 = vadd.f32 0.0, %v392
    %394 = vmatprep.mubr.f32.mxu0 0.0
    %395 = vmatmul.mubr.f32.gmra.mrb[0].mxu0 %v313
    %v396 = vpop.f32.mrb[0].mxu0
    %v397 = vadd.f32 0.0, %v396
    %v398 = vpop.f32.mrb[0].mxu0
    %v399 = vadd.f32 0.0, %v398
    %400 = vmatprep.mubr.f32.mxu0 0.0
    %401 = vmatmul.mubr.f32.gmra.mrb[0].mxu0 %v316
    %v402 = vpop.f32.mrb[0].mxu0
    %v403 = vadd.f32 0.0, %v402
    %v404 = vpop.f32.mrb[0].mxu0
    %v405 = vadd.f32 0.0, %v404
    %406 = vmatprep.mubr.f32.mxu0 0.0
    %407 = vmatmul.mubr.f32.gmra.mrb[0].mxu0 %v319
    %v408 = vpop.f32.mrb[0].mxu0
    %v409 = vadd.f32 0.0, %v408
    %v410 = vpop.f32.mrb[0].mxu0
    %v411 = vadd.f32 0.0, %v410
    %412 = vmatprep.mubr.f32.mxu0 0.0
    %413 = vmatmul.mubr.f32.gmra.mrb[0].mxu0 %v322
    %v414 = vpop.f32.mrb[0].mxu0
    %v415 = vadd.f32 0.0, %v414
    %v416 = vpop.f32.mrb[0].mxu0
    %v417 = vadd.f32 0.0, %v416
    %418 = vdwg.mxu0
    %419 = vmatprep.subr.mxu0 0.0
    %420 = vmatpush1.msra.mxu0 %v295
    %421 = vmatprep.subr.mxu0 0.0
    %422 = vmatpush1.msra.mxu0 %v298
    %423 = vmatprep.subr.mxu0 0.0
    %424 = vmatpush1.msra.mxu0 %v301
    %425 = vmatprep.subr.mxu0 0.0
    %426 = vmatpush1.msra.mxu0 %v304
    %427 = vmatprep.subr.mxu0 0.0
    %428 = vmatpush1.msra.mxu0 %v307
    %429 = vmatprep.subr.mxu0 0.0
    %430 = vmatpush1.msra.mxu0 0.0
    %431 = vmatprep.subr.mxu0 0.0
    %432 = vmatpush1.msra.mxu0 0.0
    %433 = vmatprep.subr.mxu0 0.0
    %434 = vmatpush1.msra.mxu0 0.0
    %435 = vmatprep.subr.mxu0 0.0
    %436 = vmatpush1.msra.mxu0 0.0
    %437 = vmatprep.subr.mxu0 0.0
    %438 = vmatpush1.msra.mxu0 0.0
    %439 = vmatprep.subr.mxu0 0.0
    %440 = vmatpush1.msra.mxu0 0.0
    %441 = vmatprep.subr.mxu0 0.0
    %442 = vmatpush1.msra.mxu0 0.0
    %443 = vmatprep.subr.mxu0 0.0
    %444 = vmatpush1.msra.mxu0 0.0
    %445 = vmatprep.subr.mxu0 0.0
    %446 = vmatpush1.msra.mxu0 0.0
    %447 = vmatprep.subr.mxu0 0.0
    %448 = vmatpush1.msra.mxu0 0.0
    %449 = vmatprep.subr.mxu0 0.0
    %450 = vmatpush1.msra.mxu0 0.0
    %451 = vmatprep.subr.mxu0 0.0
    %452 = vmatpush1.msra.mxu0 0.0
    %453 = vmatprep.subr.mxu0 0.0
    %454 = vmatpush1.msra.mxu0 0.0
    %455 = vmatprep.subr.mxu0 0.0
    %456 = vmatpush1.msra.mxu0 0.0
    %457 = vmatprep.subr.mxu0 0.0
    %458 = vmatpush1.msra.mxu0 0.0
    %459 = vmatprep.subr.mxu0 0.0
    %460 = vmatpush1.msra.mxu0 0.0
    %461 = vmatprep.subr.mxu0 0.0
    %462 = vmatpush1.msra.mxu0 0.0
    %463 = vmatprep.subr.mxu0 0.0
    %464 = vmatpush1.msra.mxu0 0.0
    %465 = vmatprep.subr.mxu0 0.0
    %466 = vmatpush1.msra.mxu0 0.0
    %467 = vmatprep.subr.mxu0 0.0
    %468 = vmatpush1.msra.mxu0 0.0
    %469 = vmatprep.subr.mxu0 0.0
    %470 = vmatpush1.msra.mxu0 0.0
    %471 = vmatprep.subr.mxu0 0.0
    %472 = vmatpush1.msra.mxu0 0.0
    %473 = vmatprep.subr.mxu0 0.0
    %474 = vmatpush1.msra.mxu0 0.0
    %475 = vmatprep.subr.mxu0 0.0
    %476 = vmatpush1.msra.mxu0 0.0
    %477 = vmatprep.subr.mxu0 0.0
    %478 = vmatpush1.msra.mxu0 0.0
    %479 = vmatprep.subr.mxu0 0.0
    %480 = vmatpush1.msra.mxu0 0.0
    %481 = vmatprep.subr.mxu0 0.0
    %482 = vmatpush1.msra.mxu0 0.0
    %483 = vmatprep.mubr.f32.mxu0 0.0
    %484 = vmatmul.mubr.f32.gmra.mrb[0].mxu0 %v310
    %v485 = vpop.f32.mrb[0].mxu0
    %v486 = vadd.f32 0.0, %v485
    %v487 = vpop.f32.mrb[0].mxu0
    %488 = vmatprep.mubr.f32.mxu0 0.0
    %489 = vmatmul.mubr.f32.gmra.mrb[0].mxu0 %v313
    %v490 = vpop.f32.mrb[0].mxu0
    %v491 = vadd.f32 0.0, %v490
    %v492 = vpop.f32.mrb[0].mxu0
    %493 = vmatprep.mubr.f32.mxu0 0.0
    %494 = vmatmul.mubr.f32.gmra.mrb[0].mxu0 %v316
    %v495 = vpop.f32.mrb[0].mxu0
    %v496 = vadd.f32 0.0, %v495
    %v497 = vpop.f32.mrb[0].mxu0
    %498 = vmatprep.mubr.f32.mxu0 0.0
    %499 = vmatmul.mubr.f32.gmra.mrb[0].mxu0 %v319
    %v500 = vpop.f32.mrb[0].mxu0
    %v501 = vadd.f32 0.0, %v500
    %v502 = vpop.f32.mrb[0].mxu0
    %503 = vmatprep.mubr.f32.mxu0 0.0
    %504 = vmatmul.mubr.f32.gmra.mrb[0].mxu0 %v322
    %v505 = vpop.f32.mrb[0].mxu0
    %v506 = vadd.f32 0.0, %v505
    %v507 = vpop.f32.mrb[0].mxu0
    %508 = vdwg.mxu0
    %v510 = vsel %vm308, %v143, 0
    %v513 = vsel %vm308, %v148, 0
    %v516 = vsel %vm308, %v153, 0
    %v519 = vsel %vm308, %v158, 0
    %v522 = vsel %vm308, %v163, 0
    %524 = vmatprep.subr.mxu0 %v167
    %525 = vmatpush1.msra.mxu0 %v166
    %526 = vmatprep.subr.mxu0 %v170
    %527 = vmatpush1.msra.mxu0 %v169
    %528 = vmatprep.subr.mxu0 %v173
    %529 = vmatpush1.msra.mxu0 %v172
    %530 = vmatprep.subr.mxu0 %v176
    %531 = vmatpush1.msra.mxu0 %v175
    %532 = vmatprep.subr.mxu0 %v179
    %533 = vmatpush1.msra.mxu0 %v178
    %534 = vmatprep.subr.mxu0 0.0
    %535 = vmatpush1.msra.mxu0 0.0
    %536 = vmatprep.subr.mxu0 0.0
    %537 = vmatpush1.msra.mxu0 0.0
    %538 = vmatprep.subr.mxu0 0.0
    %539 = vmatpush1.msra.mxu0 0.0
    %540 = vmatprep.subr.mxu0 0.0
    %541 = vmatpush1.msra.mxu0 0.0
    %542 = vmatprep.subr.mxu0 0.0
    %543 = vmatpush1.msra.mxu0 0.0
    %544 = vmatprep.subr.mxu0 0.0
    %545 = vmatpush1.msra.mxu0 0.0
    %546 = vmatprep.subr.mxu0 0.0
    %547 = vmatpush1.msra.mxu0 0.0
    %548 = vmatprep.subr.mxu0 0.0
    %549 = vmatpush1.msra.mxu0 0.0
    %550 = vmatprep.subr.mxu0 0.0
    %551 = vmatpush1.msra.mxu0 0.0
    %552 = vmatprep.subr.mxu0 0.0
    %553 = vmatpush1.msra.mxu0 0.0
    %554 = vmatprep.subr.mxu0 0.0
    %555 = vmatpush1.msra.mxu0 0.0
    %556 = vmatprep.subr.mxu0 0.0
    %557 = vmatpush1.msra.mxu0 0.0
    %558 = vmatprep.subr.mxu0 0.0
    %559 = vmatpush1.msra.mxu0 0.0
    %560 = vmatprep.subr.mxu0 0.0
    %561 = vmatpush1.msra.mxu0 0.0
    %562 = vmatprep.subr.mxu0 0.0
    %563 = vmatpush1.msra.mxu0 0.0
    %564 = vmatprep.subr.mxu0 0.0
    %565 = vmatpush1.msra.mxu0 0.0
    %566 = vmatprep.subr.mxu0 0.0
    %567 = vmatpush1.msra.mxu0 0.0
    %568 = vmatprep.subr.mxu0 0.0
    %569 = vmatpush1.msra.mxu0 0.0
    %570 = vmatprep.subr.mxu0 0.0
    %571 = vmatpush1.msra.mxu0 0.0
    %572 = vmatprep.subr.mxu0 0.0
    %573 = vmatpush1.msra.mxu0 0.0
    %574 = vmatprep.subr.mxu0 0.0
    %575 = vmatpush1.msra.mxu0 0.0
    %576 = vmatprep.subr.mxu0 0.0
    %577 = vmatpush1.msra.mxu0 0.0
    %578 = vmatprep.subr.mxu0 0.0
    %579 = vmatpush1.msra.mxu0 0.0
    %580 = vmatprep.subr.mxu0 0.0
    %581 = vmatpush1.msra.mxu0 0.0
    %582 = vmatprep.subr.mxu0 0.0
    %583 = vmatpush1.msra.mxu0 0.0
    %584 = vmatprep.subr.mxu0 0.0
    %585 = vmatpush1.msra.mxu0 0.0
    %586 = vmatprep.subr.mxu0 0.0
    %587 = vmatpush1.msra.mxu0 0.0
    %588 = vmatprep.mubr.f32.mxu0 0.0
    %589 = vmatmul.mubr.f32.gmra.mrb[0].mxu0 %v510
    %v590 = vpop.f32.mrb[0].mxu0
    %v591 = vadd.f32 %v391, %v590
    %v592 = vpop.f32.mrb[0].mxu0
    %v593 = vadd.f32 %v393, %v592
    %594 = vmatprep.mubr.f32.mxu0 0.0
    %595 = vmatmul.mubr.f32.gmra.mrb[0].mxu0 %v513
    %v596 = vpop.f32.mrb[0].mxu0
    %v597 = vadd.f32 %v397, %v596
    %v598 = vpop.f32.mrb[0].mxu0
    %v599 = vadd.f32 %v399, %v598
    %600 = vmatprep.mubr.f32.mxu0 0.0
    %601 = vmatmul.mubr.f32.gmra.mrb[0].mxu0 %v516
    %v602 = vpop.f32.mrb[0].mxu0
    %v603 = vadd.f32 %v403, %v602
    %v604 = vpop.f32.mrb[0].mxu0
    %v605 = vadd.f32 %v405, %v604
    %606 = vmatprep.mubr.f32.mxu0 0.0
    %607 = vmatmul.mubr.f32.gmra.mrb[0].mxu0 %v519
    %v608 = vpop.f32.mrb[0].mxu0
    %v609 = vadd.f32 %v409, %v608
    %v610 = vpop.f32.mrb[0].mxu0
    %v611 = vadd.f32 %v411, %v610
    %612 = vmatprep.mubr.f32.mxu0 0.0
    %613 = vmatmul.mubr.f32.gmra.mrb[0].mxu0 %v522
    %v614 = vpop.f32.mrb[0].mxu0
    %v615 = vadd.f32 %v415, %v614
    %v616 = vpop.f32.mrb[0].mxu0
    %v617 = vadd.f32 %v417, %v616
    %618 = vdwg.mxu0
    %619 = vmatprep.subr.mxu0 0.0
    %620 = vmatpush1.msra.mxu0 %v168
    %621 = vmatprep.subr.mxu0 0.0
    %622 = vmatpush1.msra.mxu0 %v171
    %623 = vmatprep.subr.mxu0 0.0
    %624 = vmatpush1.msra.mxu0 %v174
    %625 = vmatprep.subr.mxu0 0.0
    %626 = vmatpush1.msra.mxu0 %v177
    %627 = vmatprep.subr.mxu0 0.0
    %628 = vmatpush1.msra.mxu0 %v180
    %629 = vmatprep.subr.mxu0 0.0
    %630 = vmatpush1.msra.mxu0 0.0
    %631 = vmatprep.subr.mxu0 0.0
    %632 = vmatpush1.msra.mxu0 0.0
    %633 = vmatprep.subr.mxu0 0.0
    %634 = vmatpush1.msra.mxu0 0.0
    %635 = vmatprep.subr.mxu0 0.0
    %636 = vmatpush1.msra.mxu0 0.0
    %637 = vmatprep.subr.mxu0 0.0
    %638 = vmatpush1.msra.mxu0 0.0
    %639 = vmatprep.subr.mxu0 0.0
    %640 = vmatpush1.msra.mxu0 0.0
    %641 = vmatprep.subr.mxu0 0.0
    %642 = vmatpush1.msra.mxu0 0.0
    %643 = vmatprep.subr.mxu0 0.0
    %644 = vmatpush1.msra.mxu0 0.0
    %645 = vmatprep.subr.mxu0 0.0
    %646 = vmatpush1.msra.mxu0 0.0
    %647 = vmatprep.subr.mxu0 0.0
    %648 = vmatpush1.msra.mxu0 0.0
    %649 = vmatprep.subr.mxu0 0.0
    %650 = vmatpush1.msra.mxu0 0.0
    %651 = vmatprep.subr.mxu0 0.0
    %652 = vmatpush1.msra.mxu0 0.0
    %653 = vmatprep.subr.mxu0 0.0
    %654 = vmatpush1.msra.mxu0 0.0
    %655 = vmatprep.subr.mxu0 0.0
    %656 = vmatpush1.msra.mxu0 0.0
    %657 = vmatprep.subr.mxu0 0.0
    %658 = vmatpush1.msra.mxu0 0.0
    %659 = vmatprep.subr.mxu0 0.0
    %660 = vmatpush1.msra.mxu0 0.0
    %661 = vmatprep.subr.mxu0 0.0
    %662 = vmatpush1.msra.mxu0 0.0
    %663 = vmatprep.subr.mxu0 0.0
    %664 = vmatpush1.msra.mxu0 0.0
    %665 = vmatprep.subr.mxu0 0.0
    %666 = vmatpush1.msra.mxu0 0.0
    %667 = vmatprep.subr.mxu0 0.0
    %668 = vmatpush1.msra.mxu0 0.0
    %669 = vmatprep.subr.mxu0 0.0
    %670 = vmatpush1.msra.mxu0 0.0
    %671 = vmatprep.subr.mxu0 0.0
    %672 = vmatpush1.msra.mxu0 0.0
    %673 = vmatprep.subr.mxu0 0.0
    %674 = vmatpush1.msra.mxu0 0.0
    %675 = vmatprep.subr.mxu0 0.0
    %676 = vmatpush1.msra.mxu0 0.0
    %677 = vmatprep.subr.mxu0 0.0
    %678 = vmatpush1.msra.mxu0 0.0
    %679 = vmatprep.subr.mxu0 0.0
    %680 = vmatpush1.msra.mxu0 0.0
    %681 = vmatprep.subr.mxu0 0.0
    %682 = vmatpush1.msra.mxu0 0.0
    %683 = vmatprep.mubr.f32.mxu0 0.0
    %684 = vmatmul.mubr.f32.gmra.mrb[0].mxu0 %v510
    %v685 = vpop.f32.mrb[0].mxu0
    %v686 = vadd.f32 %v486, %v685
    %v687 = vpop.f32.mrb[0].mxu0
    %688 = vmatprep.mubr.f32.mxu0 0.0
    %689 = vmatmul.mubr.f32.gmra.mrb[0].mxu0 %v513
    %v690 = vpop.f32.mrb[0].mxu0
    %v691 = vadd.f32 %v491, %v690
    %v692 = vpop.f32.mrb[0].mxu0
    %693 = vmatprep.mubr.f32.mxu0 0.0
    %694 = vmatmul.mubr.f32.gmra.mrb[0].mxu0 %v516
    %v695 = vpop.f32.mrb[0].mxu0
    %v696 = vadd.f32 %v496, %v695
    %v697 = vpop.f32.mrb[0].mxu0
    %698 = vmatprep.mubr.f32.mxu0 0.0
    %699 = vmatmul.mubr.f32.gmra.mrb[0].mxu0 %v519
    %v700 = vpop.f32.mrb[0].mxu0
    %v701 = vadd.f32 %v501, %v700
    %v702 = vpop.f32.mrb[0].mxu0
    %703 = vmatprep.mubr.f32.mxu0 0.0
    %704 = vmatmul.mubr.f32.gmra.mrb[0].mxu0 %v522
    %v705 = vpop.f32.mrb[0].mxu0
    %v706 = vadd.f32 %v506, %v705
    %v707 = vpop.f32.mrb[0].mxu0
    %708 = vdwg.mxu0
    %s709 = scalar_lea.vmem %s2, 80
    %v710 = vld [vmem:[%s709] sm:$0xff]
    %v711 = vld [vmem:[%s709 + $0x8] sm:$0xff]
    %v712 = vld [vmem:[%s709 + $0x10] sm:$0xff]
    %v713 = vld [vmem:[%s709 + $0x18] sm:$0xff]
    %v714 = vld [vmem:[%s709 + $0x20] sm:$0xf]
    %v716 = vsel %vm60, %v710, 0
    %v719 = vsel %vm60, %v711, 0
    %v722 = vsel %vm60, %v712, 0
    %v725 = vsel %vm60, %v713, 0
    %v728 = vsel %vm60, %v714, 0
    %730 = vmatprep.subr.mxu0 0.0
    %731 = vmatpush1.msra.mxu0 %v45
    %732 = vmatprep.subr.mxu0 0.0
    %733 = vmatpush1.msra.mxu0 %v46
    %734 = vmatprep.subr.mxu0 0.0
    %735 = vmatpush1.msra.mxu0 %v47
    %736 = vmatprep.subr.mxu0 0.0
    %737 = vmatpush1.msra.mxu0 %v48
    %738 = vmatprep.subr.mxu0 0.0
    %739 = vmatpush1.msra.mxu0 %v49
    %740 = vmatprep.subr.mxu0 0.0
    %741 = vmatpush1.msra.mxu0 %v50
    %742 = vmatprep.subr.mxu0 0.0
    %743 = vmatpush1.msra.mxu0 %v51
    %744 = vmatprep.subr.mxu0 0.0
    %745 = vmatpush1.msra.mxu0 %v52
    %746 = vmatprep.subr.mxu0 0.0
    %747 = vmatpush1.msra.mxu0 %v53
    %748 = vmatprep.subr.mxu0 0.0
    %749 = vmatpush1.msra.mxu0 %v54
    %750 = vmatprep.subr.mxu0 0.0
    %751 = vmatpush1.msra.mxu0 0.0
    %752 = vmatprep.subr.mxu0 0.0
    %753 = vmatpush1.msra.mxu0 0.0
    %754 = vmatprep.subr.mxu0 0.0
    %755 = vmatpush1.msra.mxu0 0.0
    %756 = vmatprep.subr.mxu0 0.0
    %757 = vmatpush1.msra.mxu0 0.0
    %758 = vmatprep.subr.mxu0 0.0
    %759 = vmatpush1.msra.mxu0 0.0
    %760 = vmatprep.subr.mxu0 0.0
    %761 = vmatpush1.msra.mxu0 0.0
    %762 = vmatprep.subr.mxu0 0.0
    %763 = vmatpush1.msra.mxu0 0.0
    %764 = vmatprep.subr.mxu0 0.0
    %765 = vmatpush1.msra.mxu0 0.0
    %766 = vmatprep.subr.mxu0 0.0
    %767 = vmatpush1.msra.mxu0 0.0
    %768 = vmatprep.subr.mxu0 0.0
    %769 = vmatpush1.msra.mxu0 0.0
    %770 = vmatprep.subr.mxu0 0.0
    %771 = vmatpush1.msra.mxu0 0.0
    %772 = vmatprep.subr.mxu0 0.0
    %773 = vmatpush1.msra.mxu0 0.0
    %774 = vmatprep.subr.mxu0 0.0
    %775 = vmatpush1.msra.mxu0 0.0
    %776 = vmatprep.subr.mxu0 0.0
    %777 = vmatpush1.msra.mxu0 0.0
    %778 = vmatprep.subr.mxu0 0.0
    %779 = vmatpush1.msra.mxu0 0.0
    %780 = vmatprep.subr.mxu0 0.0
    %781 = vmatpush1.msra.mxu0 0.0
    %782 = vmatprep.subr.mxu0 0.0
    %783 = vmatpush1.msra.mxu0 0.0
    %784 = vmatprep.subr.mxu0 0.0
    %785 = vmatpush1.msra.mxu0 0.0
    %786 = vmatprep.subr.mxu0 0.0
    %787 = vmatpush1.msra.mxu0 0.0
    %788 = vmatprep.subr.mxu0 0.0
    %789 = vmatpush1.msra.mxu0 0.0
    %790 = vmatprep.subr.mxu0 0.0
    %791 = vmatpush1.msra.mxu0 0.0
    %792 = vmatprep.subr.mxu0 0.0
    %793 = vmatpush1.msra.mxu0 0.0
    %794 = vmatprep.mubr.f32.mxu0 0.0
    %795 = vmatmul.mubr.f32.gmra.mrb[0].mxu0 %v716
    %v796 = vpop.f32.mrb[0].mxu0
    %v797 = vadd.f32 0.0, %v796
    %v798 = vpop.f32.mrb[0].mxu0
    %799 = vmatprep.mubr.f32.mxu0 0.0
    %800 = vmatmul.mubr.f32.gmra.mrb[0].mxu0 %v719
    %v801 = vpop.f32.mrb[0].mxu0
    %v802 = vadd.f32 0.0, %v801
    %v803 = vpop.f32.mrb[0].mxu0
    %804 = vmatprep.mubr.f32.mxu0 0.0
    %805 = vmatmul.mubr.f32.gmra.mrb[0].mxu0 %v722
    %v806 = vpop.f32.mrb[0].mxu0
    %v807 = vadd.f32 0.0, %v806
    %v808 = vpop.f32.mrb[0].mxu0
    %809 = vmatprep.mubr.f32.mxu0 0.0
    %810 = vmatmul.mubr.f32.gmra.mrb[0].mxu0 %v725
    %v811 = vpop.f32.mrb[0].mxu0
    %v812 = vadd.f32 0.0, %v811
    %v813 = vpop.f32.mrb[0].mxu0
    %814 = vmatprep.mubr.f32.mxu0 0.0
    %815 = vmatmul.mubr.f32.gmra.mrb[0].mxu0 %v728
    %v816 = vpop.f32.mrb[0].mxu0
    %v817 = vadd.f32 0.0, %v816
    %v818 = vpop.f32.mrb[0].mxu0
    %819 = vdwg.mxu0
    %s820 = scalar_lea.vmem %s1, 240
    %v821 = vld [vmem:[%s820] sm:$0xff]
    %v822 = vld [vmem:[%s820 + $0x8] sm:$0xff]
    %v823 = vld [vmem:[%s820 + $0x10] sm:$0xff]
    %v824 = vld [vmem:[%s820 + $0x18] sm:$0xff]
    %v825 = vld [vmem:[%s820 + $0x20] sm:$0xff]
    %v826 = vld [vmem:[%s820 + $0x28] sm:$0xff]
    %v827 = vld [vmem:[%s820 + $0x30] sm:$0xff]
    %v828 = vld [vmem:[%s820 + $0x38] sm:$0xff]
    %v829 = vld [vmem:[%s820 + $0x40] sm:$0xff]
    %v830 = vld [vmem:[%s820 + $0x48] sm:$0xff]
    %v831 = vld [vmem:[%s820 + $0x50] sm:$0xff]
    %v832 = vld [vmem:[%s820 + $0x58] sm:$0xff]
    %v833 = vld [vmem:[%s820 + $0x60] sm:$0xff]
    %v834 = vld [vmem:[%s820 + $0x68] sm:$0xff]
    %v835 = vld [vmem:[%s820 + $0x70] sm:$0xff]
    %v837 = vsel %vm308, %v797, 0
    %v840 = vsel %vm308, %v802, 0
    %v843 = vsel %vm308, %v807, 0
    %v846 = vsel %vm308, %v812, 0
    %v849 = vsel %vm308, %v817, 0
    %851 = vmatprep.subr.mxu0 %v822
    %852 = vmatpush1.msra.mxu0 %v821
    %853 = vmatprep.subr.mxu0 %v825
    %854 = vmatpush1.msra.mxu0 %v824
    %855 = vmatprep.subr.mxu0 %v828
    %856 = vmatpush1.msra.mxu0 %v827
    %857 = vmatprep.subr.mxu0 %v831
    %858 = vmatpush1.msra.mxu0 %v830
    %859 = vmatprep.subr.mxu0 %v834
    %860 = vmatpush1.msra.mxu0 %v833
    %861 = vmatprep.subr.mxu0 0.0
    %862 = vmatpush1.msra.mxu0 0.0
    %863 = vmatprep.subr.mxu0 0.0
    %864 = vmatpush1.msra.mxu0 0.0
    %865 = vmatprep.subr.mxu0 0.0
    %866 = vmatpush1.msra.mxu0 0.0
    %867 = vmatprep.subr.mxu0 0.0
    %868 = vmatpush1.msra.mxu0 0.0
    %869 = vmatprep.subr.mxu0 0.0
    %870 = vmatpush1.msra.mxu0 0.0
    %871 = vmatprep.subr.mxu0 0.0
    %872 = vmatpush1.msra.mxu0 0.0
    %873 = vmatprep.subr.mxu0 0.0
    %874 = vmatpush1.msra.mxu0 0.0
    %875 = vmatprep.subr.mxu0 0.0
    %876 = vmatpush1.msra.mxu0 0.0
    %877 = vmatprep.subr.mxu0 0.0
    %878 = vmatpush1.msra.mxu0 0.0
    %879 = vmatprep.subr.mxu0 0.0
    %880 = vmatpush1.msra.mxu0 0.0
    %881 = vmatprep.subr.mxu0 0.0
    %882 = vmatpush1.msra.mxu0 0.0
    %883 = vmatprep.subr.mxu0 0.0
    %884 = vmatpush1.msra.mxu0 0.0
    %885 = vmatprep.subr.mxu0 0.0
    %886 = vmatpush1.msra.mxu0 0.0
    %887 = vmatprep.subr.mxu0 0.0
    %888 = vmatpush1.msra.mxu0 0.0
    %889 = vmatprep.subr.mxu0 0.0
    %890 = vmatpush1.msra.mxu0 0.0
    %891 = vmatprep.subr.mxu0 0.0
    %892 = vmatpush1.msra.mxu0 0.0
    %893 = vmatprep.subr.mxu0 0.0
    %894 = vmatpush1.msra.mxu0 0.0
    %895 = vmatprep.subr.mxu0 0.0
    %896 = vmatpush1.msra.mxu0 0.0
    %897 = vmatprep.subr.mxu0 0.0
    %898 = vmatpush1.msra.mxu0 0.0
    %899 = vmatprep.subr.mxu0 0.0
    %900 = vmatpush1.msra.mxu0 0.0
    %901 = vmatprep.subr.mxu0 0.0
    %902 = vmatpush1.msra.mxu0 0.0
    %903 = vmatprep.subr.mxu0 0.0
    %904 = vmatpush1.msra.mxu0 0.0
    %905 = vmatprep.subr.mxu0 0.0
    %906 = vmatpush1.msra.mxu0 0.0
    %907 = vmatprep.subr.mxu0 0.0
    %908 = vmatpush1.msra.mxu0 0.0
    %909 = vmatprep.subr.mxu0 0.0
    %910 = vmatpush1.msra.mxu0 0.0
    %911 = vmatprep.subr.mxu0 0.0
    %912 = vmatpush1.msra.mxu0 0.0
    %913 = vmatprep.subr.mxu0 0.0
    %914 = vmatpush1.msra.mxu0 0.0
    %915 = vmatprep.mubr.f32.mxu0 0.0
    %916 = vmatmul.mubr.f32.gmra.mrb[0].mxu0 %v837
    %v917 = vpop.f32.mrb[0].mxu0
    %v918 = vadd.f32 0.0, %v917
    %v919 = vpop.f32.mrb[0].mxu0
    %v920 = vadd.f32 0.0, %v919
    %921 = vmatprep.mubr.f32.mxu0 0.0
    %922 = vmatmul.mubr.f32.gmra.mrb[0].mxu0 %v840
    %v923 = vpop.f32.mrb[0].mxu0
    %v924 = vadd.f32 0.0, %v923
    %v925 = vpop.f32.mrb[0].mxu0
    %v926 = vadd.f32 0.0, %v925
    %927 = vmatprep.mubr.f32.mxu0 0.0
    %928 = vmatmul.mubr.f32.gmra.mrb[0].mxu0 %v843
    %v929 = vpop.f32.mrb[0].mxu0
    %v930 = vadd.f32 0.0, %v929
    %v931 = vpop.f32.mrb[0].mxu0
    %v932 = vadd.f32 0.0, %v931
    %933 = vmatprep.mubr.f32.mxu0 0.0
    %934 = vmatmul.mubr.f32.gmra.mrb[0].mxu0 %v846
    %v935 = vpop.f32.mrb[0].mxu0
    %v936 = vadd.f32 0.0, %v935
    %v937 = vpop.f32.mrb[0].mxu0
    %v938 = vadd.f32 0.0, %v937
    %939 = vmatprep.mubr.f32.mxu0 0.0
    %940 = vmatmul.mubr.f32.gmra.mrb[0].mxu0 %v849
    %v941 = vpop.f32.mrb[0].mxu0
    %v942 = vadd.f32 0.0, %v941
    %v943 = vpop.f32.mrb[0].mxu0
    %v944 = vadd.f32 0.0, %v943
    %945 = vdwg.mxu0
    %946 = vmatprep.subr.mxu0 0.0
    %947 = vmatpush1.msra.mxu0 %v823
    %948 = vmatprep.subr.mxu0 0.0
    %949 = vmatpush1.msra.mxu0 %v826
    %950 = vmatprep.subr.mxu0 0.0
    %951 = vmatpush1.msra.mxu0 %v829
    %952 = vmatprep.subr.mxu0 0.0
    %953 = vmatpush1.msra.mxu0 %v832
    %954 = vmatprep.subr.mxu0 0.0
    %955 = vmatpush1.msra.mxu0 %v835
    %956 = vmatprep.subr.mxu0 0.0
    %957 = vmatpush1.msra.mxu0 0.0
    %958 = vmatprep.subr.mxu0 0.0
    %959 = vmatpush1.msra.mxu0 0.0
    %960 = vmatprep.subr.mxu0 0.0
    %961 = vmatpush1.msra.mxu0 0.0
    %962 = vmatprep.subr.mxu0 0.0
    %963 = vmatpush1.msra.mxu0 0.0
    %964 = vmatprep.subr.mxu0 0.0
    %965 = vmatpush1.msra.mxu0 0.0
    %966 = vmatprep.subr.mxu0 0.0
    %967 = vmatpush1.msra.mxu0 0.0
    %968 = vmatprep.subr.mxu0 0.0
    %969 = vmatpush1.msra.mxu0 0.0
    %970 = vmatprep.subr.mxu0 0.0
    %971 = vmatpush1.msra.mxu0 0.0
    %972 = vmatprep.subr.mxu0 0.0
    %973 = vmatpush1.msra.mxu0 0.0
    %974 = vmatprep.subr.mxu0 0.0
    %975 = vmatpush1.msra.mxu0 0.0
    %976 = vmatprep.subr.mxu0 0.0
    %977 = vmatpush1.msra.mxu0 0.0
    %978 = vmatprep.subr.mxu0 0.0
    %979 = vmatpush1.msra.mxu0 0.0
    %980 = vmatprep.subr.mxu0 0.0
    %981 = vmatpush1.msra.mxu0 0.0
    %982 = vmatprep.subr.mxu0 0.0
    %983 = vmatpush1.msra.mxu0 0.0
    %984 = vmatprep.subr.mxu0 0.0
    %985 = vmatpush1.msra.mxu0 0.0
    %986 = vmatprep.subr.mxu0 0.0
    %987 = vmatpush1.msra.mxu0 0.0
    %988 = vmatprep.subr.mxu0 0.0
    %989 = vmatpush1.msra.mxu0 0.0
    %990 = vmatprep.subr.mxu0 0.0
    %991 = vmatpush1.msra.mxu0 0.0
    %992 = vmatprep.subr.mxu0 0.0
    %993 = vmatpush1.msra.mxu0 0.0
    %994 = vmatprep.subr.mxu0 0.0
    %995 = vmatpush1.msra.mxu0 0.0
    %996 = vmatprep.subr.mxu0 0.0
    %997 = vmatpush1.msra.mxu0 0.0
    %998 = vmatprep.subr.mxu0 0.0
    %999 = vmatpush1.msra.mxu0 0.0
    %1000 = vmatprep.subr.mxu0 0.0
    %1001 = vmatpush1.msra.mxu0 0.0
    %1002 = vmatprep.subr.mxu0 0.0
    %1003 = vmatpush1.msra.mxu0 0.0
    %1004 = vmatprep.subr.mxu0 0.0
    %1005 = vmatpush1.msra.mxu0 0.0
    %1006 = vmatprep.subr.mxu0 0.0
    %1007 = vmatpush1.msra.mxu0 0.0
    %1008 = vmatprep.subr.mxu0 0.0
    %1009 = vmatpush1.msra.mxu0 0.0
    %1010 = vmatprep.mubr.f32.mxu0 0.0
    %1011 = vmatmul.mubr.f32.gmra.mrb[0].mxu0 %v837
    %v1012 = vpop.f32.mrb[0].mxu0
    %v1013 = vadd.f32 0.0, %v1012
    %v1014 = vpop.f32.mrb[0].mxu0
    %1015 = vmatprep.mubr.f32.mxu0 0.0
    %1016 = vmatmul.mubr.f32.gmra.mrb[0].mxu0 %v840
    %v1017 = vpop.f32.mrb[0].mxu0
    %v1018 = vadd.f32 0.0, %v1017
    %v1019 = vpop.f32.mrb[0].mxu0
    %1020 = vmatprep.mubr.f32.mxu0 0.0
    %1021 = vmatmul.mubr.f32.gmra.mrb[0].mxu0 %v843
    %v1022 = vpop.f32.mrb[0].mxu0
    %v1023 = vadd.f32 0.0, %v1022
    %v1024 = vpop.f32.mrb[0].mxu0
    %1025 = vmatprep.mubr.f32.mxu0 0.0
    %1026 = vmatmul.mubr.f32.gmra.mrb[0].mxu0 %v846
    %v1027 = vpop.f32.mrb[0].mxu0
    %v1028 = vadd.f32 0.0, %v1027
    %v1029 = vpop.f32.mrb[0].mxu0
    %1030 = vmatprep.mubr.f32.mxu0 0.0
    %1031 = vmatmul.mubr.f32.gmra.mrb[0].mxu0 %v849
    %v1032 = vpop.f32.mrb[0].mxu0
    %v1033 = vadd.f32 0.0, %v1032
    %v1034 = vpop.f32.mrb[0].mxu0
    %1035 = vdwg.mxu0
    %v1036 = vadd.f32 %v591, %v918
    %v1037 = vadd.f32 %v593, %v920
    %v1038 = vadd.f32 %v686, %v1013
    %v1039 = vadd.f32 %v597, %v924
    %v1040 = vadd.f32 %v599, %v926
    %v1041 = vadd.f32 %v691, %v1018
    %v1042 = vadd.f32 %v603, %v930
    %v1043 = vadd.f32 %v605, %v932
    %v1044 = vadd.f32 %v696, %v1023
    %v1045 = vadd.f32 %v609, %v936
    %v1046 = vadd.f32 %v611, %v938
    %v1047 = vadd.f32 %v701, %v1028
    %v1048 = vadd.f32 %v615, %v942
    %v1049 = vadd.f32 %v617, %v944
    %v1050 = vadd.f32 %v706, %v1033
    %s1051 = scalar_lea.vmem %s2, 120
    %v1052 = vld [vmem:[%s1051] sm:$0xff]
    %v1053 = vld [vmem:[%s1051 + $0x8] sm:$0xff]
    %v1054 = vld [vmem:[%s1051 + $0x10] sm:$0xff]
    %v1055 = vld [vmem:[%s1051 + $0x18] sm:$0xff]
    %v1056 = vld [vmem:[%s1051 + $0x20] sm:$0xf]
    %v1058 = vsel %vm60, %v1052, 0
    %v1061 = vsel %vm60, %v1053, 0
    %v1064 = vsel %vm60, %v1054, 0
    %v1067 = vsel %vm60, %v1055, 0
    %v1070 = vsel %vm60, %v1056, 0
    %1072 = vmatprep.subr.mxu0 0.0
    %1073 = vmatpush1.msra.mxu0 %v45
    %1074 = vmatprep.subr.mxu0 0.0
    %1075 = vmatpush1.msra.mxu0 %v46
    %1076 = vmatprep.subr.mxu0 0.0
    %1077 = vmatpush1.msra.mxu0 %v47
    %1078 = vmatprep.subr.mxu0 0.0
    %1079 = vmatpush1.msra.mxu0 %v48
    %1080 = vmatprep.subr.mxu0 0.0
    %1081 = vmatpush1.msra.mxu0 %v49
    %1082 = vmatprep.subr.mxu0 0.0
    %1083 = vmatpush1.msra.mxu0 %v50
    %1084 = vmatprep.subr.mxu0 0.0
    %1085 = vmatpush1.msra.mxu0 %v51
    %1086 = vmatprep.subr.mxu0 0.0
    %1087 = vmatpush1.msra.mxu0 %v52
    %1088 = vmatprep.subr.mxu0 0.0
    %1089 = vmatpush1.msra.mxu0 %v53
    %1090 = vmatprep.subr.mxu0 0.0
    %1091 = vmatpush1.msra.mxu0 %v54
    %1092 = vmatprep.subr.mxu0 0.0
    %1093 = vmatpush1.msra.mxu0 0.0
    %1094 = vmatprep.subr.mxu0 0.0
    %1095 = vmatpush1.msra.mxu0 0.0
    %1096 = vmatprep.subr.mxu0 0.0
    %1097 = vmatpush1.msra.mxu0 0.0
    %1098 = vmatprep.subr.mxu0 0.0
    %1099 = vmatpush1.msra.mxu0 0.0
    %1100 = vmatprep.subr.mxu0 0.0
    %1101 = vmatpush1.msra.mxu0 0.0
    %1102 = vmatprep.subr.mxu0 0.0
    %1103 = vmatpush1.msra.mxu0 0.0
    %1104 = vmatprep.subr.mxu0 0.0
    %1105 = vmatpush1.msra.mxu0 0.0
    %1106 = vmatprep.subr.mxu0 0.0
    %1107 = vmatpush1.msra.mxu0 0.0
    %1108 = vmatprep.subr.mxu0 0.0
    %1109 = vmatpush1.msra.mxu0 0.0
    %1110 = vmatprep.subr.mxu0 0.0
    %1111 = vmatpush1.msra.mxu0 0.0
    %1112 = vmatprep.subr.mxu0 0.0
    %1113 = vmatpush1.msra.mxu0 0.0
    %1114 = vmatprep.subr.mxu0 0.0
    %1115 = vmatpush1.msra.mxu0 0.0
    %1116 = vmatprep.subr.mxu0 0.0
    %1117 = vmatpush1.msra.mxu0 0.0
    %1118 = vmatprep.subr.mxu0 0.0
    %1119 = vmatpush1.msra.mxu0 0.0
    %1120 = vmatprep.subr.mxu0 0.0
    %1121 = vmatpush1.msra.mxu0 0.0
    %1122 = vmatprep.subr.mxu0 0.0
    %1123 = vmatpush1.msra.mxu0 0.0
    %1124 = vmatprep.subr.mxu0 0.0
    %1125 = vmatpush1.msra.mxu0 0.0
    %1126 = vmatprep.subr.mxu0 0.0
    %1127 = vmatpush1.msra.mxu0 0.0
    %1128 = vmatprep.subr.mxu0 0.0
    %1129 = vmatpush1.msra.mxu0 0.0
    %1130 = vmatprep.subr.mxu0 0.0
    %1131 = vmatpush1.msra.mxu0 0.0
    %1132 = vmatprep.subr.mxu0 0.0
    %1133 = vmatpush1.msra.mxu0 0.0
    %1134 = vmatprep.subr.mxu0 0.0
    %1135 = vmatpush1.msra.mxu0 0.0
    %1136 = vmatprep.mubr.f32.mxu0 0.0
    %1137 = vmatmul.mubr.f32.gmra.mrb[0].mxu0 %v1058
    %v1138 = vpop.f32.mrb[0].mxu0
    %v1139 = vadd.f32 0.0, %v1138
    %v1140 = vpop.f32.mrb[0].mxu0
    %1141 = vmatprep.mubr.f32.mxu0 0.0
    %1142 = vmatmul.mubr.f32.gmra.mrb[0].mxu0 %v1061
    %v1143 = vpop.f32.mrb[0].mxu0
    %v1144 = vadd.f32 0.0, %v1143
    %v1145 = vpop.f32.mrb[0].mxu0
    %1146 = vmatprep.mubr.f32.mxu0 0.0
    %1147 = vmatmul.mubr.f32.gmra.mrb[0].mxu0 %v1064
    %v1148 = vpop.f32.mrb[0].mxu0
    %v1149 = vadd.f32 0.0, %v1148
    %v1150 = vpop.f32.mrb[0].mxu0
    %1151 = vmatprep.mubr.f32.mxu0 0.0
    %1152 = vmatmul.mubr.f32.gmra.mrb[0].mxu0 %v1067
    %v1153 = vpop.f32.mrb[0].mxu0
    %v1154 = vadd.f32 0.0, %v1153
    %v1155 = vpop.f32.mrb[0].mxu0
    %1156 = vmatprep.mubr.f32.mxu0 0.0
    %1157 = vmatmul.mubr.f32.gmra.mrb[0].mxu0 %v1070
    %v1158 = vpop.f32.mrb[0].mxu0
    %v1159 = vadd.f32 0.0, %v1158
    %v1160 = vpop.f32.mrb[0].mxu0
    %1161 = vdwg.mxu0
    %s1162 = scalar_lea.vmem %s1, 360
    %v1163 = vld [vmem:[%s1162] sm:$0xff]
    %v1164 = vld [vmem:[%s1162 + $0x8] sm:$0xff]
    %v1165 = vld [vmem:[%s1162 + $0x10] sm:$0xff]
    %v1166 = vld [vmem:[%s1162 + $0x18] sm:$0xff]
    %v1167 = vld [vmem:[%s1162 + $0x20] sm:$0xff]
    %v1168 = vld [vmem:[%s1162 + $0x28] sm:$0xff]
    %v1169 = vld [vmem:[%s1162 + $0x30] sm:$0xff]
    %v1170 = vld [vmem:[%s1162 + $0x38] sm:$0xff]
    %v1171 = vld [vmem:[%s1162 + $0x40] sm:$0xff]
    %v1172 = vld [vmem:[%s1162 + $0x48] sm:$0xff]
    %v1173 = vld [vmem:[%s1162 + $0x50] sm:$0xff]
    %v1174 = vld [vmem:[%s1162 + $0x58] sm:$0xff]
    %v1175 = vld [vmem:[%s1162 + $0x60] sm:$0xff]
    %v1176 = vld [vmem:[%s1162 + $0x68] sm:$0xff]
    %v1177 = vld [vmem:[%s1162 + $0x70] sm:$0xff]
    %v1179 = vsel %vm308, %v1139, 0
    %v1182 = vsel %vm308, %v1144, 0
    %v1185 = vsel %vm308, %v1149, 0
    %v1188 = vsel %vm308, %v1154, 0
    %v1191 = vsel %vm308, %v1159, 0
    %1193 = vmatprep.subr.mxu0 %v1164
    %1194 = vmatpush1.msra.mxu0 %v1163
    %1195 = vmatprep.subr.mxu0 %v1167
    %1196 = vmatpush1.msra.mxu0 %v1166
    %1197 = vmatprep.subr.mxu0 %v1170
    %1198 = vmatpush1.msra.mxu0 %v1169
    %1199 = vmatprep.subr.mxu0 %v1173
    %1200 = vmatpush1.msra.mxu0 %v1172
    %1201 = vmatprep.subr.mxu0 %v1176
    %1202 = vmatpush1.msra.mxu0 %v1175
    %1203 = vmatprep.subr.mxu0 0.0
    %1204 = vmatpush1.msra.mxu0 0.0
    %1205 = vmatprep.subr.mxu0 0.0
    %1206 = vmatpush1.msra.mxu0 0.0
    %1207 = vmatprep.subr.mxu0 0.0
    %1208 = vmatpush1.msra.mxu0 0.0
    %1209 = vmatprep.subr.mxu0 0.0
    %1210 = vmatpush1.msra.mxu0 0.0
    %1211 = vmatprep.subr.mxu0 0.0
    %1212 = vmatpush1.msra.mxu0 0.0
    %1213 = vmatprep.subr.mxu0 0.0
    %1214 = vmatpush1.msra.mxu0 0.0
    %1215 = vmatprep.subr.mxu0 0.0
    %1216 = vmatpush1.msra.mxu0 0.0
    %1217 = vmatprep.subr.mxu0 0.0
    %1218 = vmatpush1.msra.mxu0 0.0
    %1219 = vmatprep.subr.mxu0 0.0
    %1220 = vmatpush1.msra.mxu0 0.0
    %1221 = vmatprep.subr.mxu0 0.0
    %1222 = vmatpush1.msra.mxu0 0.0
    %1223 = vmatprep.subr.mxu0 0.0
    %1224 = vmatpush1.msra.mxu0 0.0
    %1225 = vmatprep.subr.mxu0 0.0
    %1226 = vmatpush1.msra.mxu0 0.0
    %1227 = vmatprep.subr.mxu0 0.0
    %1228 = vmatpush1.msra.mxu0 0.0
    %1229 = vmatprep.subr.mxu0 0.0
    %1230 = vmatpush1.msra.mxu0 0.0
    %1231 = vmatprep.subr.mxu0 0.0
    %1232 = vmatpush1.msra.mxu0 0.0
    %1233 = vmatprep.subr.mxu0 0.0
    %1234 = vmatpush1.msra.mxu0 0.0
    %1235 = vmatprep.subr.mxu0 0.0
    %1236 = vmatpush1.msra.mxu0 0.0
    %1237 = vmatprep.subr.mxu0 0.0
    %1238 = vmatpush1.msra.mxu0 0.0
    %1239 = vmatprep.subr.mxu0 0.0
    %1240 = vmatpush1.msra.mxu0 0.0
    %1241 = vmatprep.subr.mxu0 0.0
    %1242 = vmatpush1.msra.mxu0 0.0
    %1243 = vmatprep.subr.mxu0 0.0
    %1244 = vmatpush1.msra.mxu0 0.0
    %1245 = vmatprep.subr.mxu0 0.0
    %1246 = vmatpush1.msra.mxu0 0.0
    %1247 = vmatprep.subr.mxu0 0.0
    %1248 = vmatpush1.msra.mxu0 0.0
    %1249 = vmatprep.subr.mxu0 0.0
    %1250 = vmatpush1.msra.mxu0 0.0
    %1251 = vmatprep.subr.mxu0 0.0
    %1252 = vmatpush1.msra.mxu0 0.0
    %1253 = vmatprep.subr.mxu0 0.0
    %1254 = vmatpush1.msra.mxu0 0.0
    %1255 = vmatprep.subr.mxu0 0.0
    %1256 = vmatpush1.msra.mxu0 0.0
    %1257 = vmatprep.mubr.f32.mxu0 0.0
    %1258 = vmatmul.mubr.f32.gmra.mrb[0].mxu0 %v1179
    %v1259 = vpop.f32.mrb[0].mxu0
    %v1260 = vadd.f32 0.0, %v1259
    %v1261 = vpop.f32.mrb[0].mxu0
    %v1262 = vadd.f32 0.0, %v1261
    %1263 = vmatprep.mubr.f32.mxu0 0.0
    %1264 = vmatmul.mubr.f32.gmra.mrb[0].mxu0 %v1182
    %v1265 = vpop.f32.mrb[0].mxu0
    %v1266 = vadd.f32 0.0, %v1265
    %v1267 = vpop.f32.mrb[0].mxu0
    %v1268 = vadd.f32 0.0, %v1267
    %1269 = vmatprep.mubr.f32.mxu0 0.0
    %1270 = vmatmul.mubr.f32.gmra.mrb[0].mxu0 %v1185
    %v1271 = vpop.f32.mrb[0].mxu0
    %v1272 = vadd.f32 0.0, %v1271
    %v1273 = vpop.f32.mrb[0].mxu0
    %v1274 = vadd.f32 0.0, %v1273
    %1275 = vmatprep.mubr.f32.mxu0 0.0
    %1276 = vmatmul.mubr.f32.gmra.mrb[0].mxu0 %v1188
    %v1277 = vpop.f32.mrb[0].mxu0
    %v1278 = vadd.f32 0.0, %v1277
    %v1279 = vpop.f32.mrb[0].mxu0
    %v1280 = vadd.f32 0.0, %v1279
    %1281 = vmatprep.mubr.f32.mxu0 0.0
    %1282 = vmatmul.mubr.f32.gmra.mrb[0].mxu0 %v1191
    %v1283 = vpop.f32.mrb[0].mxu0
    %v1284 = vadd.f32 0.0, %v1283
    %v1285 = vpop.f32.mrb[0].mxu0
    %v1286 = vadd.f32 0.0, %v1285
    %1287 = vdwg.mxu0
    %1288 = vmatprep.subr.mxu0 0.0
    %1289 = vmatpush1.msra.mxu0 %v1165
    %1290 = vmatprep.subr.mxu0 0.0
    %1291 = vmatpush1.msra.mxu0 %v1168
    %1292 = vmatprep.subr.mxu0 0.0
    %1293 = vmatpush1.msra.mxu0 %v1171
    %1294 = vmatprep.subr.mxu0 0.0
    %1295 = vmatpush1.msra.mxu0 %v1174
    %1296 = vmatprep.subr.mxu0 0.0
    %1297 = vmatpush1.msra.mxu0 %v1177
    %1298 = vmatprep.subr.mxu0 0.0
    %1299 = vmatpush1.msra.mxu0 0.0
    %1300 = vmatprep.subr.mxu0 0.0
    %1301 = vmatpush1.msra.mxu0 0.0
    %1302 = vmatprep.subr.mxu0 0.0
    %1303 = vmatpush1.msra.mxu0 0.0
    %1304 = vmatprep.subr.mxu0 0.0
    %1305 = vmatpush1.msra.mxu0 0.0
    %1306 = vmatprep.subr.mxu0 0.0
    %1307 = vmatpush1.msra.mxu0 0.0
    %1308 = vmatprep.subr.mxu0 0.0
    %1309 = vmatpush1.msra.mxu0 0.0
    %1310 = vmatprep.subr.mxu0 0.0
    %1311 = vmatpush1.msra.mxu0 0.0
    %1312 = vmatprep.subr.mxu0 0.0
    %1313 = vmatpush1.msra.mxu0 0.0
    %1314 = vmatprep.subr.mxu0 0.0
    %1315 = vmatpush1.msra.mxu0 0.0
    %1316 = vmatprep.subr.mxu0 0.0
    %1317 = vmatpush1.msra.mxu0 0.0
    %1318 = vmatprep.subr.mxu0 0.0
    %1319 = vmatpush1.msra.mxu0 0.0
    %1320 = vmatprep.subr.mxu0 0.0
    %1321 = vmatpush1.msra.mxu0 0.0
    %1322 = vmatprep.subr.mxu0 0.0
    %1323 = vmatpush1.msra.mxu0 0.0
    %1324 = vmatprep.subr.mxu0 0.0
    %1325 = vmatpush1.msra.mxu0 0.0
    %1326 = vmatprep.subr.mxu0 0.0
    %1327 = vmatpush1.msra.mxu0 0.0
    %1328 = vmatprep.subr.mxu0 0.0
    %1329 = vmatpush1.msra.mxu0 0.0
    %1330 = vmatprep.subr.mxu0 0.0
    %1331 = vmatpush1.msra.mxu0 0.0
    %1332 = vmatprep.subr.mxu0 0.0
    %1333 = vmatpush1.msra.mxu0 0.0
    %1334 = vmatprep.subr.mxu0 0.0
    %1335 = vmatpush1.msra.mxu0 0.0
    %1336 = vmatprep.subr.mxu0 0.0
    %1337 = vmatpush1.msra.mxu0 0.0
    %1338 = vmatprep.subr.mxu0 0.0
    %1339 = vmatpush1.msra.mxu0 0.0
    %1340 = vmatprep.subr.mxu0 0.0
    %1341 = vmatpush1.msra.mxu0 0.0
    %1342 = vmatprep.subr.mxu0 0.0
    %1343 = vmatpush1.msra.mxu0 0.0
    %1344 = vmatprep.subr.mxu0 0.0
    %1345 = vmatpush1.msra.mxu0 0.0
    %1346 = vmatprep.subr.mxu0 0.0
    %1347 = vmatpush1.msra.mxu0 0.0
    %1348 = vmatprep.subr.mxu0 0.0
    %1349 = vmatpush1.msra.mxu0 0.0
    %1350 = vmatprep.subr.mxu0 0.0
    %1351 = vmatpush1.msra.mxu0 0.0
    %1352 = vmatprep.mubr.f32.mxu0 0.0
    %1353 = vmatmul.mubr.f32.gmra.mrb[0].mxu0 %v1179
    %v1354 = vpop.f32.mrb[0].mxu0
    %v1355 = vadd.f32 0.0, %v1354
    %v1356 = vpop.f32.mrb[0].mxu0
    %1357 = vmatprep.mubr.f32.mxu0 0.0
    %1358 = vmatmul.mubr.f32.gmra.mrb[0].mxu0 %v1182
    %v1359 = vpop.f32.mrb[0].mxu0
    %v1360 = vadd.f32 0.0, %v1359
    %v1361 = vpop.f32.mrb[0].mxu0
    %1362 = vmatprep.mubr.f32.mxu0 0.0
    %1363 = vmatmul.mubr.f32.gmra.mrb[0].mxu0 %v1185
    %v1364 = vpop.f32.mrb[0].mxu0
    %v1365 = vadd.f32 0.0, %v1364
    %v1366 = vpop.f32.mrb[0].mxu0
    %1367 = vmatprep.mubr.f32.mxu0 0.0
    %1368 = vmatmul.mubr.f32.gmra.mrb[0].mxu0 %v1188
    %v1369 = vpop.f32.mrb[0].mxu0
    %v1370 = vadd.f32 0.0, %v1369
    %v1371 = vpop.f32.mrb[0].mxu0
    %1372 = vmatprep.mubr.f32.mxu0 0.0
    %1373 = vmatmul.mubr.f32.gmra.mrb[0].mxu0 %v1191
    %v1374 = vpop.f32.mrb[0].mxu0
    %v1375 = vadd.f32 0.0, %v1374
    %v1376 = vpop.f32.mrb[0].mxu0
    %1377 = vdwg.mxu0
    %v1378 = vadd.f32 %v1036, %v1260
    %v1379 = vadd.f32 %v1037, %v1262
    %v1380 = vadd.f32 %v1038, %v1355
    %v1381 = vadd.f32 %v1039, %v1266
    %v1382 = vadd.f32 %v1040, %v1268
    %v1383 = vadd.f32 %v1041, %v1360
    %v1384 = vadd.f32 %v1042, %v1272
    %v1385 = vadd.f32 %v1043, %v1274
    %v1386 = vadd.f32 %v1044, %v1365
    %v1387 = vadd.f32 %v1045, %v1278
    %v1388 = vadd.f32 %v1046, %v1280
    %v1389 = vadd.f32 %v1047, %v1370
    %v1390 = vadd.f32 %v1048, %v1284
    %v1391 = vadd.f32 %v1049, %v1286
    %v1392 = vadd.f32 %v1050, %v1375
    %s1393 = scalar_lea.vmem %s2, 160
    %v1394 = vld [vmem:[%s1393] sm:$0xff]
    %v1395 = vld [vmem:[%s1393 + $0x8] sm:$0xff]
    %v1396 = vld [vmem:[%s1393 + $0x10] sm:$0xff]
    %v1397 = vld [vmem:[%s1393 + $0x18] sm:$0xff]
    %v1398 = vld [vmem:[%s1393 + $0x20] sm:$0xf]
    %v1400 = vsel %vm60, %v1394, 0
    %v1403 = vsel %vm60, %v1395, 0
    %v1406 = vsel %vm60, %v1396, 0
    %v1409 = vsel %vm60, %v1397, 0
    %v1412 = vsel %vm60, %v1398, 0
    %1414 = vmatprep.subr.mxu0 0.0
    %1415 = vmatpush1.msra.mxu0 %v45
    %1416 = vmatprep.subr.mxu0 0.0
    %1417 = vmatpush1.msra.mxu0 %v46
    %1418 = vmatprep.subr.mxu0 0.0
    %1419 = vmatpush1.msra.mxu0 %v47
    %1420 = vmatprep.subr.mxu0 0.0
    %1421 = vmatpush1.msra.mxu0 %v48
    %1422 = vmatprep.subr.mxu0 0.0
    %1423 = vmatpush1.msra.mxu0 %v49
    %1424 = vmatprep.subr.mxu0 0.0
    %1425 = vmatpush1.msra.mxu0 %v50
    %1426 = vmatprep.subr.mxu0 0.0
    %1427 = vmatpush1.msra.mxu0 %v51
    %1428 = vmatprep.subr.mxu0 0.0
    %1429 = vmatpush1.msra.mxu0 %v52
    %1430 = vmatprep.subr.mxu0 0.0
    %1431 = vmatpush1.msra.mxu0 %v53
    %1432 = vmatprep.subr.mxu0 0.0
    %1433 = vmatpush1.msra.mxu0 %v54
    %1434 = vmatprep.subr.mxu0 0.0
    %1435 = vmatpush1.msra.mxu0 0.0
    %1436 = vmatprep.subr.mxu0 0.0
    %1437 = vmatpush1.msra.mxu0 0.0
    %1438 = vmatprep.subr.mxu0 0.0
    %1439 = vmatpush1.msra.mxu0 0.0
    %1440 = vmatprep.subr.mxu0 0.0
    %1441 = vmatpush1.msra.mxu0 0.0
    %1442 = vmatprep.subr.mxu0 0.0
    %1443 = vmatpush1.msra.mxu0 0.0
    %1444 = vmatprep.subr.mxu0 0.0
    %1445 = vmatpush1.msra.mxu0 0.0
    %1446 = vmatprep.subr.mxu0 0.0
    %1447 = vmatpush1.msra.mxu0 0.0
    %1448 = vmatprep.subr.mxu0 0.0
    %1449 = vmatpush1.msra.mxu0 0.0
    %1450 = vmatprep.subr.mxu0 0.0
    %1451 = vmatpush1.msra.mxu0 0.0
    %1452 = vmatprep.subr.mxu0 0.0
    %1453 = vmatpush1.msra.mxu0 0.0
    %1454 = vmatprep.subr.mxu0 0.0
    %1455 = vmatpush1.msra.mxu0 0.0
    %1456 = vmatprep.subr.mxu0 0.0
    %1457 = vmatpush1.msra.mxu0 0.0
    %1458 = vmatprep.subr.mxu0 0.0
    %1459 = vmatpush1.msra.mxu0 0.0
    %1460 = vmatprep.subr.mxu0 0.0
    %1461 = vmatpush1.msra.mxu0 0.0
    %1462 = vmatprep.subr.mxu0 0.0
    %1463 = vmatpush1.msra.mxu0 0.0
    %1464 = vmatprep.subr.mxu0 0.0
    %1465 = vmatpush1.msra.mxu0 0.0
    %1466 = vmatprep.subr.mxu0 0.0
    %1467 = vmatpush1.msra.mxu0 0.0
    %1468 = vmatprep.subr.mxu0 0.0
    %1469 = vmatpush1.msra.mxu0 0.0
    %1470 = vmatprep.subr.mxu0 0.0
    %1471 = vmatpush1.msra.mxu0 0.0
    %1472 = vmatprep.subr.mxu0 0.0
    %1473 = vmatpush1.msra.mxu0 0.0
    %1474 = vmatprep.subr.mxu0 0.0
    %1475 = vmatpush1.msra.mxu0 0.0
    %1476 = vmatprep.subr.mxu0 0.0
    %1477 = vmatpush1.msra.mxu0 0.0
    %1478 = vmatprep.mubr.f32.mxu0 0.0
    %1479 = vmatmul.mubr.f32.gmra.mrb[0].mxu0 %v1400
    %v1480 = vpop.f32.mrb[0].mxu0
    %v1481 = vadd.f32 0.0, %v1480
    %v1482 = vpop.f32.mrb[0].mxu0
    %1483 = vmatprep.mubr.f32.mxu0 0.0
    %1484 = vmatmul.mubr.f32.gmra.mrb[0].mxu0 %v1403
    %v1485 = vpop.f32.mrb[0].mxu0
    %v1486 = vadd.f32 0.0, %v1485
    %v1487 = vpop.f32.mrb[0].mxu0
    %1488 = vmatprep.mubr.f32.mxu0 0.0
    %1489 = vmatmul.mubr.f32.gmra.mrb[0].mxu0 %v1406
    %v1490 = vpop.f32.mrb[0].mxu0
    %v1491 = vadd.f32 0.0, %v1490
    %v1492 = vpop.f32.mrb[0].mxu0
    %1493 = vmatprep.mubr.f32.mxu0 0.0
    %1494 = vmatmul.mubr.f32.gmra.mrb[0].mxu0 %v1409
    %v1495 = vpop.f32.mrb[0].mxu0
    %v1496 = vadd.f32 0.0, %v1495
    %v1497 = vpop.f32.mrb[0].mxu0
    %1498 = vmatprep.mubr.f32.mxu0 0.0
    %1499 = vmatmul.mubr.f32.gmra.mrb[0].mxu0 %v1412
    %v1500 = vpop.f32.mrb[0].mxu0
    %v1501 = vadd.f32 0.0, %v1500
    %v1502 = vpop.f32.mrb[0].mxu0
    %1503 = vdwg.mxu0
    %s1504 = scalar_lea.vmem %s1, 480
    %v1505 = vld [vmem:[%s1504] sm:$0xff]
    %v1506 = vld [vmem:[%s1504 + $0x8] sm:$0xff]
    %v1507 = vld [vmem:[%s1504 + $0x10] sm:$0xff]
    %v1508 = vld [vmem:[%s1504 + $0x18] sm:$0xff]
    %v1509 = vld [vmem:[%s1504 + $0x20] sm:$0xff]
    %v1510 = vld [vmem:[%s1504 + $0x28] sm:$0xff]
    %v1511 = vld [vmem:[%s1504 + $0x30] sm:$0xff]
    %v1512 = vld [vmem:[%s1504 + $0x38] sm:$0xff]
    %v1513 = vld [vmem:[%s1504 + $0x40] sm:$0xff]
    %v1514 = vld [vmem:[%s1504 + $0x48] sm:$0xff]
    %v1515 = vld [vmem:[%s1504 + $0x50] sm:$0xff]
    %v1516 = vld [vmem:[%s1504 + $0x58] sm:$0xff]
    %v1517 = vld [vmem:[%s1504 + $0x60] sm:$0xff]
    %v1518 = vld [vmem:[%s1504 + $0x68] sm:$0xff]
    %v1519 = vld [vmem:[%s1504 + $0x70] sm:$0xff]
    %v1521 = vsel %vm308, %v1481, 0
    %v1524 = vsel %vm308, %v1486, 0
    %v1527 = vsel %vm308, %v1491, 0
    %v1530 = vsel %vm308, %v1496, 0
    %v1533 = vsel %vm308, %v1501, 0
    %1535 = vmatprep.subr.mxu0 %v1506
    %1536 = vmatpush1.msra.mxu0 %v1505
    %1537 = vmatprep.subr.mxu0 %v1509
    %1538 = vmatpush1.msra.mxu0 %v1508
    %1539 = vmatprep.subr.mxu0 %v1512
    %1540 = vmatpush1.msra.mxu0 %v1511
    %1541 = vmatprep.subr.mxu0 %v1515
    %1542 = vmatpush1.msra.mxu0 %v1514
    %1543 = vmatprep.subr.mxu0 %v1518
    %1544 = vmatpush1.msra.mxu0 %v1517
    %1545 = vmatprep.subr.mxu0 0.0
    %1546 = vmatpush1.msra.mxu0 0.0
    %1547 = vmatprep.subr.mxu0 0.0
    %1548 = vmatpush1.msra.mxu0 0.0
    %1549 = vmatprep.subr.mxu0 0.0
    %1550 = vmatpush1.msra.mxu0 0.0
    %1551 = vmatprep.subr.mxu0 0.0
    %1552 = vmatpush1.msra.mxu0 0.0
    %1553 = vmatprep.subr.mxu0 0.0
    %1554 = vmatpush1.msra.mxu0 0.0
    %1555 = vmatprep.subr.mxu0 0.0
    %1556 = vmatpush1.msra.mxu0 0.0
    %1557 = vmatprep.subr.mxu0 0.0
    %1558 = vmatpush1.msra.mxu0 0.0
    %1559 = vmatprep.subr.mxu0 0.0
    %1560 = vmatpush1.msra.mxu0 0.0
    %1561 = vmatprep.subr.mxu0 0.0
    %1562 = vmatpush1.msra.mxu0 0.0
    %1563 = vmatprep.subr.mxu0 0.0
    %1564 = vmatpush1.msra.mxu0 0.0
    %1565 = vmatprep.subr.mxu0 0.0
    %1566 = vmatpush1.msra.mxu0 0.0
    %1567 = vmatprep.subr.mxu0 0.0
    %1568 = vmatpush1.msra.mxu0 0.0
    %1569 = vmatprep.subr.mxu0 0.0
    %1570 = vmatpush1.msra.mxu0 0.0
    %1571 = vmatprep.subr.mxu0 0.0
    %1572 = vmatpush1.msra.mxu0 0.0
    %1573 = vmatprep.subr.mxu0 0.0
    %1574 = vmatpush1.msra.mxu0 0.0
    %1575 = vmatprep.subr.mxu0 0.0
    %1576 = vmatpush1.msra.mxu0 0.0
    %1577 = vmatprep.subr.mxu0 0.0
    %1578 = vmatpush1.msra.mxu0 0.0
    %1579 = vmatprep.subr.mxu0 0.0
    %1580 = vmatpush1.msra.mxu0 0.0
    %1581 = vmatprep.subr.mxu0 0.0
    %1582 = vmatpush1.msra.mxu0 0.0
    %1583 = vmatprep.subr.mxu0 0.0
    %1584 = vmatpush1.msra.mxu0 0.0
    %1585 = vmatprep.subr.mxu0 0.0
    %1586 = vmatpush1.msra.mxu0 0.0
    %1587 = vmatprep.subr.mxu0 0.0
    %1588 = vmatpush1.msra.mxu0 0.0
    %1589 = vmatprep.subr.mxu0 0.0
    %1590 = vmatpush1.msra.mxu0 0.0
    %1591 = vmatprep.subr.mxu0 0.0
    %1592 = vmatpush1.msra.mxu0 0.0
    %1593 = vmatprep.subr.mxu0 0.0
    %1594 = vmatpush1.msra.mxu0 0.0
    %1595 = vmatprep.subr.mxu0 0.0
    %1596 = vmatpush1.msra.mxu0 0.0
    %1597 = vmatprep.subr.mxu0 0.0
    %1598 = vmatpush1.msra.mxu0 0.0
    %1599 = vmatprep.mubr.f32.mxu0 0.0
    %1600 = vmatmul.mubr.f32.gmra.mrb[0].mxu0 %v1521
    %v1601 = vpop.f32.mrb[0].mxu0
    %v1602 = vadd.f32 0.0, %v1601
    %v1603 = vpop.f32.mrb[0].mxu0
    %v1604 = vadd.f32 0.0, %v1603
    %1605 = vmatprep.mubr.f32.mxu0 0.0
    %1606 = vmatmul.mubr.f32.gmra.mrb[0].mxu0 %v1524
    %v1607 = vpop.f32.mrb[0].mxu0
    %v1608 = vadd.f32 0.0, %v1607
    %v1609 = vpop.f32.mrb[0].mxu0
    %v1610 = vadd.f32 0.0, %v1609
    %1611 = vmatprep.mubr.f32.mxu0 0.0
    %1612 = vmatmul.mubr.f32.gmra.mrb[0].mxu0 %v1527
    %v1613 = vpop.f32.mrb[0].mxu0
    %v1614 = vadd.f32 0.0, %v1613
    %v1615 = vpop.f32.mrb[0].mxu0
    %v1616 = vadd.f32 0.0, %v1615
    %1617 = vmatprep.mubr.f32.mxu0 0.0
    %1618 = vmatmul.mubr.f32.gmra.mrb[0].mxu0 %v1530
    %v1619 = vpop.f32.mrb[0].mxu0
    %v1620 = vadd.f32 0.0, %v1619
    %v1621 = vpop.f32.mrb[0].mxu0
    %v1622 = vadd.f32 0.0, %v1621
    %1623 = vmatprep.mubr.f32.mxu0 0.0
    %1624 = vmatmul.mubr.f32.gmra.mrb[0].mxu0 %v1533
    %v1625 = vpop.f32.mrb[0].mxu0
    %v1626 = vadd.f32 0.0, %v1625
    %v1627 = vpop.f32.mrb[0].mxu0
    %v1628 = vadd.f32 0.0, %v1627
    %1629 = vdwg.mxu0
    %1630 = vmatprep.subr.mxu0 0.0
    %1631 = vmatpush1.msra.mxu0 %v1507
    %1632 = vmatprep.subr.mxu0 0.0
    %1633 = vmatpush1.msra.mxu0 %v1510
    %1634 = vmatprep.subr.mxu0 0.0
    %1635 = vmatpush1.msra.mxu0 %v1513
    %1636 = vmatprep.subr.mxu0 0.0
    %1637 = vmatpush1.msra.mxu0 %v1516
    %1638 = vmatprep.subr.mxu0 0.0
    %1639 = vmatpush1.msra.mxu0 %v1519
    %1640 = vmatprep.subr.mxu0 0.0
    %1641 = vmatpush1.msra.mxu0 0.0
    %1642 = vmatprep.subr.mxu0 0.0
    %1643 = vmatpush1.msra.mxu0 0.0
    %1644 = vmatprep.subr.mxu0 0.0
    %1645 = vmatpush1.msra.mxu0 0.0
    %1646 = vmatprep.subr.mxu0 0.0
    %1647 = vmatpush1.msra.mxu0 0.0
    %1648 = vmatprep.subr.mxu0 0.0
    %1649 = vmatpush1.msra.mxu0 0.0
    %1650 = vmatprep.subr.mxu0 0.0
    %1651 = vmatpush1.msra.mxu0 0.0
    %1652 = vmatprep.subr.mxu0 0.0
    %1653 = vmatpush1.msra.mxu0 0.0
    %1654 = vmatprep.subr.mxu0 0.0
    %1655 = vmatpush1.msra.mxu0 0.0
    %1656 = vmatprep.subr.mxu0 0.0
    %1657 = vmatpush1.msra.mxu0 0.0
    %1658 = vmatprep.subr.mxu0 0.0
    %1659 = vmatpush1.msra.mxu0 0.0
    %1660 = vmatprep.subr.mxu0 0.0
    %1661 = vmatpush1.msra.mxu0 0.0
    %1662 = vmatprep.subr.mxu0 0.0
    %1663 = vmatpush1.msra.mxu0 0.0
    %1664 = vmatprep.subr.mxu0 0.0
    %1665 = vmatpush1.msra.mxu0 0.0
    %1666 = vmatprep.subr.mxu0 0.0
    %1667 = vmatpush1.msra.mxu0 0.0
    %1668 = vmatprep.subr.mxu0 0.0
    %1669 = vmatpush1.msra.mxu0 0.0
    %1670 = vmatprep.subr.mxu0 0.0
    %1671 = vmatpush1.msra.mxu0 0.0
    %1672 = vmatprep.subr.mxu0 0.0
    %1673 = vmatpush1.msra.mxu0 0.0
    %1674 = vmatprep.subr.mxu0 0.0
    %1675 = vmatpush1.msra.mxu0 0.0
    %1676 = vmatprep.subr.mxu0 0.0
    %1677 = vmatpush1.msra.mxu0 0.0
    %1678 = vmatprep.subr.mxu0 0.0
    %1679 = vmatpush1.msra.mxu0 0.0
    %1680 = vmatprep.subr.mxu0 0.0
    %1681 = vmatpush1.msra.mxu0 0.0
    %1682 = vmatprep.subr.mxu0 0.0
    %1683 = vmatpush1.msra.mxu0 0.0
    %1684 = vmatprep.subr.mxu0 0.0
    %1685 = vmatpush1.msra.mxu0 0.0
    %1686 = vmatprep.subr.mxu0 0.0
    %1687 = vmatpush1.msra.mxu0 0.0
    %1688 = vmatprep.subr.mxu0 0.0
    %1689 = vmatpush1.msra.mxu0 0.0
    %1690 = vmatprep.subr.mxu0 0.0
    %1691 = vmatpush1.msra.mxu0 0.0
    %1692 = vmatprep.subr.mxu0 0.0
    %1693 = vmatpush1.msra.mxu0 0.0
    %1694 = vmatprep.mubr.f32.mxu0 0.0
    %1695 = vmatmul.mubr.f32.gmra.mrb[0].mxu0 %v1521
    %v1696 = vpop.f32.mrb[0].mxu0
    %v1697 = vadd.f32 0.0, %v1696
    %v1698 = vpop.f32.mrb[0].mxu0
    %1699 = vmatprep.mubr.f32.mxu0 0.0
    %1700 = vmatmul.mubr.f32.gmra.mrb[0].mxu0 %v1524
    %v1701 = vpop.f32.mrb[0].mxu0
    %v1702 = vadd.f32 0.0, %v1701
    %v1703 = vpop.f32.mrb[0].mxu0
    %1704 = vmatprep.mubr.f32.mxu0 0.0
    %1705 = vmatmul.mubr.f32.gmra.mrb[0].mxu0 %v1527
    %v1706 = vpop.f32.mrb[0].mxu0
    %v1707 = vadd.f32 0.0, %v1706
    %v1708 = vpop.f32.mrb[0].mxu0
    %1709 = vmatprep.mubr.f32.mxu0 0.0
    %1710 = vmatmul.mubr.f32.gmra.mrb[0].mxu0 %v1530
    %v1711 = vpop.f32.mrb[0].mxu0
    %v1712 = vadd.f32 0.0, %v1711
    %v1713 = vpop.f32.mrb[0].mxu0
    %1714 = vmatprep.mubr.f32.mxu0 0.0
    %1715 = vmatmul.mubr.f32.gmra.mrb[0].mxu0 %v1533
    %v1716 = vpop.f32.mrb[0].mxu0
    %v1717 = vadd.f32 0.0, %v1716
    %v1718 = vpop.f32.mrb[0].mxu0
    %1719 = vdwg.mxu0
    %v1720 = vadd.f32 %v1378, %v1602
    %v1721 = vadd.f32 %v1379, %v1604
    %v1722 = vadd.f32 %v1380, %v1697
    %v1723 = vadd.f32 %v1381, %v1608
    %v1724 = vadd.f32 %v1382, %v1610
    %v1725 = vadd.f32 %v1383, %v1702
    %v1726 = vadd.f32 %v1384, %v1614
    %v1727 = vadd.f32 %v1385, %v1616
    %v1728 = vadd.f32 %v1386, %v1707
    %v1729 = vadd.f32 %v1387, %v1620
    %v1730 = vadd.f32 %v1388, %v1622
    %v1731 = vadd.f32 %v1389, %v1712
    %v1732 = vadd.f32 %v1390, %v1626
    %v1733 = vadd.f32 %v1391, %v1628
    %v1734 = vadd.f32 %v1392, %v1717
    %v1735 = vld [vmem:[%s3] sm:$0x7]
    %v1737 = vlaneseq
    %v1738 = vshrl.u32 %v1737, 7
    %v1739 = vsub.s32 0, %v1738
    %v1740 = vrot.slane %v1735, %v1739
    %v1741 = vlaneseq
    %v1742 = vshrl.u32 %v1741, 7
    %v1743 = vsub.s32 1, %v1742
    %v1744 = vrot.slane %v1735, %v1743
    %v1745 = vlaneseq
    %v1746 = vshrl.u32 %v1745, 7
    %v1747 = vsub.s32 2, %v1746
    %v1748 = vrot.slane %v1735, %v1747
    %v1752 = vadd.f32 %v1720, %v1740
    %v1753 = vadd.f32 %v1721, %v1744
    %v1754 = vadd.f32 %v1722, %v1748
    %v1755 = vadd.f32 %v1723, %v1740
    %v1756 = vadd.f32 %v1724, %v1744
    %v1757 = vadd.f32 %v1725, %v1748
    %v1758 = vadd.f32 %v1726, %v1740
    %v1759 = vadd.f32 %v1727, %v1744
    %v1760 = vadd.f32 %v1728, %v1748
    %v1761 = vadd.f32 %v1729, %v1740
    %v1762 = vadd.f32 %v1730, %v1744
    %v1763 = vadd.f32 %v1731, %v1748
    %v1764 = vadd.f32 %v1732, %v1740
    %v1765 = vadd.f32 %v1733, %v1744
    %v1766 = vadd.f32 %v1734, %v1748
    %v1767 = vmax.f32 %v1752, 0.0
    %v1768 = vmax.f32 %v1753, 0.0
    %v1769 = vmax.f32 %v1754, 0.0
    %v1770 = vmax.f32 %v1755, 0.0
    %v1771 = vmax.f32 %v1756, 0.0
    %v1772 = vmax.f32 %v1757, 0.0
    %v1773 = vmax.f32 %v1758, 0.0
    %v1774 = vmax.f32 %v1759, 0.0
    %v1775 = vmax.f32 %v1760, 0.0
    %v1776 = vmax.f32 %v1761, 0.0
    %v1777 = vmax.f32 %v1762, 0.0
    %v1778 = vmax.f32 %v1763, 0.0
    %v1779 = vmax.f32 %v1764, 0.0
    %v1780 = vmax.f32 %v1765, 0.0
    %v1781 = vmax.f32 %v1766, 0.0
    %v1782 = vld [vmem:[%s5] sm:$0xff]
    %v1783 = vld [vmem:[%s5 + $0x8] sm:$0x3f]
    %vm1784 = vcmask 293888
    %v1786 = vsel %vm1784, %v1782, 0
    %v1789 = vsel %vm1784, %v1783, 0
    %vm1791 = vcmask 1043456
    %v1793 = vsel %vm1791, %v1779, 0
    %v1796 = vsel %vm1791, %v1780, 0
    %v1799 = vsel %vm1791, %v1781, 0
    %1801 = vmatprep.subr.mxu0 %v1768
    %1802 = vmatpush1.msra.mxu0 %v1767
    %1803 = vmatprep.subr.mxu0 %v1771
    %1804 = vmatpush1.msra.mxu0 %v1770
    %1805 = vmatprep.subr.mxu0 %v1774
    %1806 = vmatpush1.msra.mxu0 %v1773
    %1807 = vmatprep.subr.mxu0 %v1777
    %1808 = vmatpush1.msra.mxu0 %v1776
    %1809 = vmatprep.subr.mxu0 %v1796
    %1810 = vmatpush1.msra.mxu0 %v1793
    %1811 = vmatprep.subr.mxu0 0.0
    %1812 = vmatpush1.msra.mxu0 0.0
    %1813 = vmatprep.subr.mxu0 0.0
    %1814 = vmatpush1.msra.mxu0 0.0
    %1815 = vmatprep.subr.mxu0 0.0
    %1816 = vmatpush1.msra.mxu0 0.0
    %1817 = vmatprep.subr.mxu0 0.0
    %1818 = vmatpush1.msra.mxu0 0.0
    %1819 = vmatprep.subr.mxu0 0.0
    %1820 = vmatpush1.msra.mxu0 0.0
    %1821 = vmatprep.subr.mxu0 0.0
    %1822 = vmatpush1.msra.mxu0 0.0
    %1823 = vmatprep.subr.mxu0 0.0
    %1824 = vmatpush1.msra.mxu0 0.0
    %1825 = vmatprep.subr.mxu0 0.0
    %1826 = vmatpush1.msra.mxu0 0.0
    %1827 = vmatprep.subr.mxu0 0.0
    %1828 = vmatpush1.msra.mxu0 0.0
    %1829 = vmatprep.subr.mxu0 0.0
    %1830 = vmatpush1.msra.mxu0 0.0
    %1831 = vmatprep.subr.mxu0 0.0
    %1832 = vmatpush1.msra.mxu0 0.0
    %1833 = vmatprep.subr.mxu0 0.0
    %1834 = vmatpush1.msra.mxu0 0.0
    %1835 = vmatprep.subr.mxu0 0.0
    %1836 = vmatpush1.msra.mxu0 0.0
    %1837 = vmatprep.subr.mxu0 0.0
    %1838 = vmatpush1.msra.mxu0 0.0
    %1839 = vmatprep.subr.mxu0 0.0
    %1840 = vmatpush1.msra.mxu0 0.0
    %1841 = vmatprep.subr.mxu0 0.0
    %1842 = vmatpush1.msra.mxu0 0.0
    %1843 = vmatprep.subr.mxu0 0.0
    %1844 = vmatpush1.msra.mxu0 0.0
    %1845 = vmatprep.subr.mxu0 0.0
    %1846 = vmatpush1.msra.mxu0 0.0
    %1847 = vmatprep.subr.mxu0 0.0
    %1848 = vmatpush1.msra.mxu0 0.0
    %1849 = vmatprep.subr.mxu0 0.0
    %1850 = vmatpush1.msra.mxu0 0.0
    %1851 = vmatprep.subr.mxu0 0.0
    %1852 = vmatpush1.msra.mxu0 0.0
    %1853 = vmatprep.subr.mxu0 0.0
    %1854 = vmatpush1.msra.mxu0 0.0
    %1855 = vmatprep.subr.mxu0 0.0
    %1856 = vmatpush1.msra.mxu0 0.0
    %1857 = vmatprep.subr.mxu0 0.0
    %1858 = vmatpush1.msra.mxu0 0.0
    %1859 = vmatprep.subr.mxu0 0.0
    %1860 = vmatpush1.msra.mxu0 0.0
    %1861 = vmatprep.subr.mxu0 0.0
    %1862 = vmatpush1.msra.mxu0 0.0
    %1863 = vmatprep.subr.mxu0 0.0
    %1864 = vmatpush1.msra.mxu0 0.0
    %1865 = vmatprep.mubr.f32.mxu0 0.0
    %1866 = vmatmul.mubr.f32.gmra.mrb[0].mxu0 %v1786
    %v1867 = vpop.f32.mrb[0].mxu0
    %v1868 = vadd.f32 0.0, %v1867
    %v1869 = vpop.f32.mrb[0].mxu0
    %v1870 = vadd.f32 0.0, %v1869
    %1871 = vmatprep.mubr.f32.mxu0 0.0
    %1872 = vmatmul.mubr.f32.gmra.mrb[0].mxu0 %v1789
    %v1873 = vpop.f32.mrb[0].mxu0
    %v1874 = vadd.f32 0.0, %v1873
    %v1875 = vpop.f32.mrb[0].mxu0
    %v1876 = vadd.f32 0.0, %v1875
    %1877 = vdwg.mxu0
    %1878 = vmatprep.subr.mxu0 0.0
    %1879 = vmatpush1.msra.mxu0 %v1769
    %1880 = vmatprep.subr.mxu0 0.0
    %1881 = vmatpush1.msra.mxu0 %v1772
    %1882 = vmatprep.subr.mxu0 0.0
    %1883 = vmatpush1.msra.mxu0 %v1775
    %1884 = vmatprep.subr.mxu0 0.0
    %1885 = vmatpush1.msra.mxu0 %v1778
    %1886 = vmatprep.subr.mxu0 0.0
    %1887 = vmatpush1.msra.mxu0 %v1799
    %1888 = vmatprep.subr.mxu0 0.0
    %1889 = vmatpush1.msra.mxu0 0.0
    %1890 = vmatprep.subr.mxu0 0.0
    %1891 = vmatpush1.msra.mxu0 0.0
    %1892 = vmatprep.subr.mxu0 0.0
    %1893 = vmatpush1.msra.mxu0 0.0
    %1894 = vmatprep.subr.mxu0 0.0
    %1895 = vmatpush1.msra.mxu0 0.0
    %1896 = vmatprep.subr.mxu0 0.0
    %1897 = vmatpush1.msra.mxu0 0.0
    %1898 = vmatprep.subr.mxu0 0.0
    %1899 = vmatpush1.msra.mxu0 0.0
    %1900 = vmatprep.subr.mxu0 0.0
    %1901 = vmatpush1.msra.mxu0 0.0
    %1902 = vmatprep.subr.mxu0 0.0
    %1903 = vmatpush1.msra.mxu0 0.0
    %1904 = vmatprep.subr.mxu0 0.0
    %1905 = vmatpush1.msra.mxu0 0.0
    %1906 = vmatprep.subr.mxu0 0.0
    %1907 = vmatpush1.msra.mxu0 0.0
    %1908 = vmatprep.subr.mxu0 0.0
    %1909 = vmatpush1.msra.mxu0 0.0
    %1910 = vmatprep.subr.mxu0 0.0
    %1911 = vmatpush1.msra.mxu0 0.0
    %1912 = vmatprep.subr.mxu0 0.0
    %1913 = vmatpush1.msra.mxu0 0.0
    %1914 = vmatprep.subr.mxu0 0.0
    %1915 = vmatpush1.msra.mxu0 0.0
    %1916 = vmatprep.subr.mxu0 0.0
    %1917 = vmatpush1.msra.mxu0 0.0
    %1918 = vmatprep.subr.mxu0 0.0
    %1919 = vmatpush1.msra.mxu0 0.0
    %1920 = vmatprep.subr.mxu0 0.0
    %1921 = vmatpush1.msra.mxu0 0.0
    %1922 = vmatprep.subr.mxu0 0.0
    %1923 = vmatpush1.msra.mxu0 0.0
    %1924 = vmatprep.subr.mxu0 0.0
    %1925 = vmatpush1.msra.mxu0 0.0
    %1926 = vmatprep.subr.mxu0 0.0
    %1927 = vmatpush1.msra.mxu0 0.0
    %1928 = vmatprep.subr.mxu0 0.0
    %1929 = vmatpush1.msra.mxu0 0.0
    %1930 = vmatprep.subr.mxu0 0.0
    %1931 = vmatpush1.msra.mxu0 0.0
    %1932 = vmatprep.subr.mxu0 0.0
    %1933 = vmatpush1.msra.mxu0 0.0
    %1934 = vmatprep.subr.mxu0 0.0
    %1935 = vmatpush1.msra.mxu0 0.0
    %1936 = vmatprep.subr.mxu0 0.0
    %1937 = vmatpush1.msra.mxu0 0.0
    %1938 = vmatprep.subr.mxu0 0.0
    %1939 = vmatpush1.msra.mxu0 0.0
    %1940 = vmatprep.subr.mxu0 0.0
    %1941 = vmatpush1.msra.mxu0 0.0
    %1942 = vmatprep.mubr.f32.mxu0 0.0
    %1943 = vmatmul.mubr.f32.gmra.mrb[0].mxu0 %v1786
    %v1944 = vpop.f32.mrb[0].mxu0
    %v1945 = vadd.f32 0.0, %v1944
    %v1946 = vpop.f32.mrb[0].mxu0
    %1947 = vmatprep.mubr.f32.mxu0 0.0
    %1948 = vmatmul.mubr.f32.gmra.mrb[0].mxu0 %v1789
    %v1949 = vpop.f32.mrb[0].mxu0
    %v1950 = vadd.f32 0.0, %v1949
    %v1951 = vpop.f32.mrb[0].mxu0
    %1952 = vdwg.mxu0
    %v1953 = vld [vmem:[%s4] sm:$0xff]
    %v1954 = vld [vmem:[%s4 + $0x8] sm:$0xff]
    %v1955 = vld [vmem:[%s4 + $0x10] sm:$0xff]
    %v1956 = vld [vmem:[%s4 + $0x18] sm:$0xff]
    %v1957 = vld [vmem:[%s4 + $0x20] sm:$0xff]
    %v1958 = vld [vmem:[%s4 + $0x28] sm:$0xff]
    %v1959 = vld [vmem:[%s4 + $0x30] sm:$0xff]
    %v1960 = vld [vmem:[%s4 + $0x38] sm:$0xff]
    %v1961 = vld [vmem:[%s4 + $0x40] sm:$0xff]
    %v1962 = vld [vmem:[%s4 + $0x48] sm:$0xff]
    %v1963 = vld [vmem:[%s4 + $0x50] sm:$0xff]
    %v1964 = vld [vmem:[%s4 + $0x58] sm:$0xff]
    %v1965 = vld [vmem:[%s4 + $0x60] sm:$0xff]
    %v1966 = vld [vmem:[%s4 + $0x68] sm:$0xff]
    %v1967 = vld [vmem:[%s4 + $0x70] sm:$0xff]
    %v1968 = vld [vmem:[%s4 + $0x78] sm:$0xff]
    %v1969 = vld [vmem:[%s4 + $0x80] sm:$0xff]
    %v1970 = vld [vmem:[%s4 + $0x88] sm:$0xff]
    %v1971 = vld [vmem:[%s4 + $0x90] sm:$0xff]
    %v1972 = vld [vmem:[%s4 + $0x98] sm:$0xff]
    %v1973 = vld [vmem:[%s4 + $0xa0] sm:$0xff]
    %v1974 = vld [vmem:[%s4 + $0xa8] sm:$0xff]
    %v1975 = vld [vmem:[%s4 + $0xb0] sm:$0xff]
    %v1976 = vld [vmem:[%s4 + $0xb8] sm:$0xff]
    %v1977 = vld [vmem:[%s4 + $0xc0] sm:$0xff]
    %v1978 = vld [vmem:[%s4 + $0xc8] sm:$0xff]
    %v1979 = vld [vmem:[%s4 + $0xd0] sm:$0xff]
    %v1980 = vld [vmem:[%s4 + $0xd8] sm:$0xff]
    %v1981 = vld [vmem:[%s4 + $0xe0] sm:$0xff]
    %v1982 = vld [vmem:[%s4 + $0xe8] sm:$0xff]
    %v1983 = vld [vmem:[%s4 + $0xf0] sm:$0xff]
    %v1984 = vld [vmem:[%s4 + $0xf8] sm:$0xff]
    %v1985 = vld [vmem:[%s4 + $0x100] sm:$0xff]
    %v1986 = vld [vmem:[%s4 + $0x108] sm:$0xff]
    %v1987 = vld [vmem:[%s4 + $0x110] sm:$0xff]
    %v1988 = vld [vmem:[%s4 + $0x118] sm:$0xff]
    %v1989 = vld [vmem:[%s4 + $0x120] sm:$0xff]
    %v1990 = vld [vmem:[%s4 + $0x128] sm:$0xff]
    %v1991 = vld [vmem:[%s4 + $0x130] sm:$0xff]
    %v1992 = vld [vmem:[%s4 + $0x138] sm:$0xff]
    %v1993 = vld [vmem:[%s4 + $0x140] sm:$0xff]
    %v1994 = vld [vmem:[%s4 + $0x148] sm:$0xff]
    %v1995 = vld [vmem:[%s4 + $0x150] sm:$0xff]
    %v1996 = vld [vmem:[%s4 + $0x158] sm:$0xff]
    %v1997 = vld [vmem:[%s4 + $0x160] sm:$0xff]
    %v1998 = vld [vmem:[%s4 + $0x168] sm:$0xff]
    %v1999 = vld [vmem:[%s4 + $0x170] sm:$0xff]
    %v2000 = vld [vmem:[%s4 + $0x178] sm:$0xff]
    %v2001 = vld [vmem:[%s4 + $0x180] sm:$0xff]
    %v2002 = vld [vmem:[%s4 + $0x188] sm:$0xff]
    %v2003 = vld [vmem:[%s4 + $0x190] sm:$0xff]
    %v2004 = vld [vmem:[%s4 + $0x198] sm:$0xff]
    %v2005 = vld [vmem:[%s4 + $0x1a0] sm:$0xff]
    %v2006 = vld [vmem:[%s4 + $0x1a8] sm:$0xff]
    %v2007 = vld [vmem:[%s4 + $0x1b0] sm:$0xff]
    %v2008 = vld [vmem:[%s4 + $0x1b8] sm:$0xff]
    %v2009 = vld [vmem:[%s4 + $0x1c0] sm:$0xff]
    %v2010 = vld [vmem:[%s4 + $0x1c8] sm:$0xff]
    %v2011 = vld [vmem:[%s4 + $0x1d0] sm:$0xff]
    %v2012 = vld [vmem:[%s4 + $0x1d8] sm:$0xff]
    %v2013 = vld [vmem:[%s4 + $0x1e0] sm:$0xff]
    %v2014 = vld [vmem:[%s4 + $0x1e8] sm:$0xff]
    %v2015 = vld [vmem:[%s4 + $0x1f0] sm:$0xff]
    %v2016 = vld [vmem:[%s4 + $0x1f8] sm:$0xff]
    %v2017 = vld [vmem:[%s4 + $0x200] sm:$0xff]
    %v2018 = vld [vmem:[%s4 + $0x208] sm:$0xff]
    %v2019 = vld [vmem:[%s4 + $0x210] sm:$0xff]
    %v2020 = vld [vmem:[%s4 + $0x218] sm:$0xff]
    %v2021 = vld [vmem:[%s4 + $0x220] sm:$0xff]
    %v2022 = vld [vmem:[%s4 + $0x228] sm:$0xff]
    %v2023 = vld [vmem:[%s4 + $0x230] sm:$0xff]
    %v2024 = vld [vmem:[%s4 + $0x238] sm:$0xff]
    %v2025 = vld [vmem:[%s4 + $0x240] sm:$0xff]
    %v2026 = vld [vmem:[%s4 + $0x248] sm:$0xff]
    %v2027 = vld [vmem:[%s4 + $0x250] sm:$0xff]
    %v2028 = vld [vmem:[%s4 + $0x258] sm:$0xff]
    %v2029 = vld [vmem:[%s4 + $0x260] sm:$0xff]
    %v2030 = vld [vmem:[%s4 + $0x268] sm:$0xff]
    %v2031 = vld [vmem:[%s4 + $0x270] sm:$0xff]
    %v2032 = vld [vmem:[%s4 + $0x278] sm:$0xff]
    %v2033 = vld [vmem:[%s4 + $0x280] sm:$0xff]
    %v2034 = vld [vmem:[%s4 + $0x288] sm:$0xff]
    %v2035 = vld [vmem:[%s4 + $0x290] sm:$0xff]
    %v2036 = vld [vmem:[%s4 + $0x298] sm:$0xff]
    %v2037 = vld [vmem:[%s4 + $0x2a0] sm:$0xff]
    %v2038 = vld [vmem:[%s4 + $0x2a8] sm:$0xff]
    %v2039 = vld [vmem:[%s4 + $0x2b0] sm:$0xff]
    %v2040 = vld [vmem:[%s4 + $0x2b8] sm:$0xff]
    %v2041 = vld [vmem:[%s4 + $0x2c0] sm:$0xff]
    %v2042 = vld [vmem:[%s4 + $0x2c8] sm:$0xff]
    %v2043 = vld [vmem:[%s4 + $0x2d0] sm:$0xff]
    %v2044 = vld [vmem:[%s4 + $0x2d8] sm:$0xff]
    %v2045 = vld [vmem:[%s4 + $0x2e0] sm:$0xff]
    %v2046 = vld [vmem:[%s4 + $0x2e8] sm:$0xff]
    %v2047 = vld [vmem:[%s4 + $0x2f0] sm:$0xff]
    %v2048 = vld [vmem:[%s4 + $0x2f8] sm:$0xff]
    %s2049 = scalar_lea.vmem %s5, 16
    %v2050 = vld [vmem:[%s2049] sm:$0xff]
    %v2051 = vld [vmem:[%s2049 + $0x8] sm:$0x3f]
    %v2053 = vsel %vm1784, %v2050, 0
    %v2056 = vsel %vm1784, %v2051, 0
    %2058 = vmatprep.subr.mxu0 %v1768
    %2059 = vmatpush1.msra.mxu0 %v1767
    %2060 = vmatprep.subr.mxu0 %v1771
    %2061 = vmatpush1.msra.mxu0 %v1770
    %2062 = vmatprep.subr.mxu0 %v1774
    %2063 = vmatpush1.msra.mxu0 %v1773
    %2064 = vmatprep.subr.mxu0 %v1777
    %2065 = vmatpush1.msra.mxu0 %v1776
    %2066 = vmatprep.subr.mxu0 %v1796
    %2067 = vmatpush1.msra.mxu0 %v1793
    %2068 = vmatprep.subr.mxu0 0.0
    %2069 = vmatpush1.msra.mxu0 0.0
    %2070 = vmatprep.subr.mxu0 0.0
    %2071 = vmatpush1.msra.mxu0 0.0
    %2072 = vmatprep.subr.mxu0 0.0
    %2073 = vmatpush1.msra.mxu0 0.0
    %2074 = vmatprep.subr.mxu0 0.0
    %2075 = vmatpush1.msra.mxu0 0.0
    %2076 = vmatprep.subr.mxu0 0.0
    %2077 = vmatpush1.msra.mxu0 0.0
    %2078 = vmatprep.subr.mxu0 0.0
    %2079 = vmatpush1.msra.mxu0 0.0
    %2080 = vmatprep.subr.mxu0 0.0
    %2081 = vmatpush1.msra.mxu0 0.0
    %2082 = vmatprep.subr.mxu0 0.0
    %2083 = vmatpush1.msra.mxu0 0.0
    %2084 = vmatprep.subr.mxu0 0.0
    %2085 = vmatpush1.msra.mxu0 0.0
    %2086 = vmatprep.subr.mxu0 0.0
    %2087 = vmatpush1.msra.mxu0 0.0
    %2088 = vmatprep.subr.mxu0 0.0
    %2089 = vmatpush1.msra.mxu0 0.0
    %2090 = vmatprep.subr.mxu0 0.0
    %2091 = vmatpush1.msra.mxu0 0.0
    %2092 = vmatprep.subr.mxu0 0.0
    %2093 = vmatpush1.msra.mxu0 0.0
    %2094 = vmatprep.subr.mxu0 0.0
    %2095 = vmatpush1.msra.mxu0 0.0
    %2096 = vmatprep.subr.mxu0 0.0
    %2097 = vmatpush1.msra.mxu0 0.0
    %2098 = vmatprep.subr.mxu0 0.0
    %2099 = vmatpush1.msra.mxu0 0.0
    %2100 = vmatprep.subr.mxu0 0.0
    %2101 = vmatpush1.msra.mxu0 0.0
    %2102 = vmatprep.subr.mxu0 0.0
    %2103 = vmatpush1.msra.mxu0 0.0
    %2104 = vmatprep.subr.mxu0 0.0
    %2105 = vmatpush1.msra.mxu0 0.0
    %2106 = vmatprep.subr.mxu0 0.0
    %2107 = vmatpush1.msra.mxu0 0.0
    %2108 = vmatprep.subr.mxu0 0.0
    %2109 = vmatpush1.msra.mxu0 0.0
    %2110 = vmatprep.subr.mxu0 0.0
    %2111 = vmatpush1.msra.mxu0 0.0
    %2112 = vmatprep.subr.mxu0 0.0
    %2113 = vmatpush1.msra.mxu0 0.0
    %2114 = vmatprep.subr.mxu0 0.0
    %2115 = vmatpush1.msra.mxu0 0.0
    %2116 = vmatprep.subr.mxu0 0.0
    %2117 = vmatpush1.msra.mxu0 0.0
    %2118 = vmatprep.subr.mxu0 0.0
    %2119 = vmatpush1.msra.mxu0 0.0
    %2120 = vmatprep.subr.mxu0 0.0
    %2121 = vmatpush1.msra.mxu0 0.0
    %2122 = vmatprep.mubr.f32.mxu0 0.0
    %2123 = vmatmul.mubr.f32.gmra.mrb[0].mxu0 %v2053
    %v2124 = vpop.f32.mrb[0].mxu0
    %v2125 = vadd.f32 0.0, %v2124
    %v2126 = vpop.f32.mrb[0].mxu0
    %v2127 = vadd.f32 0.0, %v2126
    %2128 = vmatprep.mubr.f32.mxu0 0.0
    %2129 = vmatmul.mubr.f32.gmra.mrb[0].mxu0 %v2056
    %v2130 = vpop.f32.mrb[0].mxu0
    %v2131 = vadd.f32 0.0, %v2130
    %v2132 = vpop.f32.mrb[0].mxu0
    %v2133 = vadd.f32 0.0, %v2132
    %2134 = vdwg.mxu0
    %2135 = vmatprep.subr.mxu0 0.0
    %2136 = vmatpush1.msra.mxu0 %v1769
    %2137 = vmatprep.subr.mxu0 0.0
    %2138 = vmatpush1.msra.mxu0 %v1772
    %2139 = vmatprep.subr.mxu0 0.0
    %2140 = vmatpush1.msra.mxu0 %v1775
    %2141 = vmatprep.subr.mxu0 0.0
    %2142 = vmatpush1.msra.mxu0 %v1778
    %2143 = vmatprep.subr.mxu0 0.0
    %2144 = vmatpush1.msra.mxu0 %v1799
    %2145 = vmatprep.subr.mxu0 0.0
    %2146 = vmatpush1.msra.mxu0 0.0
    %2147 = vmatprep.subr.mxu0 0.0
    %2148 = vmatpush1.msra.mxu0 0.0
    %2149 = vmatprep.subr.mxu0 0.0
    %2150 = vmatpush1.msra.mxu0 0.0
    %2151 = vmatprep.subr.mxu0 0.0
    %2152 = vmatpush1.msra.mxu0 0.0
    %2153 = vmatprep.subr.mxu0 0.0
    %2154 = vmatpush1.msra.mxu0 0.0
    %2155 = vmatprep.subr.mxu0 0.0
    %2156 = vmatpush1.msra.mxu0 0.0
    %2157 = vmatprep.subr.mxu0 0.0
    %2158 = vmatpush1.msra.mxu0 0.0
    %2159 = vmatprep.subr.mxu0 0.0
    %2160 = vmatpush1.msra.mxu0 0.0
    %2161 = vmatprep.subr.mxu0 0.0
    %2162 = vmatpush1.msra.mxu0 0.0
    %2163 = vmatprep.subr.mxu0 0.0
    %2164 = vmatpush1.msra.mxu0 0.0
    %2165 = vmatprep.subr.mxu0 0.0
    %2166 = vmatpush1.msra.mxu0 0.0
    %2167 = vmatprep.subr.mxu0 0.0
    %2168 = vmatpush1.msra.mxu0 0.0
    %2169 = vmatprep.subr.mxu0 0.0
    %2170 = vmatpush1.msra.mxu0 0.0
    %2171 = vmatprep.subr.mxu0 0.0
    %2172 = vmatpush1.msra.mxu0 0.0
    %2173 = vmatprep.subr.mxu0 0.0
    %2174 = vmatpush1.msra.mxu0 0.0
    %2175 = vmatprep.subr.mxu0 0.0
    %2176 = vmatpush1.msra.mxu0 0.0
    %2177 = vmatprep.subr.mxu0 0.0
    %2178 = vmatpush1.msra.mxu0 0.0
    %2179 = vmatprep.subr.mxu0 0.0
    %2180 = vmatpush1.msra.mxu0 0.0
    %2181 = vmatprep.subr.mxu0 0.0
    %2182 = vmatpush1.msra.mxu0 0.0
    %2183 = vmatprep.subr.mxu0 0.0
    %2184 = vmatpush1.msra.mxu0 0.0
    %2185 = vmatprep.subr.mxu0 0.0
    %2186 = vmatpush1.msra.mxu0 0.0
    %2187 = vmatprep.subr.mxu0 0.0
    %2188 = vmatpush1.msra.mxu0 0.0
    %2189 = vmatprep.subr.mxu0 0.0
    %2190 = vmatpush1.msra.mxu0 0.0
    %2191 = vmatprep.subr.mxu0 0.0
    %2192 = vmatpush1.msra.mxu0 0.0
    %2193 = vmatprep.subr.mxu0 0.0
    %2194 = vmatpush1.msra.mxu0 0.0
    %2195 = vmatprep.subr.mxu0 0.0
    %2196 = vmatpush1.msra.mxu0 0.0
    %2197 = vmatprep.subr.mxu0 0.0
    %2198 = vmatpush1.msra.mxu0 0.0
    %2199 = vmatprep.mubr.f32.mxu0 0.0
    %2200 = vmatmul.mubr.f32.gmra.mrb[0].mxu0 %v2053
    %v2201 = vpop.f32.mrb[0].mxu0
    %v2202 = vadd.f32 0.0, %v2201
    %v2203 = vpop.f32.mrb[0].mxu0
    %2204 = vmatprep.mubr.f32.mxu0 0.0
    %2205 = vmatmul.mubr.f32.gmra.mrb[0].mxu0 %v2056
    %v2206 = vpop.f32.mrb[0].mxu0
    %v2207 = vadd.f32 0.0, %v2206
    %v2208 = vpop.f32.mrb[0].mxu0
    %2209 = vdwg.mxu0
    %s2210 = scalar_lea.vmem %s4, 768
    %v2211 = vld [vmem:[%s2210] sm:$0xff]
    %v2212 = vld [vmem:[%s2210 + $0x8] sm:$0xff]
    %v2213 = vld [vmem:[%s2210 + $0x10] sm:$0xff]
    %v2214 = vld [vmem:[%s2210 + $0x18] sm:$0xff]
    %v2215 = vld [vmem:[%s2210 + $0x20] sm:$0xff]
    %v2216 = vld [vmem:[%s2210 + $0x28] sm:$0xff]
    %v2217 = vld [vmem:[%s2210 + $0x30] sm:$0xff]
    %v2218 = vld [vmem:[%s2210 + $0x38] sm:$0xff]
    %v2219 = vld [vmem:[%s2210 + $0x40] sm:$0xff]
    %v2220 = vld [vmem:[%s2210 + $0x48] sm:$0xff]
    %v2221 = vld [vmem:[%s2210 + $0x50] sm:$0xff]
    %v2222 = vld [vmem:[%s2210 + $0x58] sm:$0xff]
    %v2223 = vld [vmem:[%s2210 + $0x60] sm:$0xff]
    %v2224 = vld [vmem:[%s2210 + $0x68] sm:$0xff]
    %v2225 = vld [vmem:[%s2210 + $0x70] sm:$0xff]
    %v2226 = vld [vmem:[%s2210 + $0x78] sm:$0xff]
    %v2227 = vld [vmem:[%s2210 + $0x80] sm:$0xff]
    %v2228 = vld [vmem:[%s2210 + $0x88] sm:$0xff]
    %v2229 = vld [vmem:[%s2210 + $0x90] sm:$0xff]
    %v2230 = vld [vmem:[%s2210 + $0x98] sm:$0xff]
    %v2231 = vld [vmem:[%s2210 + $0xa0] sm:$0xff]
    %v2232 = vld [vmem:[%s2210 + $0xa8] sm:$0xff]
    %v2233 = vld [vmem:[%s2210 + $0xb0] sm:$0xff]
    %v2234 = vld [vmem:[%s2210 + $0xb8] sm:$0xff]
    %v2235 = vld [vmem:[%s2210 + $0xc0] sm:$0xff]
    %v2236 = vld [vmem:[%s2210 + $0xc8] sm:$0xff]
    %v2237 = vld [vmem:[%s2210 + $0xd0] sm:$0xff]
    %v2238 = vld [vmem:[%s2210 + $0xd8] sm:$0xff]
    %v2239 = vld [vmem:[%s2210 + $0xe0] sm:$0xff]
    %v2240 = vld [vmem:[%s2210 + $0xe8] sm:$0xff]
    %v2241 = vld [vmem:[%s2210 + $0xf0] sm:$0xff]
    %v2242 = vld [vmem:[%s2210 + $0xf8] sm:$0xff]
    %v2243 = vld [vmem:[%s2210 + $0x100] sm:$0xff]
    %v2244 = vld [vmem:[%s2210 + $0x108] sm:$0xff]
    %v2245 = vld [vmem:[%s2210 + $0x110] sm:$0xff]
    %v2246 = vld [vmem:[%s2210 + $0x118] sm:$0xff]
    %v2247 = vld [vmem:[%s2210 + $0x120] sm:$0xff]
    %v2248 = vld [vmem:[%s2210 + $0x128] sm:$0xff]
    %v2249 = vld [vmem:[%s2210 + $0x130] sm:$0xff]
    %v2250 = vld [vmem:[%s2210 + $0x138] sm:$0xff]
    %v2251 = vld [vmem:[%s2210 + $0x140] sm:$0xff]
    %v2252 = vld [vmem:[%s2210 + $0x148] sm:$0xff]
    %v2253 = vld [vmem:[%s2210 + $0x150] sm:$0xff]
    %v2254 = vld [vmem:[%s2210 + $0x158] sm:$0xff]
    %v2255 = vld [vmem:[%s2210 + $0x160] sm:$0xff]
    %v2256 = vld [vmem:[%s2210 + $0x168] sm:$0xff]
    %v2257 = vld [vmem:[%s2210 + $0x170] sm:$0xff]
    %v2258 = vld [vmem:[%s2210 + $0x178] sm:$0xff]
    %v2259 = vld [vmem:[%s2210 + $0x180] sm:$0xff]
    %v2260 = vld [vmem:[%s2210 + $0x188] sm:$0xff]
    %v2261 = vld [vmem:[%s2210 + $0x190] sm:$0xff]
    %v2262 = vld [vmem:[%s2210 + $0x198] sm:$0xff]
    %v2263 = vld [vmem:[%s2210 + $0x1a0] sm:$0xff]
    %v2264 = vld [vmem:[%s2210 + $0x1a8] sm:$0xff]
    %v2265 = vld [vmem:[%s2210 + $0x1b0] sm:$0xff]
    %v2266 = vld [vmem:[%s2210 + $0x1b8] sm:$0xff]
    %v2267 = vld [vmem:[%s2210 + $0x1c0] sm:$0xff]
    %v2268 = vld [vmem:[%s2210 + $0x1c8] sm:$0xff]
    %v2269 = vld [vmem:[%s2210 + $0x1d0] sm:$0xff]
    %v2270 = vld [vmem:[%s2210 + $0x1d8] sm:$0xff]
    %v2271 = vld [vmem:[%s2210 + $0x1e0] sm:$0xff]
    %v2272 = vld [vmem:[%s2210 + $0x1e8] sm:$0xff]
    %v2273 = vld [vmem:[%s2210 + $0x1f0] sm:$0xff]
    %v2274 = vld [vmem:[%s2210 + $0x1f8] sm:$0xff]
    %v2275 = vld [vmem:[%s2210 + $0x200] sm:$0xff]
    %v2276 = vld [vmem:[%s2210 + $0x208] sm:$0xff]
    %v2277 = vld [vmem:[%s2210 + $0x210] sm:$0xff]
    %v2278 = vld [vmem:[%s2210 + $0x218] sm:$0xff]
    %v2279 = vld [vmem:[%s2210 + $0x220] sm:$0xff]
    %v2280 = vld [vmem:[%s2210 + $0x228] sm:$0xff]
    %v2281 = vld [vmem:[%s2210 + $0x230] sm:$0xff]
    %v2282 = vld [vmem:[%s2210 + $0x238] sm:$0xff]
    %v2283 = vld [vmem:[%s2210 + $0x240] sm:$0xff]
    %v2284 = vld [vmem:[%s2210 + $0x248] sm:$0xff]
    %v2285 = vld [vmem:[%s2210 + $0x250] sm:$0xff]
    %v2286 = vld [vmem:[%s2210 + $0x258] sm:$0xff]
    %v2287 = vld [vmem:[%s2210 + $0x260] sm:$0xff]
    %v2288 = vld [vmem:[%s2210 + $0x268] sm:$0xff]
    %v2289 = vld [vmem:[%s2210 + $0x270] sm:$0xff]
    %v2290 = vld [vmem:[%s2210 + $0x278] sm:$0xff]
    %v2291 = vld [vmem:[%s2210 + $0x280] sm:$0xff]
    %v2292 = vld [vmem:[%s2210 + $0x288] sm:$0xff]
    %v2293 = vld [vmem:[%s2210 + $0x290] sm:$0xff]
    %v2294 = vld [vmem:[%s2210 + $0x298] sm:$0xff]
    %v2295 = vld [vmem:[%s2210 + $0x2a0] sm:$0xff]
    %v2296 = vld [vmem:[%s2210 + $0x2a8] sm:$0xff]
    %v2297 = vld [vmem:[%s2210 + $0x2b0] sm:$0xff]
    %v2298 = vld [vmem:[%s2210 + $0x2b8] sm:$0xff]
    %v2299 = vld [vmem:[%s2210 + $0x2c0] sm:$0xff]
    %v2300 = vld [vmem:[%s2210 + $0x2c8] sm:$0xff]
    %v2301 = vld [vmem:[%s2210 + $0x2d0] sm:$0xff]
    %v2302 = vld [vmem:[%s2210 + $0x2d8] sm:$0xff]
    %v2303 = vld [vmem:[%s2210 + $0x2e0] sm:$0xff]
    %v2304 = vld [vmem:[%s2210 + $0x2e8] sm:$0xff]
    %v2305 = vld [vmem:[%s2210 + $0x2f0] sm:$0xff]
    %v2306 = vld [vmem:[%s2210 + $0x2f8] sm:$0xff]
    %2307 = vmatprep.subr.mxu0 %v2212
    %2308 = vmatpush1.msra.mxu0 %v2211
    %2309 = vmatprep.subr.mxu0 %v2214
    %2310 = vmatpush1.msra.mxu0 %v2213
    %2311 = vmatprep.subr.mxu0 %v2216
    %2312 = vmatpush1.msra.mxu0 %v2215
    %2313 = vmatprep.subr.mxu0 %v2218
    %2314 = vmatpush1.msra.mxu0 %v2217
    %2315 = vmatprep.subr.mxu0 %v2220
    %2316 = vmatpush1.msra.mxu0 %v2219
    %2317 = vmatprep.subr.mxu0 %v2222
    %2318 = vmatpush1.msra.mxu0 %v2221
    %2319 = vmatprep.subr.mxu0 %v2224
    %2320 = vmatpush1.msra.mxu0 %v2223
    %2321 = vmatprep.subr.mxu0 %v2226
    %2322 = vmatpush1.msra.mxu0 %v2225
    %2323 = vmatprep.subr.mxu0 %v2228
    %2324 = vmatpush1.msra.mxu0 %v2227
    %2325 = vmatprep.subr.mxu0 %v2230
    %2326 = vmatpush1.msra.mxu0 %v2229
    %2327 = vmatprep.subr.mxu0 %v2232
    %2328 = vmatpush1.msra.mxu0 %v2231
    %2329 = vmatprep.subr.mxu0 %v2234
    %2330 = vmatpush1.msra.mxu0 %v2233
    %2331 = vmatprep.subr.mxu0 %v2236
    %2332 = vmatpush1.msra.mxu0 %v2235
    %2333 = vmatprep.subr.mxu0 %v2238
    %2334 = vmatpush1.msra.mxu0 %v2237
    %2335 = vmatprep.subr.mxu0 %v2240
    %2336 = vmatpush1.msra.mxu0 %v2239
    %2337 = vmatprep.subr.mxu0 %v2242
    %2338 = vmatpush1.msra.mxu0 %v2241
    %2339 = vmatprep.subr.mxu0 %v2244
    %2340 = vmatpush1.msra.mxu0 %v2243
    %2341 = vmatprep.subr.mxu0 %v2246
    %2342 = vmatpush1.msra.mxu0 %v2245
    %2343 = vmatprep.subr.mxu0 %v2248
    %2344 = vmatpush1.msra.mxu0 %v2247
    %2345 = vmatprep.subr.mxu0 %v2250
    %2346 = vmatpush1.msra.mxu0 %v2249
    %2347 = vmatprep.subr.mxu0 %v2252
    %2348 = vmatpush1.msra.mxu0 %v2251
    %2349 = vmatprep.subr.mxu0 %v2254
    %2350 = vmatpush1.msra.mxu0 %v2253
    %2351 = vmatprep.subr.mxu0 %v2256
    %2352 = vmatpush1.msra.mxu0 %v2255
    %2353 = vmatprep.subr.mxu0 %v2258
    %2354 = vmatpush1.msra.mxu0 %v2257
    %2355 = vmatprep.subr.mxu0 %v2260
    %2356 = vmatpush1.msra.mxu0 %v2259
    %2357 = vmatprep.subr.mxu0 %v2262
    %2358 = vmatpush1.msra.mxu0 %v2261
    %2359 = vmatprep.subr.mxu0 %v2264
    %2360 = vmatpush1.msra.mxu0 %v2263
    %2361 = vmatprep.subr.mxu0 %v2266
    %2362 = vmatpush1.msra.mxu0 %v2265
    %2363 = vmatprep.subr.mxu0 %v2268
    %2364 = vmatpush1.msra.mxu0 %v2267
    %2365 = vmatprep.subr.mxu0 %v2270
    %2366 = vmatpush1.msra.mxu0 %v2269
    %2367 = vmatprep.subr.mxu0 %v2272
    %2368 = vmatpush1.msra.mxu0 %v2271
    %2369 = vmatprep.subr.mxu0 %v2274
    %2370 = vmatpush1.msra.mxu0 %v2273
    %2371 = vmatprep.mubr.f32.mxu0 %v2127
    %2372 = vmatmul.mubr.f32.gmra.mrb[0].mxu0 %v2125
    %v2373 = vpop.f32.mrb[0].mxu0
    %v2374 = vadd.f32 0.0, %v2373
    %v2375 = vpop.f32.mrb[0].mxu0
    %v2376 = vadd.f32 0.0, %v2375
    %2377 = vmatprep.mubr.f32.mxu0 %v2133
    %2378 = vmatmul.mubr.f32.gmra.mrb[0].mxu0 %v2131
    %v2379 = vpop.f32.mrb[0].mxu0
    %v2380 = vadd.f32 0.0, %v2379
    %v2381 = vpop.f32.mrb[0].mxu0
    %v2382 = vadd.f32 0.0, %v2381
    %2383 = vdwg.mxu0
    %2384 = vmatprep.subr.mxu0 %v2276
    %2385 = vmatpush1.msra.mxu0 %v2275
    %2386 = vmatprep.subr.mxu0 %v2278
    %2387 = vmatpush1.msra.mxu0 %v2277
    %2388 = vmatprep.subr.mxu0 %v2280
    %2389 = vmatpush1.msra.mxu0 %v2279
    %2390 = vmatprep.subr.mxu0 %v2282
    %2391 = vmatpush1.msra.mxu0 %v2281
    %2392 = vmatprep.subr.mxu0 %v2284
    %2393 = vmatpush1.msra.mxu0 %v2283
    %2394 = vmatprep.subr.mxu0 %v2286
    %2395 = vmatpush1.msra.mxu0 %v2285
    %2396 = vmatprep.subr.mxu0 %v2288
    %2397 = vmatpush1.msra.mxu0 %v2287
    %2398 = vmatprep.subr.mxu0 %v2290
    %2399 = vmatpush1.msra.mxu0 %v2289
    %2400 = vmatprep.subr.mxu0 %v2292
    %2401 = vmatpush1.msra.mxu0 %v2291
    %2402 = vmatprep.subr.mxu0 %v2294
    %2403 = vmatpush1.msra.mxu0 %v2293
    %2404 = vmatprep.subr.mxu0 %v2296
    %2405 = vmatpush1.msra.mxu0 %v2295
    %2406 = vmatprep.subr.mxu0 %v2298
    %2407 = vmatpush1.msra.mxu0 %v2297
    %2408 = vmatprep.subr.mxu0 %v2300
    %2409 = vmatpush1.msra.mxu0 %v2299
    %2410 = vmatprep.subr.mxu0 %v2302
    %2411 = vmatpush1.msra.mxu0 %v2301
    %2412 = vmatprep.subr.mxu0 %v2304
    %2413 = vmatpush1.msra.mxu0 %v2303
    %2414 = vmatprep.subr.mxu0 %v2306
    %2415 = vmatpush1.msra.mxu0 %v2305
    %2416 = vmatprep.subr.mxu0 0.0
    %2417 = vmatpush1.msra.mxu0 0.0
    %2418 = vmatprep.subr.mxu0 0.0
    %2419 = vmatpush1.msra.mxu0 0.0
    %2420 = vmatprep.subr.mxu0 0.0
    %2421 = vmatpush1.msra.mxu0 0.0
    %2422 = vmatprep.subr.mxu0 0.0
    %2423 = vmatpush1.msra.mxu0 0.0
    %2424 = vmatprep.subr.mxu0 0.0
    %2425 = vmatpush1.msra.mxu0 0.0
    %2426 = vmatprep.subr.mxu0 0.0
    %2427 = vmatpush1.msra.mxu0 0.0
    %2428 = vmatprep.subr.mxu0 0.0
    %2429 = vmatpush1.msra.mxu0 0.0
    %2430 = vmatprep.subr.mxu0 0.0
    %2431 = vmatpush1.msra.mxu0 0.0
    %2432 = vmatprep.subr.mxu0 0.0
    %2433 = vmatpush1.msra.mxu0 0.0
    %2434 = vmatprep.subr.mxu0 0.0
    %2435 = vmatpush1.msra.mxu0 0.0
    %2436 = vmatprep.subr.mxu0 0.0
    %2437 = vmatpush1.msra.mxu0 0.0
    %2438 = vmatprep.subr.mxu0 0.0
    %2439 = vmatpush1.msra.mxu0 0.0
    %2440 = vmatprep.subr.mxu0 0.0
    %2441 = vmatpush1.msra.mxu0 0.0
    %2442 = vmatprep.subr.mxu0 0.0
    %2443 = vmatpush1.msra.mxu0 0.0
    %2444 = vmatprep.subr.mxu0 0.0
    %2445 = vmatpush1.msra.mxu0 0.0
    %2446 = vmatprep.subr.mxu0 0.0
    %2447 = vmatpush1.msra.mxu0 0.0
    %2448 = vmatprep.mubr.f32.mxu0 0.0
    %2449 = vmatmul.mubr.f32.gmra.mrb[0].mxu0 %v2202
    %v2450 = vpop.f32.mrb[0].mxu0
    %v2451 = vadd.f32 %v2374, %v2450
    %v2452 = vpop.f32.mrb[0].mxu0
    %v2453 = vadd.f32 %v2376, %v2452
    %2454 = vmatprep.mubr.f32.mxu0 0.0
    %2455 = vmatmul.mubr.f32.gmra.mrb[0].mxu0 %v2207
    %v2456 = vpop.f32.mrb[0].mxu0
    %v2457 = vadd.f32 %v2380, %v2456
    %v2458 = vpop.f32.mrb[0].mxu0
    %v2459 = vadd.f32 %v2382, %v2458
    %2460 = vdwg.mxu0
    %2461 = vmatprep.subr.mxu0 %v1954
    %2462 = vmatpush1.msra.mxu0 %v1953
    %2463 = vmatprep.subr.mxu0 %v1956
    %2464 = vmatpush1.msra.mxu0 %v1955
    %2465 = vmatprep.subr.mxu0 %v1958
    %2466 = vmatpush1.msra.mxu0 %v1957
    %2467 = vmatprep.subr.mxu0 %v1960
    %2468 = vmatpush1.msra.mxu0 %v1959
    %2469 = vmatprep.subr.mxu0 %v1962
    %2470 = vmatpush1.msra.mxu0 %v1961
    %2471 = vmatprep.subr.mxu0 %v1964
    %2472 = vmatpush1.msra.mxu0 %v1963
    %2473 = vmatprep.subr.mxu0 %v1966
    %2474 = vmatpush1.msra.mxu0 %v1965
    %2475 = vmatprep.subr.mxu0 %v1968
    %2476 = vmatpush1.msra.mxu0 %v1967
    %2477 = vmatprep.subr.mxu0 %v1970
    %2478 = vmatpush1.msra.mxu0 %v1969
    %2479 = vmatprep.subr.mxu0 %v1972
    %2480 = vmatpush1.msra.mxu0 %v1971
    %2481 = vmatprep.subr.mxu0 %v1974
    %2482 = vmatpush1.msra.mxu0 %v1973
    %2483 = vmatprep.subr.mxu0 %v1976
    %2484 = vmatpush1.msra.mxu0 %v1975
    %2485 = vmatprep.subr.mxu0 %v1978
    %2486 = vmatpush1.msra.mxu0 %v1977
    %2487 = vmatprep.subr.mxu0 %v1980
    %2488 = vmatpush1.msra.mxu0 %v1979
    %2489 = vmatprep.subr.mxu0 %v1982
    %2490 = vmatpush1.msra.mxu0 %v1981
    %2491 = vmatprep.subr.mxu0 %v1984
    %2492 = vmatpush1.msra.mxu0 %v1983
    %2493 = vmatprep.subr.mxu0 %v1986
    %2494 = vmatpush1.msra.mxu0 %v1985
    %2495 = vmatprep.subr.mxu0 %v1988
    %2496 = vmatpush1.msra.mxu0 %v1987
    %2497 = vmatprep.subr.mxu0 %v1990
    %2498 = vmatpush1.msra.mxu0 %v1989
    %2499 = vmatprep.subr.mxu0 %v1992
    %2500 = vmatpush1.msra.mxu0 %v1991
    %2501 = vmatprep.subr.mxu0 %v1994
    %2502 = vmatpush1.msra.mxu0 %v1993
    %2503 = vmatprep.subr.mxu0 %v1996
    %2504 = vmatpush1.msra.mxu0 %v1995
    %2505 = vmatprep.subr.mxu0 %v1998
    %2506 = vmatpush1.msra.mxu0 %v1997
    %2507 = vmatprep.subr.mxu0 %v2000
    %2508 = vmatpush1.msra.mxu0 %v1999
    %2509 = vmatprep.subr.mxu0 %v2002
    %2510 = vmatpush1.msra.mxu0 %v2001
    %2511 = vmatprep.subr.mxu0 %v2004
    %2512 = vmatpush1.msra.mxu0 %v2003
    %2513 = vmatprep.subr.mxu0 %v2006
    %2514 = vmatpush1.msra.mxu0 %v2005
    %2515 = vmatprep.subr.mxu0 %v2008
    %2516 = vmatpush1.msra.mxu0 %v2007
    %2517 = vmatprep.subr.mxu0 %v2010
    %2518 = vmatpush1.msra.mxu0 %v2009
    %2519 = vmatprep.subr.mxu0 %v2012
    %2520 = vmatpush1.msra.mxu0 %v2011
    %2521 = vmatprep.subr.mxu0 %v2014
    %2522 = vmatpush1.msra.mxu0 %v2013
    %2523 = vmatprep.subr.mxu0 %v2016
    %2524 = vmatpush1.msra.mxu0 %v2015
    %2525 = vmatprep.mubr.f32.mxu0 %v1870
    %2526 = vmatmul.mubr.f32.gmra.mrb[0].mxu0 %v1868
    %v2527 = vpop.f32.mrb[0].mxu0
    %v2528 = vadd.f32 %v2451, %v2527
    %v2529 = vpop.f32.mrb[0].mxu0
    %v2530 = vadd.f32 %v2453, %v2529
    %2531 = vmatprep.mubr.f32.mxu0 %v1876
    %2532 = vmatmul.mubr.f32.gmra.mrb[0].mxu0 %v1874
    %v2533 = vpop.f32.mrb[0].mxu0
    %v2534 = vadd.f32 %v2457, %v2533
    %v2535 = vpop.f32.mrb[0].mxu0
    %v2536 = vadd.f32 %v2459, %v2535
    %2537 = vdwg.mxu0
    %2538 = vmatprep.subr.mxu0 %v2018
    %2539 = vmatpush1.msra.mxu0 %v2017
    %2540 = vmatprep.subr.mxu0 %v2020
    %2541 = vmatpush1.msra.mxu0 %v2019
    %2542 = vmatprep.subr.mxu0 %v2022
    %2543 = vmatpush1.msra.mxu0 %v2021
    %2544 = vmatprep.subr.mxu0 %v2024
    %2545 = vmatpush1.msra.mxu0 %v2023
    %2546 = vmatprep.subr.mxu0 %v2026
    %2547 = vmatpush1.msra.mxu0 %v2025
    %2548 = vmatprep.subr.mxu0 %v2028
    %2549 = vmatpush1.msra.mxu0 %v2027
    %2550 = vmatprep.subr.mxu0 %v2030
    %2551 = vmatpush1.msra.mxu0 %v2029
    %2552 = vmatprep.subr.mxu0 %v2032
    %2553 = vmatpush1.msra.mxu0 %v2031
    %2554 = vmatprep.subr.mxu0 %v2034
    %2555 = vmatpush1.msra.mxu0 %v2033
    %2556 = vmatprep.subr.mxu0 %v2036
    %2557 = vmatpush1.msra.mxu0 %v2035
    %2558 = vmatprep.subr.mxu0 %v2038
    %2559 = vmatpush1.msra.mxu0 %v2037
    %2560 = vmatprep.subr.mxu0 %v2040
    %2561 = vmatpush1.msra.mxu0 %v2039
    %2562 = vmatprep.subr.mxu0 %v2042
    %2563 = vmatpush1.msra.mxu0 %v2041
    %2564 = vmatprep.subr.mxu0 %v2044
    %2565 = vmatpush1.msra.mxu0 %v2043
    %2566 = vmatprep.subr.mxu0 %v2046
    %2567 = vmatpush1.msra.mxu0 %v2045
    %2568 = vmatprep.subr.mxu0 %v2048
    %2569 = vmatpush1.msra.mxu0 %v2047
    %2570 = vmatprep.subr.mxu0 0.0
    %2571 = vmatpush1.msra.mxu0 0.0
    %2572 = vmatprep.subr.mxu0 0.0
    %2573 = vmatpush1.msra.mxu0 0.0
    %2574 = vmatprep.subr.mxu0 0.0
    %2575 = vmatpush1.msra.mxu0 0.0
    %2576 = vmatprep.subr.mxu0 0.0
    %2577 = vmatpush1.msra.mxu0 0.0
    %2578 = vmatprep.subr.mxu0 0.0
    %2579 = vmatpush1.msra.mxu0 0.0
    %2580 = vmatprep.subr.mxu0 0.0
    %2581 = vmatpush1.msra.mxu0 0.0
    %2582 = vmatprep.subr.mxu0 0.0
    %2583 = vmatpush1.msra.mxu0 0.0
    %2584 = vmatprep.subr.mxu0 0.0
    %2585 = vmatpush1.msra.mxu0 0.0
    %2586 = vmatprep.subr.mxu0 0.0
    %2587 = vmatpush1.msra.mxu0 0.0
    %2588 = vmatprep.subr.mxu0 0.0
    %2589 = vmatpush1.msra.mxu0 0.0
    %2590 = vmatprep.subr.mxu0 0.0
    %2591 = vmatpush1.msra.mxu0 0.0
    %2592 = vmatprep.subr.mxu0 0.0
    %2593 = vmatpush1.msra.mxu0 0.0
    %2594 = vmatprep.subr.mxu0 0.0
    %2595 = vmatpush1.msra.mxu0 0.0
    %2596 = vmatprep.subr.mxu0 0.0
    %2597 = vmatpush1.msra.mxu0 0.0
    %2598 = vmatprep.subr.mxu0 0.0
    %2599 = vmatpush1.msra.mxu0 0.0
    %2600 = vmatprep.subr.mxu0 0.0
    %2601 = vmatpush1.msra.mxu0 0.0
    %2602 = vmatprep.mubr.f32.mxu0 0.0
    %2603 = vmatmul.mubr.f32.gmra.mrb[0].mxu0 %v1945
    %v2604 = vpop.f32.mrb[0].mxu0
    %v2605 = vadd.f32 %v2528, %v2604
    %v2606 = vpop.f32.mrb[0].mxu0
    %v2607 = vadd.f32 %v2530, %v2606
    %2608 = vmatprep.mubr.f32.mxu0 0.0
    %2609 = vmatmul.mubr.f32.gmra.mrb[0].mxu0 %v1950
    %v2610 = vpop.f32.mrb[0].mxu0
    %v2611 = vadd.f32 %v2534, %v2610
    %v2612 = vpop.f32.mrb[0].mxu0
    %v2613 = vadd.f32 %v2536, %v2612
    %2614 = vdwg.mxu0
    %s2615 = scalar_lea.vmem %s5, 32
    %v2616 = vld [vmem:[%s2615] sm:$0xff]
    %v2617 = vld [vmem:[%s2615 + $0x8] sm:$0x3f]
    %v2619 = vsel %vm1784, %v2616, 0
    %v2622 = vsel %vm1784, %v2617, 0
    %2624 = vmatprep.subr.mxu0 %v1768
    %2625 = vmatpush1.msra.mxu0 %v1767
    %2626 = vmatprep.subr.mxu0 %v1771
    %2627 = vmatpush1.msra.mxu0 %v1770
    %2628 = vmatprep.subr.mxu0 %v1774
    %2629 = vmatpush1.msra.mxu0 %v1773
    %2630 = vmatprep.subr.mxu0 %v1777
    %2631 = vmatpush1.msra.mxu0 %v1776
    %2632 = vmatprep.subr.mxu0 %v1796
    %2633 = vmatpush1.msra.mxu0 %v1793
    %2634 = vmatprep.subr.mxu0 0.0
    %2635 = vmatpush1.msra.mxu0 0.0
    %2636 = vmatprep.subr.mxu0 0.0
    %2637 = vmatpush1.msra.mxu0 0.0
    %2638 = vmatprep.subr.mxu0 0.0
    %2639 = vmatpush1.msra.mxu0 0.0
    %2640 = vmatprep.subr.mxu0 0.0
    %2641 = vmatpush1.msra.mxu0 0.0
    %2642 = vmatprep.subr.mxu0 0.0
    %2643 = vmatpush1.msra.mxu0 0.0
    %2644 = vmatprep.subr.mxu0 0.0
    %2645 = vmatpush1.msra.mxu0 0.0
    %2646 = vmatprep.subr.mxu0 0.0
    %2647 = vmatpush1.msra.mxu0 0.0
    %2648 = vmatprep.subr.mxu0 0.0
    %2649 = vmatpush1.msra.mxu0 0.0
    %2650 = vmatprep.subr.mxu0 0.0
    %2651 = vmatpush1.msra.mxu0 0.0
    %2652 = vmatprep.subr.mxu0 0.0
    %2653 = vmatpush1.msra.mxu0 0.0
    %2654 = vmatprep.subr.mxu0 0.0
    %2655 = vmatpush1.msra.mxu0 0.0
    %2656 = vmatprep.subr.mxu0 0.0
    %2657 = vmatpush1.msra.mxu0 0.0
    %2658 = vmatprep.subr.mxu0 0.0
    %2659 = vmatpush1.msra.mxu0 0.0
    %2660 = vmatprep.subr.mxu0 0.0
    %2661 = vmatpush1.msra.mxu0 0.0
    %2662 = vmatprep.subr.mxu0 0.0
    %2663 = vmatpush1.msra.mxu0 0.0
    %2664 = vmatprep.subr.mxu0 0.0
    %2665 = vmatpush1.msra.mxu0 0.0
    %2666 = vmatprep.subr.mxu0 0.0
    %2667 = vmatpush1.msra.mxu0 0.0
    %2668 = vmatprep.subr.mxu0 0.0
    %2669 = vmatpush1.msra.mxu0 0.0
    %2670 = vmatprep.subr.mxu0 0.0
    %2671 = vmatpush1.msra.mxu0 0.0
    %2672 = vmatprep.subr.mxu0 0.0
    %2673 = vmatpush1.msra.mxu0 0.0
    %2674 = vmatprep.subr.mxu0 0.0
    %2675 = vmatpush1.msra.mxu0 0.0
    %2676 = vmatprep.subr.mxu0 0.0
    %2677 = vmatpush1.msra.mxu0 0.0
    %2678 = vmatprep.subr.mxu0 0.0
    %2679 = vmatpush1.msra.mxu0 0.0
    %2680 = vmatprep.subr.mxu0 0.0
    %2681 = vmatpush1.msra.mxu0 0.0
    %2682 = vmatprep.subr.mxu0 0.0
    %2683 = vmatpush1.msra.mxu0 0.0
    %2684 = vmatprep.subr.mxu0 0.0
    %2685 = vmatpush1.msra.mxu0 0.0
    %2686 = vmatprep.subr.mxu0 0.0
    %2687 = vmatpush1.msra.mxu0 0.0
    %2688 = vmatprep.mubr.f32.mxu0 0.0
    %2689 = vmatmul.mubr.f32.gmra.mrb[0].mxu0 %v2619
    %v2690 = vpop.f32.mrb[0].mxu0
    %v2691 = vadd.f32 0.0, %v2690
    %v2692 = vpop.f32.mrb[0].mxu0
    %v2693 = vadd.f32 0.0, %v2692
    %2694 = vmatprep.mubr.f32.mxu0 0.0
    %2695 = vmatmul.mubr.f32.gmra.mrb[0].mxu0 %v2622
    %v2696 = vpop.f32.mrb[0].mxu0
    %v2697 = vadd.f32 0.0, %v2696
    %v2698 = vpop.f32.mrb[0].mxu0
    %v2699 = vadd.f32 0.0, %v2698
    %2700 = vdwg.mxu0
    %2701 = vmatprep.subr.mxu0 0.0
    %2702 = vmatpush1.msra.mxu0 %v1769
    %2703 = vmatprep.subr.mxu0 0.0
    %2704 = vmatpush1.msra.mxu0 %v1772
    %2705 = vmatprep.subr.mxu0 0.0
    %2706 = vmatpush1.msra.mxu0 %v1775
    %2707 = vmatprep.subr.mxu0 0.0
    %2708 = vmatpush1.msra.mxu0 %v1778
    %2709 = vmatprep.subr.mxu0 0.0
    %2710 = vmatpush1.msra.mxu0 %v1799
    %2711 = vmatprep.subr.mxu0 0.0
    %2712 = vmatpush1.msra.mxu0 0.0
    %2713 = vmatprep.subr.mxu0 0.0
    %2714 = vmatpush1.msra.mxu0 0.0
    %2715 = vmatprep.subr.mxu0 0.0
    %2716 = vmatpush1.msra.mxu0 0.0
    %2717 = vmatprep.subr.mxu0 0.0
    %2718 = vmatpush1.msra.mxu0 0.0
    %2719 = vmatprep.subr.mxu0 0.0
    %2720 = vmatpush1.msra.mxu0 0.0
    %2721 = vmatprep.subr.mxu0 0.0
    %2722 = vmatpush1.msra.mxu0 0.0
    %2723 = vmatprep.subr.mxu0 0.0
    %2724 = vmatpush1.msra.mxu0 0.0
    %2725 = vmatprep.subr.mxu0 0.0
    %2726 = vmatpush1.msra.mxu0 0.0
    %2727 = vmatprep.subr.mxu0 0.0
    %2728 = vmatpush1.msra.mxu0 0.0
    %2729 = vmatprep.subr.mxu0 0.0
    %2730 = vmatpush1.msra.mxu0 0.0
    %2731 = vmatprep.subr.mxu0 0.0
    %2732 = vmatpush1.msra.mxu0 0.0
    %2733 = vmatprep.subr.mxu0 0.0
    %2734 = vmatpush1.msra.mxu0 0.0
    %2735 = vmatprep.subr.mxu0 0.0
    %2736 = vmatpush1.msra.mxu0 0.0
    %2737 = vmatprep.subr.mxu0 0.0
    %2738 = vmatpush1.msra.mxu0 0.0
    %2739 = vmatprep.subr.mxu0 0.0
    %2740 = vmatpush1.msra.mxu0 0.0
    %2741 = vmatprep.subr.mxu0 0.0
    %2742 = vmatpush1.msra.mxu0 0.0
    %2743 = vmatprep.subr.mxu0 0.0
    %2744 = vmatpush1.msra.mxu0 0.0
    %2745 = vmatprep.subr.mxu0 0.0
    %2746 = vmatpush1.msra.mxu0 0.0
    %2747 = vmatprep.subr.mxu0 0.0
    %2748 = vmatpush1.msra.mxu0 0.0
    %2749 = vmatprep.subr.mxu0 0.0
    %2750 = vmatpush1.msra.mxu0 0.0
    %2751 = vmatprep.subr.mxu0 0.0
    %2752 = vmatpush1.msra.mxu0 0.0
    %2753 = vmatprep.subr.mxu0 0.0
    %2754 = vmatpush1.msra.mxu0 0.0
    %2755 = vmatprep.subr.mxu0 0.0
    %2756 = vmatpush1.msra.mxu0 0.0
    %2757 = vmatprep.subr.mxu0 0.0
    %2758 = vmatpush1.msra.mxu0 0.0
    %2759 = vmatprep.subr.mxu0 0.0
    %2760 = vmatpush1.msra.mxu0 0.0
    %2761 = vmatprep.subr.mxu0 0.0
    %2762 = vmatpush1.msra.mxu0 0.0
    %2763 = vmatprep.subr.mxu0 0.0
    %2764 = vmatpush1.msra.mxu0 0.0
    %2765 = vmatprep.mubr.f32.mxu0 0.0
    %2766 = vmatmul.mubr.f32.gmra.mrb[0].mxu0 %v2619
    %v2767 = vpop.f32.mrb[0].mxu0
    %v2768 = vadd.f32 0.0, %v2767
    %v2769 = vpop.f32.mrb[0].mxu0
    %2770 = vmatprep.mubr.f32.mxu0 0.0
    %2771 = vmatmul.mubr.f32.gmra.mrb[0].mxu0 %v2622
    %v2772 = vpop.f32.mrb[0].mxu0
    %v2773 = vadd.f32 0.0, %v2772
    %v2774 = vpop.f32.mrb[0].mxu0
    %2775 = vdwg.mxu0
    %s2776 = scalar_lea.vmem %s4, 1536
    %v2777 = vld [vmem:[%s2776] sm:$0xff]
    %v2778 = vld [vmem:[%s2776 + $0x8] sm:$0xff]
    %v2779 = vld [vmem:[%s2776 + $0x10] sm:$0xff]
    %v2780 = vld [vmem:[%s2776 + $0x18] sm:$0xff]
    %v2781 = vld [vmem:[%s2776 + $0x20] sm:$0xff]
    %v2782 = vld [vmem:[%s2776 + $0x28] sm:$0xff]
    %v2783 = vld [vmem:[%s2776 + $0x30] sm:$0xff]
    %v2784 = vld [vmem:[%s2776 + $0x38] sm:$0xff]
    %v2785 = vld [vmem:[%s2776 + $0x40] sm:$0xff]
    %v2786 = vld [vmem:[%s2776 + $0x48] sm:$0xff]
    %v2787 = vld [vmem:[%s2776 + $0x50] sm:$0xff]
    %v2788 = vld [vmem:[%s2776 + $0x58] sm:$0xff]
    %v2789 = vld [vmem:[%s2776 + $0x60] sm:$0xff]
    %v2790 = vld [vmem:[%s2776 + $0x68] sm:$0xff]
    %v2791 = vld [vmem:[%s2776 + $0x70] sm:$0xff]
    %v2792 = vld [vmem:[%s2776 + $0x78] sm:$0xff]
    %v2793 = vld [vmem:[%s2776 + $0x80] sm:$0xff]
    %v2794 = vld [vmem:[%s2776 + $0x88] sm:$0xff]
    %v2795 = vld [vmem:[%s2776 + $0x90] sm:$0xff]
    %v2796 = vld [vmem:[%s2776 + $0x98] sm:$0xff]
    %v2797 = vld [vmem:[%s2776 + $0xa0] sm:$0xff]
    %v2798 = vld [vmem:[%s2776 + $0xa8] sm:$0xff]
    %v2799 = vld [vmem:[%s2776 + $0xb0] sm:$0xff]
    %v2800 = vld [vmem:[%s2776 + $0xb8] sm:$0xff]
    %v2801 = vld [vmem:[%s2776 + $0xc0] sm:$0xff]
    %v2802 = vld [vmem:[%s2776 + $0xc8] sm:$0xff]
    %v2803 = vld [vmem:[%s2776 + $0xd0] sm:$0xff]
    %v2804 = vld [vmem:[%s2776 + $0xd8] sm:$0xff]
    %v2805 = vld [vmem:[%s2776 + $0xe0] sm:$0xff]
    %v2806 = vld [vmem:[%s2776 + $0xe8] sm:$0xff]
    %v2807 = vld [vmem:[%s2776 + $0xf0] sm:$0xff]
    %v2808 = vld [vmem:[%s2776 + $0xf8] sm:$0xff]
    %v2809 = vld [vmem:[%s2776 + $0x100] sm:$0xff]
    %v2810 = vld [vmem:[%s2776 + $0x108] sm:$0xff]
    %v2811 = vld [vmem:[%s2776 + $0x110] sm:$0xff]
    %v2812 = vld [vmem:[%s2776 + $0x118] sm:$0xff]
    %v2813 = vld [vmem:[%s2776 + $0x120] sm:$0xff]
    %v2814 = vld [vmem:[%s2776 + $0x128] sm:$0xff]
    %v2815 = vld [vmem:[%s2776 + $0x130] sm:$0xff]
    %v2816 = vld [vmem:[%s2776 + $0x138] sm:$0xff]
    %v2817 = vld [vmem:[%s2776 + $0x140] sm:$0xff]
    %v2818 = vld [vmem:[%s2776 + $0x148] sm:$0xff]
    %v2819 = vld [vmem:[%s2776 + $0x150] sm:$0xff]
    %v2820 = vld [vmem:[%s2776 + $0x158] sm:$0xff]
    %v2821 = vld [vmem:[%s2776 + $0x160] sm:$0xff]
    %v2822 = vld [vmem:[%s2776 + $0x168] sm:$0xff]
    %v2823 = vld [vmem:[%s2776 + $0x170] sm:$0xff]
    %v2824 = vld [vmem:[%s2776 + $0x178] sm:$0xff]
    %v2825 = vld [vmem:[%s2776 + $0x180] sm:$0xff]
    %v2826 = vld [vmem:[%s2776 + $0x188] sm:$0xff]
    %v2827 = vld [vmem:[%s2776 + $0x190] sm:$0xff]
    %v2828 = vld [vmem:[%s2776 + $0x198] sm:$0xff]
    %v2829 = vld [vmem:[%s2776 + $0x1a0] sm:$0xff]
    %v2830 = vld [vmem:[%s2776 + $0x1a8] sm:$0xff]
    %v2831 = vld [vmem:[%s2776 + $0x1b0] sm:$0xff]
    %v2832 = vld [vmem:[%s2776 + $0x1b8] sm:$0xff]
    %v2833 = vld [vmem:[%s2776 + $0x1c0] sm:$0xff]
    %v2834 = vld [vmem:[%s2776 + $0x1c8] sm:$0xff]
    %v2835 = vld [vmem:[%s2776 + $0x1d0] sm:$0xff]
    %v2836 = vld [vmem:[%s2776 + $0x1d8] sm:$0xff]
    %v2837 = vld [vmem:[%s2776 + $0x1e0] sm:$0xff]
    %v2838 = vld [vmem:[%s2776 + $0x1e8] sm:$0xff]
    %v2839 = vld [vmem:[%s2776 + $0x1f0] sm:$0xff]
    %v2840 = vld [vmem:[%s2776 + $0x1f8] sm:$0xff]
    %v2841 = vld [vmem:[%s2776 + $0x200] sm:$0xff]
    %v2842 = vld [vmem:[%s2776 + $0x208] sm:$0xff]
    %v2843 = vld [vmem:[%s2776 + $0x210] sm:$0xff]
    %v2844 = vld [vmem:[%s2776 + $0x218] sm:$0xff]
    %v2845 = vld [vmem:[%s2776 + $0x220] sm:$0xff]
    %v2846 = vld [vmem:[%s2776 + $0x228] sm:$0xff]
    %v2847 = vld [vmem:[%s2776 + $0x230] sm:$0xff]
    %v2848 = vld [vmem:[%s2776 + $0x238] sm:$0xff]
    %v2849 = vld [vmem:[%s2776 + $0x240] sm:$0xff]
    %v2850 = vld [vmem:[%s2776 + $0x248] sm:$0xff]
    %v2851 = vld [vmem:[%s2776 + $0x250] sm:$0xff]
    %v2852 = vld [vmem:[%s2776 + $0x258] sm:$0xff]
    %v2853 = vld [vmem:[%s2776 + $0x260] sm:$0xff]
    %v2854 = vld [vmem:[%s2776 + $0x268] sm:$0xff]
    %v2855 = vld [vmem:[%s2776 + $0x270] sm:$0xff]
    %v2856 = vld [vmem:[%s2776 + $0x278] sm:$0xff]
    %v2857 = vld [vmem:[%s2776 + $0x280] sm:$0xff]
    %v2858 = vld [vmem:[%s2776 + $0x288] sm:$0xff]
    %v2859 = vld [vmem:[%s2776 + $0x290] sm:$0xff]
    %v2860 = vld [vmem:[%s2776 + $0x298] sm:$0xff]
    %v2861 = vld [vmem:[%s2776 + $0x2a0] sm:$0xff]
    %v2862 = vld [vmem:[%s2776 + $0x2a8] sm:$0xff]
    %v2863 = vld [vmem:[%s2776 + $0x2b0] sm:$0xff]
    %v2864 = vld [vmem:[%s2776 + $0x2b8] sm:$0xff]
    %v2865 = vld [vmem:[%s2776 + $0x2c0] sm:$0xff]
    %v2866 = vld [vmem:[%s2776 + $0x2c8] sm:$0xff]
    %v2867 = vld [vmem:[%s2776 + $0x2d0] sm:$0xff]
    %v2868 = vld [vmem:[%s2776 + $0x2d8] sm:$0xff]
    %v2869 = vld [vmem:[%s2776 + $0x2e0] sm:$0xff]
    %v2870 = vld [vmem:[%s2776 + $0x2e8] sm:$0xff]
    %v2871 = vld [vmem:[%s2776 + $0x2f0] sm:$0xff]
    %v2872 = vld [vmem:[%s2776 + $0x2f8] sm:$0xff]
    %2873 = vmatprep.subr.mxu0 %v2778
    %2874 = vmatpush1.msra.mxu0 %v2777
    %2875 = vmatprep.subr.mxu0 %v2780
    %2876 = vmatpush1.msra.mxu0 %v2779
    %2877 = vmatprep.subr.mxu0 %v2782
    %2878 = vmatpush1.msra.mxu0 %v2781
    %2879 = vmatprep.subr.mxu0 %v2784
    %2880 = vmatpush1.msra.mxu0 %v2783
    %2881 = vmatprep.subr.mxu0 %v2786
    %2882 = vmatpush1.msra.mxu0 %v2785
    %2883 = vmatprep.subr.mxu0 %v2788
    %2884 = vmatpush1.msra.mxu0 %v2787
    %2885 = vmatprep.subr.mxu0 %v2790
    %2886 = vmatpush1.msra.mxu0 %v2789
    %2887 = vmatprep.subr.mxu0 %v2792
    %2888 = vmatpush1.msra.mxu0 %v2791
    %2889 = vmatprep.subr.mxu0 %v2794
    %2890 = vmatpush1.msra.mxu0 %v2793
    %2891 = vmatprep.subr.mxu0 %v2796
    %2892 = vmatpush1.msra.mxu0 %v2795
    %2893 = vmatprep.subr.mxu0 %v2798
    %2894 = vmatpush1.msra.mxu0 %v2797
    %2895 = vmatprep.subr.mxu0 %v2800
    %2896 = vmatpush1.msra.mxu0 %v2799
    %2897 = vmatprep.subr.mxu0 %v2802
    %2898 = vmatpush1.msra.mxu0 %v2801
    %2899 = vmatprep.subr.mxu0 %v2804
    %2900 = vmatpush1.msra.mxu0 %v2803
    %2901 = vmatprep.subr.mxu0 %v2806
    %2902 = vmatpush1.msra.mxu0 %v2805
    %2903 = vmatprep.subr.mxu0 %v2808
    %2904 = vmatpush1.msra.mxu0 %v2807
    %2905 = vmatprep.subr.mxu0 %v2810
    %2906 = vmatpush1.msra.mxu0 %v2809
    %2907 = vmatprep.subr.mxu0 %v2812
    %2908 = vmatpush1.msra.mxu0 %v2811
    %2909 = vmatprep.subr.mxu0 %v2814
    %2910 = vmatpush1.msra.mxu0 %v2813
    %2911 = vmatprep.subr.mxu0 %v2816
    %2912 = vmatpush1.msra.mxu0 %v2815
    %2913 = vmatprep.subr.mxu0 %v2818
    %2914 = vmatpush1.msra.mxu0 %v2817
    %2915 = vmatprep.subr.mxu0 %v2820
    %2916 = vmatpush1.msra.mxu0 %v2819
    %2917 = vmatprep.subr.mxu0 %v2822
    %2918 = vmatpush1.msra.mxu0 %v2821
    %2919 = vmatprep.subr.mxu0 %v2824
    %2920 = vmatpush1.msra.mxu0 %v2823
    %2921 = vmatprep.subr.mxu0 %v2826
    %2922 = vmatpush1.msra.mxu0 %v2825
    %2923 = vmatprep.subr.mxu0 %v2828
    %2924 = vmatpush1.msra.mxu0 %v2827
    %2925 = vmatprep.subr.mxu0 %v2830
    %2926 = vmatpush1.msra.mxu0 %v2829
    %2927 = vmatprep.subr.mxu0 %v2832
    %2928 = vmatpush1.msra.mxu0 %v2831
    %2929 = vmatprep.subr.mxu0 %v2834
    %2930 = vmatpush1.msra.mxu0 %v2833
    %2931 = vmatprep.subr.mxu0 %v2836
    %2932 = vmatpush1.msra.mxu0 %v2835
    %2933 = vmatprep.subr.mxu0 %v2838
    %2934 = vmatpush1.msra.mxu0 %v2837
    %2935 = vmatprep.subr.mxu0 %v2840
    %2936 = vmatpush1.msra.mxu0 %v2839
    %2937 = vmatprep.mubr.f32.mxu0 %v2693
    %2938 = vmatmul.mubr.f32.gmra.mrb[0].mxu0 %v2691
    %v2939 = vpop.f32.mrb[0].mxu0
    %v2940 = vadd.f32 0.0, %v2939
    %v2941 = vpop.f32.mrb[0].mxu0
    %v2942 = vadd.f32 0.0, %v2941
    %2943 = vmatprep.mubr.f32.mxu0 %v2699
    %2944 = vmatmul.mubr.f32.gmra.mrb[0].mxu0 %v2697
    %v2945 = vpop.f32.mrb[0].mxu0
    %v2946 = vadd.f32 0.0, %v2945
    %v2947 = vpop.f32.mrb[0].mxu0
    %v2948 = vadd.f32 0.0, %v2947
    %2949 = vdwg.mxu0
    %2950 = vmatprep.subr.mxu0 %v2842
    %2951 = vmatpush1.msra.mxu0 %v2841
    %2952 = vmatprep.subr.mxu0 %v2844
    %2953 = vmatpush1.msra.mxu0 %v2843
    %2954 = vmatprep.subr.mxu0 %v2846
    %2955 = vmatpush1.msra.mxu0 %v2845
    %2956 = vmatprep.subr.mxu0 %v2848
    %2957 = vmatpush1.msra.mxu0 %v2847
    %2958 = vmatprep.subr.mxu0 %v2850
    %2959 = vmatpush1.msra.mxu0 %v2849
    %2960 = vmatprep.subr.mxu0 %v2852
    %2961 = vmatpush1.msra.mxu0 %v2851
    %2962 = vmatprep.subr.mxu0 %v2854
    %2963 = vmatpush1.msra.mxu0 %v2853
    %2964 = vmatprep.subr.mxu0 %v2856
    %2965 = vmatpush1.msra.mxu0 %v2855
    %2966 = vmatprep.subr.mxu0 %v2858
    %2967 = vmatpush1.msra.mxu0 %v2857
    %2968 = vmatprep.subr.mxu0 %v2860
    %2969 = vmatpush1.msra.mxu0 %v2859
    %2970 = vmatprep.subr.mxu0 %v2862
    %2971 = vmatpush1.msra.mxu0 %v2861
    %2972 = vmatprep.subr.mxu0 %v2864
    %2973 = vmatpush1.msra.mxu0 %v2863
    %2974 = vmatprep.subr.mxu0 %v2866
    %2975 = vmatpush1.msra.mxu0 %v2865
    %2976 = vmatprep.subr.mxu0 %v2868
    %2977 = vmatpush1.msra.mxu0 %v2867
    %2978 = vmatprep.subr.mxu0 %v2870
    %2979 = vmatpush1.msra.mxu0 %v2869
    %2980 = vmatprep.subr.mxu0 %v2872
    %2981 = vmatpush1.msra.mxu0 %v2871
    %2982 = vmatprep.subr.mxu0 0.0
    %2983 = vmatpush1.msra.mxu0 0.0
    %2984 = vmatprep.subr.mxu0 0.0
    %2985 = vmatpush1.msra.mxu0 0.0
    %2986 = vmatprep.subr.mxu0 0.0
    %2987 = vmatpush1.msra.mxu0 0.0
    %2988 = vmatprep.subr.mxu0 0.0
    %2989 = vmatpush1.msra.mxu0 0.0
    %2990 = vmatprep.subr.mxu0 0.0
    %2991 = vmatpush1.msra.mxu0 0.0
    %2992 = vmatprep.subr.mxu0 0.0
    %2993 = vmatpush1.msra.mxu0 0.0
    %2994 = vmatprep.subr.mxu0 0.0
    %2995 = vmatpush1.msra.mxu0 0.0
    %2996 = vmatprep.subr.mxu0 0.0
    %2997 = vmatpush1.msra.mxu0 0.0
    %2998 = vmatprep.subr.mxu0 0.0
    %2999 = vmatpush1.msra.mxu0 0.0
    %3000 = vmatprep.subr.mxu0 0.0
    %3001 = vmatpush1.msra.mxu0 0.0
    %3002 = vmatprep.subr.mxu0 0.0
    %3003 = vmatpush1.msra.mxu0 0.0
    %3004 = vmatprep.subr.mxu0 0.0
    %3005 = vmatpush1.msra.mxu0 0.0
    %3006 = vmatprep.subr.mxu0 0.0
    %3007 = vmatpush1.msra.mxu0 0.0
    %3008 = vmatprep.subr.mxu0 0.0
    %3009 = vmatpush1.msra.mxu0 0.0
    %3010 = vmatprep.subr.mxu0 0.0
    %3011 = vmatpush1.msra.mxu0 0.0
    %3012 = vmatprep.subr.mxu0 0.0
    %3013 = vmatpush1.msra.mxu0 0.0
    %3014 = vmatprep.mubr.f32.mxu0 0.0
    %3015 = vmatmul.mubr.f32.gmra.mrb[0].mxu0 %v2768
    %v3016 = vpop.f32.mrb[0].mxu0
    %v3017 = vadd.f32 %v2940, %v3016
    %v3018 = vpop.f32.mrb[0].mxu0
    %v3019 = vadd.f32 %v2942, %v3018
    %3020 = vmatprep.mubr.f32.mxu0 0.0
    %3021 = vmatmul.mubr.f32.gmra.mrb[0].mxu0 %v2773
    %v3022 = vpop.f32.mrb[0].mxu0
    %v3023 = vadd.f32 %v2946, %v3022
    %v3024 = vpop.f32.mrb[0].mxu0
    %v3025 = vadd.f32 %v2948, %v3024
    %3026 = vdwg.mxu0
    %v3027 = vadd.f32 %v2605, %v3017
    %v3028 = vadd.f32 %v2607, %v3019
    %v3029 = vadd.f32 %v2611, %v3023
    %v3030 = vadd.f32 %v2613, %v3025
    %s3031 = scalar_lea.vmem %s5, 48
    %v3032 = vld [vmem:[%s3031] sm:$0xff]
    %v3033 = vld [vmem:[%s3031 + $0x8] sm:$0x3f]
    %v3035 = vsel %vm1784, %v3032, 0
    %v3038 = vsel %vm1784, %v3033, 0
    %3040 = vmatprep.subr.mxu0 %v1768
    %3041 = vmatpush1.msra.mxu0 %v1767
    %3042 = vmatprep.subr.mxu0 %v1771
    %3043 = vmatpush1.msra.mxu0 %v1770
    %3044 = vmatprep.subr.mxu0 %v1774
    %3045 = vmatpush1.msra.mxu0 %v1773
    %3046 = vmatprep.subr.mxu0 %v1777
    %3047 = vmatpush1.msra.mxu0 %v1776
    %3048 = vmatprep.subr.mxu0 %v1796
    %3049 = vmatpush1.msra.mxu0 %v1793
    %3050 = vmatprep.subr.mxu0 0.0
    %3051 = vmatpush1.msra.mxu0 0.0
    %3052 = vmatprep.subr.mxu0 0.0
    %3053 = vmatpush1.msra.mxu0 0.0
    %3054 = vmatprep.subr.mxu0 0.0
    %3055 = vmatpush1.msra.mxu0 0.0
    %3056 = vmatprep.subr.mxu0 0.0
    %3057 = vmatpush1.msra.mxu0 0.0
    %3058 = vmatprep.subr.mxu0 0.0
    %3059 = vmatpush1.msra.mxu0 0.0
    %3060 = vmatprep.subr.mxu0 0.0
    %3061 = vmatpush1.msra.mxu0 0.0
    %3062 = vmatprep.subr.mxu0 0.0
    %3063 = vmatpush1.msra.mxu0 0.0
    %3064 = vmatprep.subr.mxu0 0.0
    %3065 = vmatpush1.msra.mxu0 0.0
    %3066 = vmatprep.subr.mxu0 0.0
    %3067 = vmatpush1.msra.mxu0 0.0
    %3068 = vmatprep.subr.mxu0 0.0
    %3069 = vmatpush1.msra.mxu0 0.0
    %3070 = vmatprep.subr.mxu0 0.0
    %3071 = vmatpush1.msra.mxu0 0.0
    %3072 = vmatprep.subr.mxu0 0.0
    %3073 = vmatpush1.msra.mxu0 0.0
    %3074 = vmatprep.subr.mxu0 0.0
    %3075 = vmatpush1.msra.mxu0 0.0
    %3076 = vmatprep.subr.mxu0 0.0
    %3077 = vmatpush1.msra.mxu0 0.0
    %3078 = vmatprep.subr.mxu0 0.0
    %3079 = vmatpush1.msra.mxu0 0.0
    %3080 = vmatprep.subr.mxu0 0.0
    %3081 = vmatpush1.msra.mxu0 0.0
    %3082 = vmatprep.subr.mxu0 0.0
    %3083 = vmatpush1.msra.mxu0 0.0
    %3084 = vmatprep.subr.mxu0 0.0
    %3085 = vmatpush1.msra.mxu0 0.0
    %3086 = vmatprep.subr.mxu0 0.0
    %3087 = vmatpush1.msra.mxu0 0.0
    %3088 = vmatprep.subr.mxu0 0.0
    %3089 = vmatpush1.msra.mxu0 0.0
    %3090 = vmatprep.subr.mxu0 0.0
    %3091 = vmatpush1.msra.mxu0 0.0
    %3092 = vmatprep.subr.mxu0 0.0
    %3093 = vmatpush1.msra.mxu0 0.0
    %3094 = vmatprep.subr.mxu0 0.0
    %3095 = vmatpush1.msra.mxu0 0.0
    %3096 = vmatprep.subr.mxu0 0.0
    %3097 = vmatpush1.msra.mxu0 0.0
    %3098 = vmatprep.subr.mxu0 0.0
    %3099 = vmatpush1.msra.mxu0 0.0
    %3100 = vmatprep.subr.mxu0 0.0
    %3101 = vmatpush1.msra.mxu0 0.0
    %3102 = vmatprep.subr.mxu0 0.0
    %3103 = vmatpush1.msra.mxu0 0.0
    %3104 = vmatprep.mubr.f32.mxu0 0.0
    %3105 = vmatmul.mubr.f32.gmra.mrb[0].mxu0 %v3035
    %v3106 = vpop.f32.mrb[0].mxu0
    %v3107 = vadd.f32 0.0, %v3106
    %v3108 = vpop.f32.mrb[0].mxu0
    %v3109 = vadd.f32 0.0, %v3108
    %3110 = vmatprep.mubr.f32.mxu0 0.0
    %3111 = vmatmul.mubr.f32.gmra.mrb[0].mxu0 %v3038
    %v3112 = vpop.f32.mrb[0].mxu0
    %v3113 = vadd.f32 0.0, %v3112
    %v3114 = vpop.f32.mrb[0].mxu0
    %v3115 = vadd.f32 0.0, %v3114
    %3116 = vdwg.mxu0
    %3117 = vmatprep.subr.mxu0 0.0
    %3118 = vmatpush1.msra.mxu0 %v1769
    %3119 = vmatprep.subr.mxu0 0.0
    %3120 = vmatpush1.msra.mxu0 %v1772
    %3121 = vmatprep.subr.mxu0 0.0
    %3122 = vmatpush1.msra.mxu0 %v1775
    %3123 = vmatprep.subr.mxu0 0.0
    %3124 = vmatpush1.msra.mxu0 %v1778
    %3125 = vmatprep.subr.mxu0 0.0
    %3126 = vmatpush1.msra.mxu0 %v1799
    %3127 = vmatprep.subr.mxu0 0.0
    %3128 = vmatpush1.msra.mxu0 0.0
    %3129 = vmatprep.subr.mxu0 0.0
    %3130 = vmatpush1.msra.mxu0 0.0
    %3131 = vmatprep.subr.mxu0 0.0
    %3132 = vmatpush1.msra.mxu0 0.0
    %3133 = vmatprep.subr.mxu0 0.0
    %3134 = vmatpush1.msra.mxu0 0.0
    %3135 = vmatprep.subr.mxu0 0.0
    %3136 = vmatpush1.msra.mxu0 0.0
    %3137 = vmatprep.subr.mxu0 0.0
    %3138 = vmatpush1.msra.mxu0 0.0
    %3139 = vmatprep.subr.mxu0 0.0
    %3140 = vmatpush1.msra.mxu0 0.0
    %3141 = vmatprep.subr.mxu0 0.0
    %3142 = vmatpush1.msra.mxu0 0.0
    %3143 = vmatprep.subr.mxu0 0.0
    %3144 = vmatpush1.msra.mxu0 0.0
    %3145 = vmatprep.subr.mxu0 0.0
    %3146 = vmatpush1.msra.mxu0 0.0
    %3147 = vmatprep.subr.mxu0 0.0
    %3148 = vmatpush1.msra.mxu0 0.0
    %3149 = vmatprep.subr.mxu0 0.0
    %3150 = vmatpush1.msra.mxu0 0.0
    %3151 = vmatprep.subr.mxu0 0.0
    %3152 = vmatpush1.msra.mxu0 0.0
    %3153 = vmatprep.subr.mxu0 0.0
    %3154 = vmatpush1.msra.mxu0 0.0
    %3155 = vmatprep.subr.mxu0 0.0
    %3156 = vmatpush1.msra.mxu0 0.0
    %3157 = vmatprep.subr.mxu0 0.0
    %3158 = vmatpush1.msra.mxu0 0.0
    %3159 = vmatprep.subr.mxu0 0.0
    %3160 = vmatpush1.msra.mxu0 0.0
    %3161 = vmatprep.subr.mxu0 0.0
    %3162 = vmatpush1.msra.mxu0 0.0
    %3163 = vmatprep.subr.mxu0 0.0
    %3164 = vmatpush1.msra.mxu0 0.0
    %3165 = vmatprep.subr.mxu0 0.0
    %3166 = vmatpush1.msra.mxu0 0.0
    %3167 = vmatprep.subr.mxu0 0.0
    %3168 = vmatpush1.msra.mxu0 0.0
    %3169 = vmatprep.subr.mxu0 0.0
    %3170 = vmatpush1.msra.mxu0 0.0
    %3171 = vmatprep.subr.mxu0 0.0
    %3172 = vmatpush1.msra.mxu0 0.0
    %3173 = vmatprep.subr.mxu0 0.0
    %3174 = vmatpush1.msra.mxu0 0.0
    %3175 = vmatprep.subr.mxu0 0.0
    %3176 = vmatpush1.msra.mxu0 0.0
    %3177 = vmatprep.subr.mxu0 0.0
    %3178 = vmatpush1.msra.mxu0 0.0
    %3179 = vmatprep.subr.mxu0 0.0
    %3180 = vmatpush1.msra.mxu0 0.0
    %3181 = vmatprep.mubr.f32.mxu0 0.0
    %3182 = vmatmul.mubr.f32.gmra.mrb[0].mxu0 %v3035
    %v3183 = vpop.f32.mrb[0].mxu0
    %v3184 = vadd.f32 0.0, %v3183
    %v3185 = vpop.f32.mrb[0].mxu0
    %3186 = vmatprep.mubr.f32.mxu0 0.0
    %3187 = vmatmul.mubr.f32.gmra.mrb[0].mxu0 %v3038
    %v3188 = vpop.f32.mrb[0].mxu0
    %v3189 = vadd.f32 0.0, %v3188
    %v3190 = vpop.f32.mrb[0].mxu0
    %3191 = vdwg.mxu0
    %s3192 = scalar_lea.vmem %s4, 2304
    %v3193 = vld [vmem:[%s3192] sm:$0xff]
    %v3194 = vld [vmem:[%s3192 + $0x8] sm:$0xff]
    %v3195 = vld [vmem:[%s3192 + $0x10] sm:$0xff]
    %v3196 = vld [vmem:[%s3192 + $0x18] sm:$0xff]
    %v3197 = vld [vmem:[%s3192 + $0x20] sm:$0xff]
    %v3198 = vld [vmem:[%s3192 + $0x28] sm:$0xff]
    %v3199 = vld [vmem:[%s3192 + $0x30] sm:$0xff]
    %v3200 = vld [vmem:[%s3192 + $0x38] sm:$0xff]
    %v3201 = vld [vmem:[%s3192 + $0x40] sm:$0xff]
    %v3202 = vld [vmem:[%s3192 + $0x48] sm:$0xff]
    %v3203 = vld [vmem:[%s3192 + $0x50] sm:$0xff]
    %v3204 = vld [vmem:[%s3192 + $0x58] sm:$0xff]
    %v3205 = vld [vmem:[%s3192 + $0x60] sm:$0xff]
    %v3206 = vld [vmem:[%s3192 + $0x68] sm:$0xff]
    %v3207 = vld [vmem:[%s3192 + $0x70] sm:$0xff]
    %v3208 = vld [vmem:[%s3192 + $0x78] sm:$0xff]
    %v3209 = vld [vmem:[%s3192 + $0x80] sm:$0xff]
    %v3210 = vld [vmem:[%s3192 + $0x88] sm:$0xff]
    %v3211 = vld [vmem:[%s3192 + $0x90] sm:$0xff]
    %v3212 = vld [vmem:[%s3192 + $0x98] sm:$0xff]
    %v3213 = vld [vmem:[%s3192 + $0xa0] sm:$0xff]
    %v3214 = vld [vmem:[%s3192 + $0xa8] sm:$0xff]
    %v3215 = vld [vmem:[%s3192 + $0xb0] sm:$0xff]
    %v3216 = vld [vmem:[%s3192 + $0xb8] sm:$0xff]
    %v3217 = vld [vmem:[%s3192 + $0xc0] sm:$0xff]
    %v3218 = vld [vmem:[%s3192 + $0xc8] sm:$0xff]
    %v3219 = vld [vmem:[%s3192 + $0xd0] sm:$0xff]
    %v3220 = vld [vmem:[%s3192 + $0xd8] sm:$0xff]
    %v3221 = vld [vmem:[%s3192 + $0xe0] sm:$0xff]
    %v3222 = vld [vmem:[%s3192 + $0xe8] sm:$0xff]
    %v3223 = vld [vmem:[%s3192 + $0xf0] sm:$0xff]
    %v3224 = vld [vmem:[%s3192 + $0xf8] sm:$0xff]
    %v3225 = vld [vmem:[%s3192 + $0x100] sm:$0xff]
    %v3226 = vld [vmem:[%s3192 + $0x108] sm:$0xff]
    %v3227 = vld [vmem:[%s3192 + $0x110] sm:$0xff]
    %v3228 = vld [vmem:[%s3192 + $0x118] sm:$0xff]
    %v3229 = vld [vmem:[%s3192 + $0x120] sm:$0xff]
    %v3230 = vld [vmem:[%s3192 + $0x128] sm:$0xff]
    %v3231 = vld [vmem:[%s3192 + $0x130] sm:$0xff]
    %v3232 = vld [vmem:[%s3192 + $0x138] sm:$0xff]
    %v3233 = vld [vmem:[%s3192 + $0x140] sm:$0xff]
    %v3234 = vld [vmem:[%s3192 + $0x148] sm:$0xff]
    %v3235 = vld [vmem:[%s3192 + $0x150] sm:$0xff]
    %v3236 = vld [vmem:[%s3192 + $0x158] sm:$0xff]
    %v3237 = vld [vmem:[%s3192 + $0x160] sm:$0xff]
    %v3238 = vld [vmem:[%s3192 + $0x168] sm:$0xff]
    %v3239 = vld [vmem:[%s3192 + $0x170] sm:$0xff]
    %v3240 = vld [vmem:[%s3192 + $0x178] sm:$0xff]
    %v3241 = vld [vmem:[%s3192 + $0x180] sm:$0xff]
    %v3242 = vld [vmem:[%s3192 + $0x188] sm:$0xff]
    %v3243 = vld [vmem:[%s3192 + $0x190] sm:$0xff]
    %v3244 = vld [vmem:[%s3192 + $0x198] sm:$0xff]
    %v3245 = vld [vmem:[%s3192 + $0x1a0] sm:$0xff]
    %v3246 = vld [vmem:[%s3192 + $0x1a8] sm:$0xff]
    %v3247 = vld [vmem:[%s3192 + $0x1b0] sm:$0xff]
    %v3248 = vld [vmem:[%s3192 + $0x1b8] sm:$0xff]
    %v3249 = vld [vmem:[%s3192 + $0x1c0] sm:$0xff]
    %v3250 = vld [vmem:[%s3192 + $0x1c8] sm:$0xff]
    %v3251 = vld [vmem:[%s3192 + $0x1d0] sm:$0xff]
    %v3252 = vld [vmem:[%s3192 + $0x1d8] sm:$0xff]
    %v3253 = vld [vmem:[%s3192 + $0x1e0] sm:$0xff]
    %v3254 = vld [vmem:[%s3192 + $0x1e8] sm:$0xff]
    %v3255 = vld [vmem:[%s3192 + $0x1f0] sm:$0xff]
    %v3256 = vld [vmem:[%s3192 + $0x1f8] sm:$0xff]
    %v3257 = vld [vmem:[%s3192 + $0x200] sm:$0xff]
    %v3258 = vld [vmem:[%s3192 + $0x208] sm:$0xff]
    %v3259 = vld [vmem:[%s3192 + $0x210] sm:$0xff]
    %v3260 = vld [vmem:[%s3192 + $0x218] sm:$0xff]
    %v3261 = vld [vmem:[%s3192 + $0x220] sm:$0xff]
    %v3262 = vld [vmem:[%s3192 + $0x228] sm:$0xff]
    %v3263 = vld [vmem:[%s3192 + $0x230] sm:$0xff]
    %v3264 = vld [vmem:[%s3192 + $0x238] sm:$0xff]
    %v3265 = vld [vmem:[%s3192 + $0x240] sm:$0xff]
    %v3266 = vld [vmem:[%s3192 + $0x248] sm:$0xff]
    %v3267 = vld [vmem:[%s3192 + $0x250] sm:$0xff]
    %v3268 = vld [vmem:[%s3192 + $0x258] sm:$0xff]
    %v3269 = vld [vmem:[%s3192 + $0x260] sm:$0xff]
    %v3270 = vld [vmem:[%s3192 + $0x268] sm:$0xff]
    %v3271 = vld [vmem:[%s3192 + $0x270] sm:$0xff]
    %v3272 = vld [vmem:[%s3192 + $0x278] sm:$0xff]
    %v3273 = vld [vmem:[%s3192 + $0x280] sm:$0xff]
    %v3274 = vld [vmem:[%s3192 + $0x288] sm:$0xff]
    %v3275 = vld [vmem:[%s3192 + $0x290] sm:$0xff]
    %v3276 = vld [vmem:[%s3192 + $0x298] sm:$0xff]
    %v3277 = vld [vmem:[%s3192 + $0x2a0] sm:$0xff]
    %v3278 = vld [vmem:[%s3192 + $0x2a8] sm:$0xff]
    %v3279 = vld [vmem:[%s3192 + $0x2b0] sm:$0xff]
    %v3280 = vld [vmem:[%s3192 + $0x2b8] sm:$0xff]
    %v3281 = vld [vmem:[%s3192 + $0x2c0] sm:$0xff]
    %v3282 = vld [vmem:[%s3192 + $0x2c8] sm:$0xff]
    %v3283 = vld [vmem:[%s3192 + $0x2d0] sm:$0xff]
    %v3284 = vld [vmem:[%s3192 + $0x2d8] sm:$0xff]
    %v3285 = vld [vmem:[%s3192 + $0x2e0] sm:$0xff]
    %v3286 = vld [vmem:[%s3192 + $0x2e8] sm:$0xff]
    %v3287 = vld [vmem:[%s3192 + $0x2f0] sm:$0xff]
    %v3288 = vld [vmem:[%s3192 + $0x2f8] sm:$0xff]
    %3289 = vmatprep.subr.mxu0 %v3194
    %3290 = vmatpush1.msra.mxu0 %v3193
    %3291 = vmatprep.subr.mxu0 %v3196
    %3292 = vmatpush1.msra.mxu0 %v3195
    %3293 = vmatprep.subr.mxu0 %v3198
    %3294 = vmatpush1.msra.mxu0 %v3197
    %3295 = vmatprep.subr.mxu0 %v3200
    %3296 = vmatpush1.msra.mxu0 %v3199
    %3297 = vmatprep.subr.mxu0 %v3202
    %3298 = vmatpush1.msra.mxu0 %v3201
    %3299 = vmatprep.subr.mxu0 %v3204
    %3300 = vmatpush1.msra.mxu0 %v3203
    %3301 = vmatprep.subr.mxu0 %v3206
    %3302 = vmatpush1.msra.mxu0 %v3205
    %3303 = vmatprep.subr.mxu0 %v3208
    %3304 = vmatpush1.msra.mxu0 %v3207
    %3305 = vmatprep.subr.mxu0 %v3210
    %3306 = vmatpush1.msra.mxu0 %v3209
    %3307 = vmatprep.subr.mxu0 %v3212
    %3308 = vmatpush1.msra.mxu0 %v3211
    %3309 = vmatprep.subr.mxu0 %v3214
    %3310 = vmatpush1.msra.mxu0 %v3213
    %3311 = vmatprep.subr.mxu0 %v3216
    %3312 = vmatpush1.msra.mxu0 %v3215
    %3313 = vmatprep.subr.mxu0 %v3218
    %3314 = vmatpush1.msra.mxu0 %v3217
    %3315 = vmatprep.subr.mxu0 %v3220
    %3316 = vmatpush1.msra.mxu0 %v3219
    %3317 = vmatprep.subr.mxu0 %v3222
    %3318 = vmatpush1.msra.mxu0 %v3221
    %3319 = vmatprep.subr.mxu0 %v3224
    %3320 = vmatpush1.msra.mxu0 %v3223
    %3321 = vmatprep.subr.mxu0 %v3226
    %3322 = vmatpush1.msra.mxu0 %v3225
    %3323 = vmatprep.subr.mxu0 %v3228
    %3324 = vmatpush1.msra.mxu0 %v3227
    %3325 = vmatprep.subr.mxu0 %v3230
    %3326 = vmatpush1.msra.mxu0 %v3229
    %3327 = vmatprep.subr.mxu0 %v3232
    %3328 = vmatpush1.msra.mxu0 %v3231
    %3329 = vmatprep.subr.mxu0 %v3234
    %3330 = vmatpush1.msra.mxu0 %v3233
    %3331 = vmatprep.subr.mxu0 %v3236
    %3332 = vmatpush1.msra.mxu0 %v3235
    %3333 = vmatprep.subr.mxu0 %v3238
    %3334 = vmatpush1.msra.mxu0 %v3237
    %3335 = vmatprep.subr.mxu0 %v3240
    %3336 = vmatpush1.msra.mxu0 %v3239
    %3337 = vmatprep.subr.mxu0 %v3242
    %3338 = vmatpush1.msra.mxu0 %v3241
    %3339 = vmatprep.subr.mxu0 %v3244
    %3340 = vmatpush1.msra.mxu0 %v3243
    %3341 = vmatprep.subr.mxu0 %v3246
    %3342 = vmatpush1.msra.mxu0 %v3245
    %3343 = vmatprep.subr.mxu0 %v3248
    %3344 = vmatpush1.msra.mxu0 %v3247
    %3345 = vmatprep.subr.mxu0 %v3250
    %3346 = vmatpush1.msra.mxu0 %v3249
    %3347 = vmatprep.subr.mxu0 %v3252
    %3348 = vmatpush1.msra.mxu0 %v3251
    %3349 = vmatprep.subr.mxu0 %v3254
    %3350 = vmatpush1.msra.mxu0 %v3253
    %3351 = vmatprep.subr.mxu0 %v3256
    %3352 = vmatpush1.msra.mxu0 %v3255
    %3353 = vmatprep.mubr.f32.mxu0 %v3109
    %3354 = vmatmul.mubr.f32.gmra.mrb[0].mxu0 %v3107
    %v3355 = vpop.f32.mrb[0].mxu0
    %v3356 = vadd.f32 0.0, %v3355
    %v3357 = vpop.f32.mrb[0].mxu0
    %v3358 = vadd.f32 0.0, %v3357
    %3359 = vmatprep.mubr.f32.mxu0 %v3115
    %3360 = vmatmul.mubr.f32.gmra.mrb[0].mxu0 %v3113
    %v3361 = vpop.f32.mrb[0].mxu0
    %v3362 = vadd.f32 0.0, %v3361
    %v3363 = vpop.f32.mrb[0].mxu0
    %v3364 = vadd.f32 0.0, %v3363
    %3365 = vdwg.mxu0
    %3366 = vmatprep.subr.mxu0 %v3258
    %3367 = vmatpush1.msra.mxu0 %v3257
    %3368 = vmatprep.subr.mxu0 %v3260
    %3369 = vmatpush1.msra.mxu0 %v3259
    %3370 = vmatprep.subr.mxu0 %v3262
    %3371 = vmatpush1.msra.mxu0 %v3261
    %3372 = vmatprep.subr.mxu0 %v3264
    %3373 = vmatpush1.msra.mxu0 %v3263
    %3374 = vmatprep.subr.mxu0 %v3266
    %3375 = vmatpush1.msra.mxu0 %v3265
    %3376 = vmatprep.subr.mxu0 %v3268
    %3377 = vmatpush1.msra.mxu0 %v3267
    %3378 = vmatprep.subr.mxu0 %v3270
    %3379 = vmatpush1.msra.mxu0 %v3269
    %3380 = vmatprep.subr.mxu0 %v3272
    %3381 = vmatpush1.msra.mxu0 %v3271
    %3382 = vmatprep.subr.mxu0 %v3274
    %3383 = vmatpush1.msra.mxu0 %v3273
    %3384 = vmatprep.subr.mxu0 %v3276
    %3385 = vmatpush1.msra.mxu0 %v3275
    %3386 = vmatprep.subr.mxu0 %v3278
    %3387 = vmatpush1.msra.mxu0 %v3277
    %3388 = vmatprep.subr.mxu0 %v3280
    %3389 = vmatpush1.msra.mxu0 %v3279
    %3390 = vmatprep.subr.mxu0 %v3282
    %3391 = vmatpush1.msra.mxu0 %v3281
    %3392 = vmatprep.subr.mxu0 %v3284
    %3393 = vmatpush1.msra.mxu0 %v3283
    %3394 = vmatprep.subr.mxu0 %v3286
    %3395 = vmatpush1.msra.mxu0 %v3285
    %3396 = vmatprep.subr.mxu0 %v3288
    %3397 = vmatpush1.msra.mxu0 %v3287
    %3398 = vmatprep.subr.mxu0 0.0
    %3399 = vmatpush1.msra.mxu0 0.0
    %3400 = vmatprep.subr.mxu0 0.0
    %3401 = vmatpush1.msra.mxu0 0.0
    %3402 = vmatprep.subr.mxu0 0.0
    %3403 = vmatpush1.msra.mxu0 0.0
    %3404 = vmatprep.subr.mxu0 0.0
    %3405 = vmatpush1.msra.mxu0 0.0
    %3406 = vmatprep.subr.mxu0 0.0
    %3407 = vmatpush1.msra.mxu0 0.0
    %3408 = vmatprep.subr.mxu0 0.0
    %3409 = vmatpush1.msra.mxu0 0.0
    %3410 = vmatprep.subr.mxu0 0.0
    %3411 = vmatpush1.msra.mxu0 0.0
    %3412 = vmatprep.subr.mxu0 0.0
    %3413 = vmatpush1.msra.mxu0 0.0
    %3414 = vmatprep.subr.mxu0 0.0
    %3415 = vmatpush1.msra.mxu0 0.0
    %3416 = vmatprep.subr.mxu0 0.0
    %3417 = vmatpush1.msra.mxu0 0.0
    %3418 = vmatprep.subr.mxu0 0.0
    %3419 = vmatpush1.msra.mxu0 0.0
    %3420 = vmatprep.subr.mxu0 0.0
    %3421 = vmatpush1.msra.mxu0 0.0
    %3422 = vmatprep.subr.mxu0 0.0
    %3423 = vmatpush1.msra.mxu0 0.0
    %3424 = vmatprep.subr.mxu0 0.0
    %3425 = vmatpush1.msra.mxu0 0.0
    %3426 = vmatprep.subr.mxu0 0.0
    %3427 = vmatpush1.msra.mxu0 0.0
    %3428 = vmatprep.subr.mxu0 0.0
    %3429 = vmatpush1.msra.mxu0 0.0
    %3430 = vmatprep.mubr.f32.mxu0 0.0
    %3431 = vmatmul.mubr.f32.gmra.mrb[0].mxu0 %v3184
    %v3432 = vpop.f32.mrb[0].mxu0
    %v3433 = vadd.f32 %v3356, %v3432
    %v3434 = vpop.f32.mrb[0].mxu0
    %v3435 = vadd.f32 %v3358, %v3434
    %3436 = vmatprep.mubr.f32.mxu0 0.0
    %3437 = vmatmul.mubr.f32.gmra.mrb[0].mxu0 %v3189
    %v3438 = vpop.f32.mrb[0].mxu0
    %v3439 = vadd.f32 %v3362, %v3438
    %v3440 = vpop.f32.mrb[0].mxu0
    %v3441 = vadd.f32 %v3364, %v3440
    %3442 = vdwg.mxu0
    %v3443 = vadd.f32 %v3027, %v3433
    %v3444 = vadd.f32 %v3028, %v3435
    %v3445 = vadd.f32 %v3029, %v3439
    %v3446 = vadd.f32 %v3030, %v3441
    %s3447 = scalar_lea.vmem %s5, 64
    %v3448 = vld [vmem:[%s3447] sm:$0xff]
    %v3449 = vld [vmem:[%s3447 + $0x8] sm:$0x3f]
    %v3451 = vsel %vm1784, %v3448, 0
    %v3454 = vsel %vm1784, %v3449, 0
    %3456 = vmatprep.subr.mxu0 %v1768
    %3457 = vmatpush1.msra.mxu0 %v1767
    %3458 = vmatprep.subr.mxu0 %v1771
    %3459 = vmatpush1.msra.mxu0 %v1770
    %3460 = vmatprep.subr.mxu0 %v1774
    %3461 = vmatpush1.msra.mxu0 %v1773
    %3462 = vmatprep.subr.mxu0 %v1777
    %3463 = vmatpush1.msra.mxu0 %v1776
    %3464 = vmatprep.subr.mxu0 %v1796
    %3465 = vmatpush1.msra.mxu0 %v1793
    %3466 = vmatprep.subr.mxu0 0.0
    %3467 = vmatpush1.msra.mxu0 0.0
    %3468 = vmatprep.subr.mxu0 0.0
    %3469 = vmatpush1.msra.mxu0 0.0
    %3470 = vmatprep.subr.mxu0 0.0
    %3471 = vmatpush1.msra.mxu0 0.0
    %3472 = vmatprep.subr.mxu0 0.0
    %3473 = vmatpush1.msra.mxu0 0.0
    %3474 = vmatprep.subr.mxu0 0.0
    %3475 = vmatpush1.msra.mxu0 0.0
    %3476 = vmatprep.subr.mxu0 0.0
    %3477 = vmatpush1.msra.mxu0 0.0
    %3478 = vmatprep.subr.mxu0 0.0
    %3479 = vmatpush1.msra.mxu0 0.0
    %3480 = vmatprep.subr.mxu0 0.0
    %3481 = vmatpush1.msra.mxu0 0.0
    %3482 = vmatprep.subr.mxu0 0.0
    %3483 = vmatpush1.msra.mxu0 0.0
    %3484 = vmatprep.subr.mxu0 0.0
    %3485 = vmatpush1.msra.mxu0 0.0
    %3486 = vmatprep.subr.mxu0 0.0
    %3487 = vmatpush1.msra.mxu0 0.0
    %3488 = vmatprep.subr.mxu0 0.0
    %3489 = vmatpush1.msra.mxu0 0.0
    %3490 = vmatprep.subr.mxu0 0.0
    %3491 = vmatpush1.msra.mxu0 0.0
    %3492 = vmatprep.subr.mxu0 0.0
    %3493 = vmatpush1.msra.mxu0 0.0
    %3494 = vmatprep.subr.mxu0 0.0
    %3495 = vmatpush1.msra.mxu0 0.0
    %3496 = vmatprep.subr.mxu0 0.0
    %3497 = vmatpush1.msra.mxu0 0.0
    %3498 = vmatprep.subr.mxu0 0.0
    %3499 = vmatpush1.msra.mxu0 0.0
    %3500 = vmatprep.subr.mxu0 0.0
    %3501 = vmatpush1.msra.mxu0 0.0
    %3502 = vmatprep.subr.mxu0 0.0
    %3503 = vmatpush1.msra.mxu0 0.0
    %3504 = vmatprep.subr.mxu0 0.0
    %3505 = vmatpush1.msra.mxu0 0.0
    %3506 = vmatprep.subr.mxu0 0.0
    %3507 = vmatpush1.msra.mxu0 0.0
    %3508 = vmatprep.subr.mxu0 0.0
    %3509 = vmatpush1.msra.mxu0 0.0
    %3510 = vmatprep.subr.mxu0 0.0
    %3511 = vmatpush1.msra.mxu0 0.0
    %3512 = vmatprep.subr.mxu0 0.0
    %3513 = vmatpush1.msra.mxu0 0.0
    %3514 = vmatprep.subr.mxu0 0.0
    %3515 = vmatpush1.msra.mxu0 0.0
    %3516 = vmatprep.subr.mxu0 0.0
    %3517 = vmatpush1.msra.mxu0 0.0
    %3518 = vmatprep.subr.mxu0 0.0
    %3519 = vmatpush1.msra.mxu0 0.0
    %3520 = vmatprep.mubr.f32.mxu0 0.0
    %3521 = vmatmul.mubr.f32.gmra.mrb[0].mxu0 %v3451
    %v3522 = vpop.f32.mrb[0].mxu0
    %v3523 = vadd.f32 0.0, %v3522
    %v3524 = vpop.f32.mrb[0].mxu0
    %v3525 = vadd.f32 0.0, %v3524
    %3526 = vmatprep.mubr.f32.mxu0 0.0
    %3527 = vmatmul.mubr.f32.gmra.mrb[0].mxu0 %v3454
    %v3528 = vpop.f32.mrb[0].mxu0
    %v3529 = vadd.f32 0.0, %v3528
    %v3530 = vpop.f32.mrb[0].mxu0
    %v3531 = vadd.f32 0.0, %v3530
    %3532 = vdwg.mxu0
    %3533 = vmatprep.subr.mxu0 0.0
    %3534 = vmatpush1.msra.mxu0 %v1769
    %3535 = vmatprep.subr.mxu0 0.0
    %3536 = vmatpush1.msra.mxu0 %v1772
    %3537 = vmatprep.subr.mxu0 0.0
    %3538 = vmatpush1.msra.mxu0 %v1775
    %3539 = vmatprep.subr.mxu0 0.0
    %3540 = vmatpush1.msra.mxu0 %v1778
    %3541 = vmatprep.subr.mxu0 0.0
    %3542 = vmatpush1.msra.mxu0 %v1799
    %3543 = vmatprep.subr.mxu0 0.0
    %3544 = vmatpush1.msra.mxu0 0.0
    %3545 = vmatprep.subr.mxu0 0.0
    %3546 = vmatpush1.msra.mxu0 0.0
    %3547 = vmatprep.subr.mxu0 0.0
    %3548 = vmatpush1.msra.mxu0 0.0
    %3549 = vmatprep.subr.mxu0 0.0
    %3550 = vmatpush1.msra.mxu0 0.0
    %3551 = vmatprep.subr.mxu0 0.0
    %3552 = vmatpush1.msra.mxu0 0.0
    %3553 = vmatprep.subr.mxu0 0.0
    %3554 = vmatpush1.msra.mxu0 0.0
    %3555 = vmatprep.subr.mxu0 0.0
    %3556 = vmatpush1.msra.mxu0 0.0
    %3557 = vmatprep.subr.mxu0 0.0
    %3558 = vmatpush1.msra.mxu0 0.0
    %3559 = vmatprep.subr.mxu0 0.0
    %3560 = vmatpush1.msra.mxu0 0.0
    %3561 = vmatprep.subr.mxu0 0.0
    %3562 = vmatpush1.msra.mxu0 0.0
    %3563 = vmatprep.subr.mxu0 0.0
    %3564 = vmatpush1.msra.mxu0 0.0
    %3565 = vmatprep.subr.mxu0 0.0
    %3566 = vmatpush1.msra.mxu0 0.0
    %3567 = vmatprep.subr.mxu0 0.0
    %3568 = vmatpush1.msra.mxu0 0.0
    %3569 = vmatprep.subr.mxu0 0.0
    %3570 = vmatpush1.msra.mxu0 0.0
    %3571 = vmatprep.subr.mxu0 0.0
    %3572 = vmatpush1.msra.mxu0 0.0
    %3573 = vmatprep.subr.mxu0 0.0
    %3574 = vmatpush1.msra.mxu0 0.0
    %3575 = vmatprep.subr.mxu0 0.0
    %3576 = vmatpush1.msra.mxu0 0.0
    %3577 = vmatprep.subr.mxu0 0.0
    %3578 = vmatpush1.msra.mxu0 0.0
    %3579 = vmatprep.subr.mxu0 0.0
    %3580 = vmatpush1.msra.mxu0 0.0
    %3581 = vmatprep.subr.mxu0 0.0
    %3582 = vmatpush1.msra.mxu0 0.0
    %3583 = vmatprep.subr.mxu0 0.0
    %3584 = vmatpush1.msra.mxu0 0.0
    %3585 = vmatprep.subr.mxu0 0.0
    %3586 = vmatpush1.msra.mxu0 0.0
    %3587 = vmatprep.subr.mxu0 0.0
    %3588 = vmatpush1.msra.mxu0 0.0
    %3589 = vmatprep.subr.mxu0 0.0
    %3590 = vmatpush1.msra.mxu0 0.0
    %3591 = vmatprep.subr.mxu0 0.0
    %3592 = vmatpush1.msra.mxu0 0.0
    %3593 = vmatprep.subr.mxu0 0.0
    %3594 = vmatpush1.msra.mxu0 0.0
    %3595 = vmatprep.subr.mxu0 0.0
    %3596 = vmatpush1.msra.mxu0 0.0
    %3597 = vmatprep.mubr.f32.mxu0 0.0
    %3598 = vmatmul.mubr.f32.gmra.mrb[0].mxu0 %v3451
    %v3599 = vpop.f32.mrb[0].mxu0
    %v3600 = vadd.f32 0.0, %v3599
    %v3601 = vpop.f32.mrb[0].mxu0
    %3602 = vmatprep.mubr.f32.mxu0 0.0
    %3603 = vmatmul.mubr.f32.gmra.mrb[0].mxu0 %v3454
    %v3604 = vpop.f32.mrb[0].mxu0
    %v3605 = vadd.f32 0.0, %v3604
    %v3606 = vpop.f32.mrb[0].mxu0
    %3607 = vdwg.mxu0
    %s3608 = scalar_lea.vmem %s4, 3072
    %v3609 = vld [vmem:[%s3608] sm:$0xff]
    %v3610 = vld [vmem:[%s3608 + $0x8] sm:$0xff]
    %v3611 = vld [vmem:[%s3608 + $0x10] sm:$0xff]
    %v3612 = vld [vmem:[%s3608 + $0x18] sm:$0xff]
    %v3613 = vld [vmem:[%s3608 + $0x20] sm:$0xff]
    %v3614 = vld [vmem:[%s3608 + $0x28] sm:$0xff]
    %v3615 = vld [vmem:[%s3608 + $0x30] sm:$0xff]
    %v3616 = vld [vmem:[%s3608 + $0x38] sm:$0xff]
    %v3617 = vld [vmem:[%s3608 + $0x40] sm:$0xff]
    %v3618 = vld [vmem:[%s3608 + $0x48] sm:$0xff]
    %v3619 = vld [vmem:[%s3608 + $0x50] sm:$0xff]
    %v3620 = vld [vmem:[%s3608 + $0x58] sm:$0xff]
    %v3621 = vld [vmem:[%s3608 + $0x60] sm:$0xff]
    %v3622 = vld [vmem:[%s3608 + $0x68] sm:$0xff]
    %v3623 = vld [vmem:[%s3608 + $0x70] sm:$0xff]
    %v3624 = vld [vmem:[%s3608 + $0x78] sm:$0xff]
    %v3625 = vld [vmem:[%s3608 + $0x80] sm:$0xff]
    %v3626 = vld [vmem:[%s3608 + $0x88] sm:$0xff]
    %v3627 = vld [vmem:[%s3608 + $0x90] sm:$0xff]
    %v3628 = vld [vmem:[%s3608 + $0x98] sm:$0xff]
    %v3629 = vld [vmem:[%s3608 + $0xa0] sm:$0xff]
    %v3630 = vld [vmem:[%s3608 + $0xa8] sm:$0xff]
    %v3631 = vld [vmem:[%s3608 + $0xb0] sm:$0xff]
    %v3632 = vld [vmem:[%s3608 + $0xb8] sm:$0xff]
    %v3633 = vld [vmem:[%s3608 + $0xc0] sm:$0xff]
    %v3634 = vld [vmem:[%s3608 + $0xc8] sm:$0xff]
    %v3635 = vld [vmem:[%s3608 + $0xd0] sm:$0xff]
    %v3636 = vld [vmem:[%s3608 + $0xd8] sm:$0xff]
    %v3637 = vld [vmem:[%s3608 + $0xe0] sm:$0xff]
    %v3638 = vld [vmem:[%s3608 + $0xe8] sm:$0xff]
    %v3639 = vld [vmem:[%s3608 + $0xf0] sm:$0xff]
    %v3640 = vld [vmem:[%s3608 + $0xf8] sm:$0xff]
    %v3641 = vld [vmem:[%s3608 + $0x100] sm:$0xff]
    %v3642 = vld [vmem:[%s3608 + $0x108] sm:$0xff]
    %v3643 = vld [vmem:[%s3608 + $0x110] sm:$0xff]
    %v3644 = vld [vmem:[%s3608 + $0x118] sm:$0xff]
    %v3645 = vld [vmem:[%s3608 + $0x120] sm:$0xff]
    %v3646 = vld [vmem:[%s3608 + $0x128] sm:$0xff]
    %v3647 = vld [vmem:[%s3608 + $0x130] sm:$0xff]
    %v3648 = vld [vmem:[%s3608 + $0x138] sm:$0xff]
    %v3649 = vld [vmem:[%s3608 + $0x140] sm:$0xff]
    %v3650 = vld [vmem:[%s3608 + $0x148] sm:$0xff]
    %v3651 = vld [vmem:[%s3608 + $0x150] sm:$0xff]
    %v3652 = vld [vmem:[%s3608 + $0x158] sm:$0xff]
    %v3653 = vld [vmem:[%s3608 + $0x160] sm:$0xff]
    %v3654 = vld [vmem:[%s3608 + $0x168] sm:$0xff]
    %v3655 = vld [vmem:[%s3608 + $0x170] sm:$0xff]
    %v3656 = vld [vmem:[%s3608 + $0x178] sm:$0xff]
    %v3657 = vld [vmem:[%s3608 + $0x180] sm:$0xff]
    %v3658 = vld [vmem:[%s3608 + $0x188] sm:$0xff]
    %v3659 = vld [vmem:[%s3608 + $0x190] sm:$0xff]
    %v3660 = vld [vmem:[%s3608 + $0x198] sm:$0xff]
    %v3661 = vld [vmem:[%s3608 + $0x1a0] sm:$0xff]
    %v3662 = vld [vmem:[%s3608 + $0x1a8] sm:$0xff]
    %v3663 = vld [vmem:[%s3608 + $0x1b0] sm:$0xff]
    %v3664 = vld [vmem:[%s3608 + $0x1b8] sm:$0xff]
    %v3665 = vld [vmem:[%s3608 + $0x1c0] sm:$0xff]
    %v3666 = vld [vmem:[%s3608 + $0x1c8] sm:$0xff]
    %v3667 = vld [vmem:[%s3608 + $0x1d0] sm:$0xff]
    %v3668 = vld [vmem:[%s3608 + $0x1d8] sm:$0xff]
    %v3669 = vld [vmem:[%s3608 + $0x1e0] sm:$0xff]
    %v3670 = vld [vmem:[%s3608 + $0x1e8] sm:$0xff]
    %v3671 = vld [vmem:[%s3608 + $0x1f0] sm:$0xff]
    %v3672 = vld [vmem:[%s3608 + $0x1f8] sm:$0xff]
    %v3673 = vld [vmem:[%s3608 + $0x200] sm:$0xff]
    %v3674 = vld [vmem:[%s3608 + $0x208] sm:$0xff]
    %v3675 = vld [vmem:[%s3608 + $0x210] sm:$0xff]
    %v3676 = vld [vmem:[%s3608 + $0x218] sm:$0xff]
    %v3677 = vld [vmem:[%s3608 + $0x220] sm:$0xff]
    %v3678 = vld [vmem:[%s3608 + $0x228] sm:$0xff]
    %v3679 = vld [vmem:[%s3608 + $0x230] sm:$0xff]
    %v3680 = vld [vmem:[%s3608 + $0x238] sm:$0xff]
    %v3681 = vld [vmem:[%s3608 + $0x240] sm:$0xff]
    %v3682 = vld [vmem:[%s3608 + $0x248] sm:$0xff]
    %v3683 = vld [vmem:[%s3608 + $0x250] sm:$0xff]
    %v3684 = vld [vmem:[%s3608 + $0x258] sm:$0xff]
    %v3685 = vld [vmem:[%s3608 + $0x260] sm:$0xff]
    %v3686 = vld [vmem:[%s3608 + $0x268] sm:$0xff]
    %v3687 = vld [vmem:[%s3608 + $0x270] sm:$0xff]
    %v3688 = vld [vmem:[%s3608 + $0x278] sm:$0xff]
    %v3689 = vld [vmem:[%s3608 + $0x280] sm:$0xff]
    %v3690 = vld [vmem:[%s3608 + $0x288] sm:$0xff]
    %v3691 = vld [vmem:[%s3608 + $0x290] sm:$0xff]
    %v3692 = vld [vmem:[%s3608 + $0x298] sm:$0xff]
    %v3693 = vld [vmem:[%s3608 + $0x2a0] sm:$0xff]
    %v3694 = vld [vmem:[%s3608 + $0x2a8] sm:$0xff]
    %v3695 = vld [vmem:[%s3608 + $0x2b0] sm:$0xff]
    %v3696 = vld [vmem:[%s3608 + $0x2b8] sm:$0xff]
    %v3697 = vld [vmem:[%s3608 + $0x2c0] sm:$0xff]
    %v3698 = vld [vmem:[%s3608 + $0x2c8] sm:$0xff]
    %v3699 = vld [vmem:[%s3608 + $0x2d0] sm:$0xff]
    %v3700 = vld [vmem:[%s3608 + $0x2d8] sm:$0xff]
    %v3701 = vld [vmem:[%s3608 + $0x2e0] sm:$0xff]
    %v3702 = vld [vmem:[%s3608 + $0x2e8] sm:$0xff]
    %v3703 = vld [vmem:[%s3608 + $0x2f0] sm:$0xff]
    %v3704 = vld [vmem:[%s3608 + $0x2f8] sm:$0xff]
    %3705 = vmatprep.subr.mxu0 %v3610
    %3706 = vmatpush1.msra.mxu0 %v3609
    %3707 = vmatprep.subr.mxu0 %v3612
    %3708 = vmatpush1.msra.mxu0 %v3611
    %3709 = vmatprep.subr.mxu0 %v3614
    %3710 = vmatpush1.msra.mxu0 %v3613
    %3711 = vmatprep.subr.mxu0 %v3616
    %3712 = vmatpush1.msra.mxu0 %v3615
    %3713 = vmatprep.subr.mxu0 %v3618
    %3714 = vmatpush1.msra.mxu0 %v3617
    %3715 = vmatprep.subr.mxu0 %v3620
    %3716 = vmatpush1.msra.mxu0 %v3619
    %3717 = vmatprep.subr.mxu0 %v3622
    %3718 = vmatpush1.msra.mxu0 %v3621
    %3719 = vmatprep.subr.mxu0 %v3624
    %3720 = vmatpush1.msra.mxu0 %v3623
    %3721 = vmatprep.subr.mxu0 %v3626
    %3722 = vmatpush1.msra.mxu0 %v3625
    %3723 = vmatprep.subr.mxu0 %v3628
    %3724 = vmatpush1.msra.mxu0 %v3627
    %3725 = vmatprep.subr.mxu0 %v3630
    %3726 = vmatpush1.msra.mxu0 %v3629
    %3727 = vmatprep.subr.mxu0 %v3632
    %3728 = vmatpush1.msra.mxu0 %v3631
    %3729 = vmatprep.subr.mxu0 %v3634
    %3730 = vmatpush1.msra.mxu0 %v3633
    %3731 = vmatprep.subr.mxu0 %v3636
    %3732 = vmatpush1.msra.mxu0 %v3635
    %3733 = vmatprep.subr.mxu0 %v3638
    %3734 = vmatpush1.msra.mxu0 %v3637
    %3735 = vmatprep.subr.mxu0 %v3640
    %3736 = vmatpush1.msra.mxu0 %v3639
    %3737 = vmatprep.subr.mxu0 %v3642
    %3738 = vmatpush1.msra.mxu0 %v3641
    %3739 = vmatprep.subr.mxu0 %v3644
    %3740 = vmatpush1.msra.mxu0 %v3643
    %3741 = vmatprep.subr.mxu0 %v3646
    %3742 = vmatpush1.msra.mxu0 %v3645
    %3743 = vmatprep.subr.mxu0 %v3648
    %3744 = vmatpush1.msra.mxu0 %v3647
    %3745 = vmatprep.subr.mxu0 %v3650
    %3746 = vmatpush1.msra.mxu0 %v3649
    %3747 = vmatprep.subr.mxu0 %v3652
    %3748 = vmatpush1.msra.mxu0 %v3651
    %3749 = vmatprep.subr.mxu0 %v3654
    %3750 = vmatpush1.msra.mxu0 %v3653
    %3751 = vmatprep.subr.mxu0 %v3656
    %3752 = vmatpush1.msra.mxu0 %v3655
    %3753 = vmatprep.subr.mxu0 %v3658
    %3754 = vmatpush1.msra.mxu0 %v3657
    %3755 = vmatprep.subr.mxu0 %v3660
    %3756 = vmatpush1.msra.mxu0 %v3659
    %3757 = vmatprep.subr.mxu0 %v3662
    %3758 = vmatpush1.msra.mxu0 %v3661
    %3759 = vmatprep.subr.mxu0 %v3664
    %3760 = vmatpush1.msra.mxu0 %v3663
    %3761 = vmatprep.subr.mxu0 %v3666
    %3762 = vmatpush1.msra.mxu0 %v3665
    %3763 = vmatprep.subr.mxu0 %v3668
    %3764 = vmatpush1.msra.mxu0 %v3667
    %3765 = vmatprep.subr.mxu0 %v3670
    %3766 = vmatpush1.msra.mxu0 %v3669
    %3767 = vmatprep.subr.mxu0 %v3672
    %3768 = vmatpush1.msra.mxu0 %v3671
    %3769 = vmatprep.mubr.f32.mxu0 %v3525
    %3770 = vmatmul.mubr.f32.gmra.mrb[0].mxu0 %v3523
    %v3771 = vpop.f32.mrb[0].mxu0
    %v3772 = vadd.f32 0.0, %v3771
    %v3773 = vpop.f32.mrb[0].mxu0
    %v3774 = vadd.f32 0.0, %v3773
    %3775 = vmatprep.mubr.f32.mxu0 %v3531
    %3776 = vmatmul.mubr.f32.gmra.mrb[0].mxu0 %v3529
    %v3777 = vpop.f32.mrb[0].mxu0
    %v3778 = vadd.f32 0.0, %v3777
    %v3779 = vpop.f32.mrb[0].mxu0
    %v3780 = vadd.f32 0.0, %v3779
    %3781 = vdwg.mxu0
    %3782 = vmatprep.subr.mxu0 %v3674
    %3783 = vmatpush1.msra.mxu0 %v3673
    %3784 = vmatprep.subr.mxu0 %v3676
    %3785 = vmatpush1.msra.mxu0 %v3675
    %3786 = vmatprep.subr.mxu0 %v3678
    %3787 = vmatpush1.msra.mxu0 %v3677
    %3788 = vmatprep.subr.mxu0 %v3680
    %3789 = vmatpush1.msra.mxu0 %v3679
    %3790 = vmatprep.subr.mxu0 %v3682
    %3791 = vmatpush1.msra.mxu0 %v3681
    %3792 = vmatprep.subr.mxu0 %v3684
    %3793 = vmatpush1.msra.mxu0 %v3683
    %3794 = vmatprep.subr.mxu0 %v3686
    %3795 = vmatpush1.msra.mxu0 %v3685
    %3796 = vmatprep.subr.mxu0 %v3688
    %3797 = vmatpush1.msra.mxu0 %v3687
    %3798 = vmatprep.subr.mxu0 %v3690
    %3799 = vmatpush1.msra.mxu0 %v3689
    %3800 = vmatprep.subr.mxu0 %v3692
    %3801 = vmatpush1.msra.mxu0 %v3691
    %3802 = vmatprep.subr.mxu0 %v3694
    %3803 = vmatpush1.msra.mxu0 %v3693
    %3804 = vmatprep.subr.mxu0 %v3696
    %3805 = vmatpush1.msra.mxu0 %v3695
    %3806 = vmatprep.subr.mxu0 %v3698
    %3807 = vmatpush1.msra.mxu0 %v3697
    %3808 = vmatprep.subr.mxu0 %v3700
    %3809 = vmatpush1.msra.mxu0 %v3699
    %3810 = vmatprep.subr.mxu0 %v3702
    %3811 = vmatpush1.msra.mxu0 %v3701
    %3812 = vmatprep.subr.mxu0 %v3704
    %3813 = vmatpush1.msra.mxu0 %v3703
    %3814 = vmatprep.subr.mxu0 0.0
    %3815 = vmatpush1.msra.mxu0 0.0
    %3816 = vmatprep.subr.mxu0 0.0
    %3817 = vmatpush1.msra.mxu0 0.0
    %3818 = vmatprep.subr.mxu0 0.0
    %3819 = vmatpush1.msra.mxu0 0.0
    %3820 = vmatprep.subr.mxu0 0.0
    %3821 = vmatpush1.msra.mxu0 0.0
    %3822 = vmatprep.subr.mxu0 0.0
    %3823 = vmatpush1.msra.mxu0 0.0
    %3824 = vmatprep.subr.mxu0 0.0
    %3825 = vmatpush1.msra.mxu0 0.0
    %3826 = vmatprep.subr.mxu0 0.0
    %3827 = vmatpush1.msra.mxu0 0.0
    %3828 = vmatprep.subr.mxu0 0.0
    %3829 = vmatpush1.msra.mxu0 0.0
    %3830 = vmatprep.subr.mxu0 0.0
    %3831 = vmatpush1.msra.mxu0 0.0
    %3832 = vmatprep.subr.mxu0 0.0
    %3833 = vmatpush1.msra.mxu0 0.0
    %3834 = vmatprep.subr.mxu0 0.0
    %3835 = vmatpush1.msra.mxu0 0.0
    %3836 = vmatprep.subr.mxu0 0.0
    %3837 = vmatpush1.msra.mxu0 0.0
    %3838 = vmatprep.subr.mxu0 0.0
    %3839 = vmatpush1.msra.mxu0 0.0
    %3840 = vmatprep.subr.mxu0 0.0
    %3841 = vmatpush1.msra.mxu0 0.0
    %3842 = vmatprep.subr.mxu0 0.0
    %3843 = vmatpush1.msra.mxu0 0.0
    %3844 = vmatprep.subr.mxu0 0.0
    %3845 = vmatpush1.msra.mxu0 0.0
    %3846 = vmatprep.mubr.f32.mxu0 0.0
    %3847 = vmatmul.mubr.f32.gmra.mrb[0].mxu0 %v3600
    %v3848 = vpop.f32.mrb[0].mxu0
    %v3849 = vadd.f32 %v3772, %v3848
    %v3850 = vpop.f32.mrb[0].mxu0
    %v3851 = vadd.f32 %v3774, %v3850
    %3852 = vmatprep.mubr.f32.mxu0 0.0
    %3853 = vmatmul.mubr.f32.gmra.mrb[0].mxu0 %v3605
    %v3854 = vpop.f32.mrb[0].mxu0
    %v3855 = vadd.f32 %v3778, %v3854
    %v3856 = vpop.f32.mrb[0].mxu0
    %v3857 = vadd.f32 %v3780, %v3856
    %3858 = vdwg.mxu0
    %v3859 = vadd.f32 %v3443, %v3849
    %v3860 = vadd.f32 %v3444, %v3851
    %v3861 = vadd.f32 %v3445, %v3855
    %v3862 = vadd.f32 %v3446, %v3857
    %v3863 = vld [vmem:[%s6] sm:$0x3]
    %v3865 = vlaneseq
    %v3866 = vshrl.u32 %v3865, 7
    %v3867 = vsub.s32 0, %v3866
    %v3868 = vrot.slane %v3863, %v3867
    %v3869 = vlaneseq
    %v3870 = vshrl.u32 %v3869, 7
    %v3871 = vsub.s32 1, %v3870
    %v3872 = vrot.slane %v3863, %v3871
    %v3875 = vadd.f32 %v3859, %v3868
    %v3876 = vadd.f32 %v3860, %v3872
    %v3877 = vadd.f32 %v3861, %v3868
    %v3878 = vadd.f32 %v3862, %v3872
    %v3879 = vmax.f32 %v3875, 0.0
    %v3880 = vmax.f32 %v3876, 0.0
    %v3881 = vmax.f32 %v3877, 0.0
    %v3882 = vmax.f32 %v3878, 0.0
    %v3883 = vld [vmem:[%s8] sm:$0xf]
    %vm3884 = vcmask 113664
    %v3886 = vsel %vm3884, %v3883, 0
    %vm3888 = vcmask 1045504
    %v3890 = vsel %vm3888, %v3881, 0
    %v3893 = vsel %vm3888, %v3882, 0
    %3895 = vmatprep.subr.mxu0 %v3880
    %3896 = vmatpush1.msra.mxu0 %v3879
    %3897 = vmatprep.subr.mxu0 %v3893
    %3898 = vmatpush1.msra.mxu0 %v3890
    %3899 = vmatprep.subr.mxu0 0.0
    %3900 = vmatpush1.msra.mxu0 0.0
    %3901 = vmatprep.subr.mxu0 0.0
    %3902 = vmatpush1.msra.mxu0 0.0
    %3903 = vmatprep.subr.mxu0 0.0
    %3904 = vmatpush1.msra.mxu0 0.0
    %3905 = vmatprep.subr.mxu0 0.0
    %3906 = vmatpush1.msra.mxu0 0.0
    %3907 = vmatprep.subr.mxu0 0.0
    %3908 = vmatpush1.msra.mxu0 0.0
    %3909 = vmatprep.subr.mxu0 0.0
    %3910 = vmatpush1.msra.mxu0 0.0
    %3911 = vmatprep.subr.mxu0 0.0
    %3912 = vmatpush1.msra.mxu0 0.0
    %3913 = vmatprep.subr.mxu0 0.0
    %3914 = vmatpush1.msra.mxu0 0.0
    %3915 = vmatprep.subr.mxu0 0.0
    %3916 = vmatpush1.msra.mxu0 0.0
    %3917 = vmatprep.subr.mxu0 0.0
    %3918 = vmatpush1.msra.mxu0 0.0
    %3919 = vmatprep.subr.mxu0 0.0
    %3920 = vmatpush1.msra.mxu0 0.0
    %3921 = vmatprep.subr.mxu0 0.0
    %3922 = vmatpush1.msra.mxu0 0.0
    %3923 = vmatprep.subr.mxu0 0.0
    %3924 = vmatpush1.msra.mxu0 0.0
    %3925 = vmatprep.subr.mxu0 0.0
    %3926 = vmatpush1.msra.mxu0 0.0
    %3927 = vmatprep.subr.mxu0 0.0
    %3928 = vmatpush1.msra.mxu0 0.0
    %3929 = vmatprep.subr.mxu0 0.0
    %3930 = vmatpush1.msra.mxu0 0.0
    %3931 = vmatprep.subr.mxu0 0.0
    %3932 = vmatpush1.msra.mxu0 0.0
    %3933 = vmatprep.subr.mxu0 0.0
    %3934 = vmatpush1.msra.mxu0 0.0
    %3935 = vmatprep.subr.mxu0 0.0
    %3936 = vmatpush1.msra.mxu0 0.0
    %3937 = vmatprep.subr.mxu0 0.0
    %3938 = vmatpush1.msra.mxu0 0.0
    %3939 = vmatprep.subr.mxu0 0.0
    %3940 = vmatpush1.msra.mxu0 0.0
    %3941 = vmatprep.subr.mxu0 0.0
    %3942 = vmatpush1.msra.mxu0 0.0
    %3943 = vmatprep.subr.mxu0 0.0
    %3944 = vmatpush1.msra.mxu0 0.0
    %3945 = vmatprep.subr.mxu0 0.0
    %3946 = vmatpush1.msra.mxu0 0.0
    %3947 = vmatprep.subr.mxu0 0.0
    %3948 = vmatpush1.msra.mxu0 0.0
    %3949 = vmatprep.subr.mxu0 0.0
    %3950 = vmatpush1.msra.mxu0 0.0
    %3951 = vmatprep.subr.mxu0 0.0
    %3952 = vmatpush1.msra.mxu0 0.0
    %3953 = vmatprep.subr.mxu0 0.0
    %3954 = vmatpush1.msra.mxu0 0.0
    %3955 = vmatprep.subr.mxu0 0.0
    %3956 = vmatpush1.msra.mxu0 0.0
    %3957 = vmatprep.subr.mxu0 0.0
    %3958 = vmatpush1.msra.mxu0 0.0
    %3959 = vmatprep.mubr.f32.mxu0 0.0
    %3960 = vmatmul.mubr.f32.gmra.mrb[0].mxu0 %v3886
    %v3961 = vpop.f32.mrb[0].mxu0
    %v3962 = vadd.f32 0.0, %v3961
    %v3963 = vpop.f32.mrb[0].mxu0
    %v3964 = vadd.f32 0.0, %v3963
    %3965 = vdwg.mxu0
    %v3966 = vld [vmem:[%s7] sm:$0xff]
    %v3967 = vld [vmem:[%s7 + $0x8] sm:$0xff]
    %v3968 = vld [vmem:[%s7 + $0x10] sm:$0xff]
    %v3969 = vld [vmem:[%s7 + $0x18] sm:$0xff]
    %v3970 = vld [vmem:[%s7 + $0x20] sm:$0xff]
    %v3971 = vld [vmem:[%s7 + $0x28] sm:$0xff]
    %v3972 = vld [vmem:[%s7 + $0x30] sm:$0xff]
    %v3973 = vld [vmem:[%s7 + $0x38] sm:$0xff]
    %v3974 = vld [vmem:[%s7 + $0x40] sm:$0xff]
    %v3975 = vld [vmem:[%s7 + $0x48] sm:$0xff]
    %v3976 = vld [vmem:[%s7 + $0x50] sm:$0xff]
    %v3977 = vld [vmem:[%s7 + $0x58] sm:$0xff]
    %v3978 = vld [vmem:[%s7 + $0x60] sm:$0xff]
    %v3979 = vld [vmem:[%s7 + $0x68] sm:$0xff]
    %v3980 = vld [vmem:[%s7 + $0x70] sm:$0xff]
    %v3981 = vld [vmem:[%s7 + $0x78] sm:$0xff]
    %v3982 = vld [vmem:[%s7 + $0x80] sm:$0xff]
    %v3983 = vld [vmem:[%s7 + $0x88] sm:$0xff]
    %v3984 = vld [vmem:[%s7 + $0x90] sm:$0xff]
    %v3985 = vld [vmem:[%s7 + $0x98] sm:$0xff]
    %v3986 = vld [vmem:[%s7 + $0xa0] sm:$0xff]
    %v3987 = vld [vmem:[%s7 + $0xa8] sm:$0xff]
    %v3988 = vld [vmem:[%s7 + $0xb0] sm:$0xff]
    %v3989 = vld [vmem:[%s7 + $0xb8] sm:$0xff]
    %v3990 = vld [vmem:[%s7 + $0xc0] sm:$0xff]
    %v3991 = vld [vmem:[%s7 + $0xc8] sm:$0xff]
    %v3992 = vld [vmem:[%s7 + $0xd0] sm:$0xff]
    %v3993 = vld [vmem:[%s7 + $0xd8] sm:$0xff]
    %v3994 = vld [vmem:[%s7 + $0xe0] sm:$0xff]
    %v3995 = vld [vmem:[%s7 + $0xe8] sm:$0xff]
    %v3996 = vld [vmem:[%s7 + $0xf0] sm:$0xff]
    %v3997 = vld [vmem:[%s7 + $0xf8] sm:$0xff]
    %s3998 = scalar_lea.vmem %s8, 4
    %v3999 = vld [vmem:[%s3998] sm:$0xf]
    %v4001 = vsel %vm3884, %v3999, 0
    %4003 = vmatprep.subr.mxu0 %v3880
    %4004 = vmatpush1.msra.mxu0 %v3879
    %4005 = vmatprep.subr.mxu0 %v3893
    %4006 = vmatpush1.msra.mxu0 %v3890
    %4007 = vmatprep.subr.mxu0 0.0
    %4008 = vmatpush1.msra.mxu0 0.0
    %4009 = vmatprep.subr.mxu0 0.0
    %4010 = vmatpush1.msra.mxu0 0.0
    %4011 = vmatprep.subr.mxu0 0.0
    %4012 = vmatpush1.msra.mxu0 0.0
    %4013 = vmatprep.subr.mxu0 0.0
    %4014 = vmatpush1.msra.mxu0 0.0
    %4015 = vmatprep.subr.mxu0 0.0
    %4016 = vmatpush1.msra.mxu0 0.0
    %4017 = vmatprep.subr.mxu0 0.0
    %4018 = vmatpush1.msra.mxu0 0.0
    %4019 = vmatprep.subr.mxu0 0.0
    %4020 = vmatpush1.msra.mxu0 0.0
    %4021 = vmatprep.subr.mxu0 0.0
    %4022 = vmatpush1.msra.mxu0 0.0
    %4023 = vmatprep.subr.mxu0 0.0
    %4024 = vmatpush1.msra.mxu0 0.0
    %4025 = vmatprep.subr.mxu0 0.0
    %4026 = vmatpush1.msra.mxu0 0.0
    %4027 = vmatprep.subr.mxu0 0.0
    %4028 = vmatpush1.msra.mxu0 0.0
    %4029 = vmatprep.subr.mxu0 0.0
    %4030 = vmatpush1.msra.mxu0 0.0
    %4031 = vmatprep.subr.mxu0 0.0
    %4032 = vmatpush1.msra.mxu0 0.0
    %4033 = vmatprep.subr.mxu0 0.0
    %4034 = vmatpush1.msra.mxu0 0.0
    %4035 = vmatprep.subr.mxu0 0.0
    %4036 = vmatpush1.msra.mxu0 0.0
    %4037 = vmatprep.subr.mxu0 0.0
    %4038 = vmatpush1.msra.mxu0 0.0
    %4039 = vmatprep.subr.mxu0 0.0
    %4040 = vmatpush1.msra.mxu0 0.0
    %4041 = vmatprep.subr.mxu0 0.0
    %4042 = vmatpush1.msra.mxu0 0.0
    %4043 = vmatprep.subr.mxu0 0.0
    %4044 = vmatpush1.msra.mxu0 0.0
    %4045 = vmatprep.subr.mxu0 0.0
    %4046 = vmatpush1.msra.mxu0 0.0
    %4047 = vmatprep.subr.mxu0 0.0
    %4048 = vmatpush1.msra.mxu0 0.0
    %4049 = vmatprep.subr.mxu0 0.0
    %4050 = vmatpush1.msra.mxu0 0.0
    %4051 = vmatprep.subr.mxu0 0.0
    %4052 = vmatpush1.msra.mxu0 0.0
    %4053 = vmatprep.subr.mxu0 0.0
    %4054 = vmatpush1.msra.mxu0 0.0
    %4055 = vmatprep.subr.mxu0 0.0
    %4056 = vmatpush1.msra.mxu0 0.0
    %4057 = vmatprep.subr.mxu0 0.0
    %4058 = vmatpush1.msra.mxu0 0.0
    %4059 = vmatprep.subr.mxu0 0.0
    %4060 = vmatpush1.msra.mxu0 0.0
    %4061 = vmatprep.subr.mxu0 0.0
    %4062 = vmatpush1.msra.mxu0 0.0
    %4063 = vmatprep.subr.mxu0 0.0
    %4064 = vmatpush1.msra.mxu0 0.0
    %4065 = vmatprep.subr.mxu0 0.0
    %4066 = vmatpush1.msra.mxu0 0.0
    %4067 = vmatprep.mubr.f32.mxu0 0.0
    %4068 = vmatmul.mubr.f32.gmra.mrb[0].mxu0 %v4001
    %v4069 = vpop.f32.mrb[0].mxu0
    %v4070 = vadd.f32 0.0, %v4069
    %v4071 = vpop.f32.mrb[0].mxu0
    %v4072 = vadd.f32 0.0, %v4071
    %4073 = vdwg.mxu0
    %s4074 = scalar_lea.vmem %s7, 256
    %v4075 = vld [vmem:[%s4074] sm:$0xff]
    %v4076 = vld [vmem:[%s4074 + $0x8] sm:$0xff]
    %v4077 = vld [vmem:[%s4074 + $0x10] sm:$0xff]
    %v4078 = vld [vmem:[%s4074 + $0x18] sm:$0xff]
    %v4079 = vld [vmem:[%s4074 + $0x20] sm:$0xff]
    %v4080 = vld [vmem:[%s4074 + $0x28] sm:$0xff]
    %v4081 = vld [vmem:[%s4074 + $0x30] sm:$0xff]
    %v4082 = vld [vmem:[%s4074 + $0x38] sm:$0xff]
    %v4083 = vld [vmem:[%s4074 + $0x40] sm:$0xff]
    %v4084 = vld [vmem:[%s4074 + $0x48] sm:$0xff]
    %v4085 = vld [vmem:[%s4074 + $0x50] sm:$0xff]
    %v4086 = vld [vmem:[%s4074 + $0x58] sm:$0xff]
    %v4087 = vld [vmem:[%s4074 + $0x60] sm:$0xff]
    %v4088 = vld [vmem:[%s4074 + $0x68] sm:$0xff]
    %v4089 = vld [vmem:[%s4074 + $0x70] sm:$0xff]
    %v4090 = vld [vmem:[%s4074 + $0x78] sm:$0xff]
    %v4091 = vld [vmem:[%s4074 + $0x80] sm:$0xff]
    %v4092 = vld [vmem:[%s4074 + $0x88] sm:$0xff]
    %v4093 = vld [vmem:[%s4074 + $0x90] sm:$0xff]
    %v4094 = vld [vmem:[%s4074 + $0x98] sm:$0xff]
    %v4095 = vld [vmem:[%s4074 + $0xa0] sm:$0xff]
    %v4096 = vld [vmem:[%s4074 + $0xa8] sm:$0xff]
    %v4097 = vld [vmem:[%s4074 + $0xb0] sm:$0xff]
    %v4098 = vld [vmem:[%s4074 + $0xb8] sm:$0xff]
    %v4099 = vld [vmem:[%s4074 + $0xc0] sm:$0xff]
    %v4100 = vld [vmem:[%s4074 + $0xc8] sm:$0xff]
    %v4101 = vld [vmem:[%s4074 + $0xd0] sm:$0xff]
    %v4102 = vld [vmem:[%s4074 + $0xd8] sm:$0xff]
    %v4103 = vld [vmem:[%s4074 + $0xe0] sm:$0xff]
    %v4104 = vld [vmem:[%s4074 + $0xe8] sm:$0xff]
    %v4105 = vld [vmem:[%s4074 + $0xf0] sm:$0xff]
    %v4106 = vld [vmem:[%s4074 + $0xf8] sm:$0xff]
    %4107 = vmatprep.subr.mxu0 0.0
    %4108 = vmatpush1.msra.mxu0 %v4075
    %4109 = vmatprep.subr.mxu0 0.0
    %4110 = vmatpush1.msra.mxu0 %v4076
    %4111 = vmatprep.subr.mxu0 0.0
    %4112 = vmatpush1.msra.mxu0 %v4077
    %4113 = vmatprep.subr.mxu0 0.0
    %4114 = vmatpush1.msra.mxu0 %v4078
    %4115 = vmatprep.subr.mxu0 0.0
    %4116 = vmatpush1.msra.mxu0 %v4079
    %4117 = vmatprep.subr.mxu0 0.0
    %4118 = vmatpush1.msra.mxu0 %v4080
    %4119 = vmatprep.subr.mxu0 0.0
    %4120 = vmatpush1.msra.mxu0 %v4081
    %4121 = vmatprep.subr.mxu0 0.0
    %4122 = vmatpush1.msra.mxu0 %v4082
    %4123 = vmatprep.subr.mxu0 0.0
    %4124 = vmatpush1.msra.mxu0 %v4083
    %4125 = vmatprep.subr.mxu0 0.0
    %4126 = vmatpush1.msra.mxu0 %v4084
    %4127 = vmatprep.subr.mxu0 0.0
    %4128 = vmatpush1.msra.mxu0 %v4085
    %4129 = vmatprep.subr.mxu0 0.0
    %4130 = vmatpush1.msra.mxu0 %v4086
    %4131 = vmatprep.subr.mxu0 0.0
    %4132 = vmatpush1.msra.mxu0 %v4087
    %4133 = vmatprep.subr.mxu0 0.0
    %4134 = vmatpush1.msra.mxu0 %v4088
    %4135 = vmatprep.subr.mxu0 0.0
    %4136 = vmatpush1.msra.mxu0 %v4089
    %4137 = vmatprep.subr.mxu0 0.0
    %4138 = vmatpush1.msra.mxu0 %v4090
    %4139 = vmatprep.subr.mxu0 0.0
    %4140 = vmatpush1.msra.mxu0 %v4091
    %4141 = vmatprep.subr.mxu0 0.0
    %4142 = vmatpush1.msra.mxu0 %v4092
    %4143 = vmatprep.subr.mxu0 0.0
    %4144 = vmatpush1.msra.mxu0 %v4093
    %4145 = vmatprep.subr.mxu0 0.0
    %4146 = vmatpush1.msra.mxu0 %v4094
    %4147 = vmatprep.subr.mxu0 0.0
    %4148 = vmatpush1.msra.mxu0 %v4095
    %4149 = vmatprep.subr.mxu0 0.0
    %4150 = vmatpush1.msra.mxu0 %v4096
    %4151 = vmatprep.subr.mxu0 0.0
    %4152 = vmatpush1.msra.mxu0 %v4097
    %4153 = vmatprep.subr.mxu0 0.0
    %4154 = vmatpush1.msra.mxu0 %v4098
    %4155 = vmatprep.subr.mxu0 0.0
    %4156 = vmatpush1.msra.mxu0 %v4099
    %4157 = vmatprep.subr.mxu0 0.0
    %4158 = vmatpush1.msra.mxu0 %v4100
    %4159 = vmatprep.subr.mxu0 0.0
    %4160 = vmatpush1.msra.mxu0 %v4101
    %4161 = vmatprep.subr.mxu0 0.0
    %4162 = vmatpush1.msra.mxu0 %v4102
    %4163 = vmatprep.subr.mxu0 0.0
    %4164 = vmatpush1.msra.mxu0 %v4103
    %4165 = vmatprep.subr.mxu0 0.0
    %4166 = vmatpush1.msra.mxu0 %v4104
    %4167 = vmatprep.subr.mxu0 0.0
    %4168 = vmatpush1.msra.mxu0 %v4105
    %4169 = vmatprep.subr.mxu0 0.0
    %4170 = vmatpush1.msra.mxu0 %v4106
    %4171 = vmatprep.mubr.f32.mxu0 %v4072
    %4172 = vmatmul.mubr.f32.gmra.mrb[0].mxu0 %v4070
    %v4173 = vpop.f32.mrb[0].mxu0
    %v4174 = vadd.f32 0.0, %v4173
    %v4175 = vpop.f32.mrb[0].mxu0
    %4176 = vdwg.mxu0
    %4177 = vmatprep.subr.mxu0 0.0
    %4178 = vmatpush1.msra.mxu0 %v3966
    %4179 = vmatprep.subr.mxu0 0.0
    %4180 = vmatpush1.msra.mxu0 %v3967
    %4181 = vmatprep.subr.mxu0 0.0
    %4182 = vmatpush1.msra.mxu0 %v3968
    %4183 = vmatprep.subr.mxu0 0.0
    %4184 = vmatpush1.msra.mxu0 %v3969
    %4185 = vmatprep.subr.mxu0 0.0
    %4186 = vmatpush1.msra.mxu0 %v3970
    %4187 = vmatprep.subr.mxu0 0.0
    %4188 = vmatpush1.msra.mxu0 %v3971
    %4189 = vmatprep.subr.mxu0 0.0
    %4190 = vmatpush1.msra.mxu0 %v3972
    %4191 = vmatprep.subr.mxu0 0.0
    %4192 = vmatpush1.msra.mxu0 %v3973
    %4193 = vmatprep.subr.mxu0 0.0
    %4194 = vmatpush1.msra.mxu0 %v3974
    %4195 = vmatprep.subr.mxu0 0.0
    %4196 = vmatpush1.msra.mxu0 %v3975
    %4197 = vmatprep.subr.mxu0 0.0
    %4198 = vmatpush1.msra.mxu0 %v3976
    %4199 = vmatprep.subr.mxu0 0.0
    %4200 = vmatpush1.msra.mxu0 %v3977
    %4201 = vmatprep.subr.mxu0 0.0
    %4202 = vmatpush1.msra.mxu0 %v3978
    %4203 = vmatprep.subr.mxu0 0.0
    %4204 = vmatpush1.msra.mxu0 %v3979
    %4205 = vmatprep.subr.mxu0 0.0
    %4206 = vmatpush1.msra.mxu0 %v3980
    %4207 = vmatprep.subr.mxu0 0.0
    %4208 = vmatpush1.msra.mxu0 %v3981
    %4209 = vmatprep.subr.mxu0 0.0
    %4210 = vmatpush1.msra.mxu0 %v3982
    %4211 = vmatprep.subr.mxu0 0.0
    %4212 = vmatpush1.msra.mxu0 %v3983
    %4213 = vmatprep.subr.mxu0 0.0
    %4214 = vmatpush1.msra.mxu0 %v3984
    %4215 = vmatprep.subr.mxu0 0.0
    %4216 = vmatpush1.msra.mxu0 %v3985
    %4217 = vmatprep.subr.mxu0 0.0
    %4218 = vmatpush1.msra.mxu0 %v3986
    %4219 = vmatprep.subr.mxu0 0.0
    %4220 = vmatpush1.msra.mxu0 %v3987
    %4221 = vmatprep.subr.mxu0 0.0
    %4222 = vmatpush1.msra.mxu0 %v3988
    %4223 = vmatprep.subr.mxu0 0.0
    %4224 = vmatpush1.msra.mxu0 %v3989
    %4225 = vmatprep.subr.mxu0 0.0
    %4226 = vmatpush1.msra.mxu0 %v3990
    %4227 = vmatprep.subr.mxu0 0.0
    %4228 = vmatpush1.msra.mxu0 %v3991
    %4229 = vmatprep.subr.mxu0 0.0
    %4230 = vmatpush1.msra.mxu0 %v3992
    %4231 = vmatprep.subr.mxu0 0.0
    %4232 = vmatpush1.msra.mxu0 %v3993
    %4233 = vmatprep.subr.mxu0 0.0
    %4234 = vmatpush1.msra.mxu0 %v3994
    %4235 = vmatprep.subr.mxu0 0.0
    %4236 = vmatpush1.msra.mxu0 %v3995
    %4237 = vmatprep.subr.mxu0 0.0
    %4238 = vmatpush1.msra.mxu0 %v3996
    %4239 = vmatprep.subr.mxu0 0.0
    %4240 = vmatpush1.msra.mxu0 %v3997
    %4241 = vmatprep.mubr.f32.mxu0 %v3964
    %4242 = vmatmul.mubr.f32.gmra.mrb[0].mxu0 %v3962
    %v4243 = vpop.f32.mrb[0].mxu0
    %v4244 = vadd.f32 %v4174, %v4243
    %v4245 = vpop.f32.mrb[0].mxu0
    %4246 = vdwg.mxu0
    %s4247 = scalar_lea.vmem %s8, 8
    %v4248 = vld [vmem:[%s4247] sm:$0xf]
    %v4250 = vsel %vm3884, %v4248, 0
    %4252 = vmatprep.subr.mxu0 %v3880
    %4253 = vmatpush1.msra.mxu0 %v3879
    %4254 = vmatprep.subr.mxu0 %v3893
    %4255 = vmatpush1.msra.mxu0 %v3890
    %4256 = vmatprep.subr.mxu0 0.0
    %4257 = vmatpush1.msra.mxu0 0.0
    %4258 = vmatprep.subr.mxu0 0.0
    %4259 = vmatpush1.msra.mxu0 0.0
    %4260 = vmatprep.subr.mxu0 0.0
    %4261 = vmatpush1.msra.mxu0 0.0
    %4262 = vmatprep.subr.mxu0 0.0
    %4263 = vmatpush1.msra.mxu0 0.0
    %4264 = vmatprep.subr.mxu0 0.0
    %4265 = vmatpush1.msra.mxu0 0.0
    %4266 = vmatprep.subr.mxu0 0.0
    %4267 = vmatpush1.msra.mxu0 0.0
    %4268 = vmatprep.subr.mxu0 0.0
    %4269 = vmatpush1.msra.mxu0 0.0
    %4270 = vmatprep.subr.mxu0 0.0
    %4271 = vmatpush1.msra.mxu0 0.0
    %4272 = vmatprep.subr.mxu0 0.0
    %4273 = vmatpush1.msra.mxu0 0.0
    %4274 = vmatprep.subr.mxu0 0.0
    %4275 = vmatpush1.msra.mxu0 0.0
    %4276 = vmatprep.subr.mxu0 0.0
    %4277 = vmatpush1.msra.mxu0 0.0
    %4278 = vmatprep.subr.mxu0 0.0
    %4279 = vmatpush1.msra.mxu0 0.0
    %4280 = vmatprep.subr.mxu0 0.0
    %4281 = vmatpush1.msra.mxu0 0.0
    %4282 = vmatprep.subr.mxu0 0.0
    %4283 = vmatpush1.msra.mxu0 0.0
    %4284 = vmatprep.subr.mxu0 0.0
    %4285 = vmatpush1.msra.mxu0 0.0
    %4286 = vmatprep.subr.mxu0 0.0
    %4287 = vmatpush1.msra.mxu0 0.0
    %4288 = vmatprep.subr.mxu0 0.0
    %4289 = vmatpush1.msra.mxu0 0.0
    %4290 = vmatprep.subr.mxu0 0.0
    %4291 = vmatpush1.msra.mxu0 0.0
    %4292 = vmatprep.subr.mxu0 0.0
    %4293 = vmatpush1.msra.mxu0 0.0
    %4294 = vmatprep.subr.mxu0 0.0
    %4295 = vmatpush1.msra.mxu0 0.0
    %4296 = vmatprep.subr.mxu0 0.0
    %4297 = vmatpush1.msra.mxu0 0.0
    %4298 = vmatprep.subr.mxu0 0.0
    %4299 = vmatpush1.msra.mxu0 0.0
    %4300 = vmatprep.subr.mxu0 0.0
    %4301 = vmatpush1.msra.mxu0 0.0
    %4302 = vmatprep.subr.mxu0 0.0
    %4303 = vmatpush1.msra.mxu0 0.0
    %4304 = vmatprep.subr.mxu0 0.0
    %4305 = vmatpush1.msra.mxu0 0.0
    %4306 = vmatprep.subr.mxu0 0.0
    %4307 = vmatpush1.msra.mxu0 0.0
    %4308 = vmatprep.subr.mxu0 0.0
    %4309 = vmatpush1.msra.mxu0 0.0
    %4310 = vmatprep.subr.mxu0 0.0
    %4311 = vmatpush1.msra.mxu0 0.0
    %4312 = vmatprep.subr.mxu0 0.0
    %4313 = vmatpush1.msra.mxu0 0.0
    %4314 = vmatprep.subr.mxu0 0.0
    %4315 = vmatpush1.msra.mxu0 0.0
    %4316 = vmatprep.mubr.f32.mxu0 0.0
    %4317 = vmatmul.mubr.f32.gmra.mrb[0].mxu0 %v4250
    %v4318 = vpop.f32.mrb[0].mxu0
    %v4319 = vadd.f32 0.0, %v4318
    %v4320 = vpop.f32.mrb[0].mxu0
    %v4321 = vadd.f32 0.0, %v4320
    %4322 = vdwg.mxu0
    %s4323 = scalar_lea.vmem %s7, 512
    %v4324 = vld [vmem:[%s4323] sm:$0xff]
    %v4325 = vld [vmem:[%s4323 + $0x8] sm:$0xff]
    %v4326 = vld [vmem:[%s4323 + $0x10] sm:$0xff]
    %v4327 = vld [vmem:[%s4323 + $0x18] sm:$0xff]
    %v4328 = vld [vmem:[%s4323 + $0x20] sm:$0xff]
    %v4329 = vld [vmem:[%s4323 + $0x28] sm:$0xff]
    %v4330 = vld [vmem:[%s4323 + $0x30] sm:$0xff]
    %v4331 = vld [vmem:[%s4323 + $0x38] sm:$0xff]
    %v4332 = vld [vmem:[%s4323 + $0x40] sm:$0xff]
    %v4333 = vld [vmem:[%s4323 + $0x48] sm:$0xff]
    %v4334 = vld [vmem:[%s4323 + $0x50] sm:$0xff]
    %v4335 = vld [vmem:[%s4323 + $0x58] sm:$0xff]
    %v4336 = vld [vmem:[%s4323 + $0x60] sm:$0xff]
    %v4337 = vld [vmem:[%s4323 + $0x68] sm:$0xff]
    %v4338 = vld [vmem:[%s4323 + $0x70] sm:$0xff]
    %v4339 = vld [vmem:[%s4323 + $0x78] sm:$0xff]
    %v4340 = vld [vmem:[%s4323 + $0x80] sm:$0xff]
    %v4341 = vld [vmem:[%s4323 + $0x88] sm:$0xff]
    %v4342 = vld [vmem:[%s4323 + $0x90] sm:$0xff]
    %v4343 = vld [vmem:[%s4323 + $0x98] sm:$0xff]
    %v4344 = vld [vmem:[%s4323 + $0xa0] sm:$0xff]
    %v4345 = vld [vmem:[%s4323 + $0xa8] sm:$0xff]
    %v4346 = vld [vmem:[%s4323 + $0xb0] sm:$0xff]
    %v4347 = vld [vmem:[%s4323 + $0xb8] sm:$0xff]
    %v4348 = vld [vmem:[%s4323 + $0xc0] sm:$0xff]
    %v4349 = vld [vmem:[%s4323 + $0xc8] sm:$0xff]
    %v4350 = vld [vmem:[%s4323 + $0xd0] sm:$0xff]
    %v4351 = vld [vmem:[%s4323 + $0xd8] sm:$0xff]
    %v4352 = vld [vmem:[%s4323 + $0xe0] sm:$0xff]
    %v4353 = vld [vmem:[%s4323 + $0xe8] sm:$0xff]
    %v4354 = vld [vmem:[%s4323 + $0xf0] sm:$0xff]
    %v4355 = vld [vmem:[%s4323 + $0xf8] sm:$0xff]
    %4356 = vmatprep.subr.mxu0 0.0
    %4357 = vmatpush1.msra.mxu0 %v4324
    %4358 = vmatprep.subr.mxu0 0.0
    %4359 = vmatpush1.msra.mxu0 %v4325
    %4360 = vmatprep.subr.mxu0 0.0
    %4361 = vmatpush1.msra.mxu0 %v4326
    %4362 = vmatprep.subr.mxu0 0.0
    %4363 = vmatpush1.msra.mxu0 %v4327
    %4364 = vmatprep.subr.mxu0 0.0
    %4365 = vmatpush1.msra.mxu0 %v4328
    %4366 = vmatprep.subr.mxu0 0.0
    %4367 = vmatpush1.msra.mxu0 %v4329
    %4368 = vmatprep.subr.mxu0 0.0
    %4369 = vmatpush1.msra.mxu0 %v4330
    %4370 = vmatprep.subr.mxu0 0.0
    %4371 = vmatpush1.msra.mxu0 %v4331
    %4372 = vmatprep.subr.mxu0 0.0
    %4373 = vmatpush1.msra.mxu0 %v4332
    %4374 = vmatprep.subr.mxu0 0.0
    %4375 = vmatpush1.msra.mxu0 %v4333
    %4376 = vmatprep.subr.mxu0 0.0
    %4377 = vmatpush1.msra.mxu0 %v4334
    %4378 = vmatprep.subr.mxu0 0.0
    %4379 = vmatpush1.msra.mxu0 %v4335
    %4380 = vmatprep.subr.mxu0 0.0
    %4381 = vmatpush1.msra.mxu0 %v4336
    %4382 = vmatprep.subr.mxu0 0.0
    %4383 = vmatpush1.msra.mxu0 %v4337
    %4384 = vmatprep.subr.mxu0 0.0
    %4385 = vmatpush1.msra.mxu0 %v4338
    %4386 = vmatprep.subr.mxu0 0.0
    %4387 = vmatpush1.msra.mxu0 %v4339
    %4388 = vmatprep.subr.mxu0 0.0
    %4389 = vmatpush1.msra.mxu0 %v4340
    %4390 = vmatprep.subr.mxu0 0.0
    %4391 = vmatpush1.msra.mxu0 %v4341
    %4392 = vmatprep.subr.mxu0 0.0
    %4393 = vmatpush1.msra.mxu0 %v4342
    %4394 = vmatprep.subr.mxu0 0.0
    %4395 = vmatpush1.msra.mxu0 %v4343
    %4396 = vmatprep.subr.mxu0 0.0
    %4397 = vmatpush1.msra.mxu0 %v4344
    %4398 = vmatprep.subr.mxu0 0.0
    %4399 = vmatpush1.msra.mxu0 %v4345
    %4400 = vmatprep.subr.mxu0 0.0
    %4401 = vmatpush1.msra.mxu0 %v4346
    %4402 = vmatprep.subr.mxu0 0.0
    %4403 = vmatpush1.msra.mxu0 %v4347
    %4404 = vmatprep.subr.mxu0 0.0
    %4405 = vmatpush1.msra.mxu0 %v4348
    %4406 = vmatprep.subr.mxu0 0.0
    %4407 = vmatpush1.msra.mxu0 %v4349
    %4408 = vmatprep.subr.mxu0 0.0
    %4409 = vmatpush1.msra.mxu0 %v4350
    %4410 = vmatprep.subr.mxu0 0.0
    %4411 = vmatpush1.msra.mxu0 %v4351
    %4412 = vmatprep.subr.mxu0 0.0
    %4413 = vmatpush1.msra.mxu0 %v4352
    %4414 = vmatprep.subr.mxu0 0.0
    %4415 = vmatpush1.msra.mxu0 %v4353
    %4416 = vmatprep.subr.mxu0 0.0
    %4417 = vmatpush1.msra.mxu0 %v4354
    %4418 = vmatprep.subr.mxu0 0.0
    %4419 = vmatpush1.msra.mxu0 %v4355
    %4420 = vmatprep.mubr.f32.mxu0 %v4321
    %4421 = vmatmul.mubr.f32.gmra.mrb[0].mxu0 %v4319
    %v4422 = vpop.f32.mrb[0].mxu0
    %v4423 = vadd.f32 0.0, %v4422
    %v4424 = vpop.f32.mrb[0].mxu0
    %4425 = vdwg.mxu0
    %v4426 = vadd.f32 %v4244, %v4423
    %s4427 = scalar_lea.vmem %s8, 12
    %v4428 = vld [vmem:[%s4427] sm:$0xf]
    %v4430 = vsel %vm3884, %v4428, 0
    %4432 = vmatprep.subr.mxu0 %v3880
    %4433 = vmatpush1.msra.mxu0 %v3879
    %4434 = vmatprep.subr.mxu0 %v3893
    %4435 = vmatpush1.msra.mxu0 %v3890
    %4436 = vmatprep.subr.mxu0 0.0
    %4437 = vmatpush1.msra.mxu0 0.0
    %4438 = vmatprep.subr.mxu0 0.0
    %4439 = vmatpush1.msra.mxu0 0.0
    %4440 = vmatprep.subr.mxu0 0.0
    %4441 = vmatpush1.msra.mxu0 0.0
    %4442 = vmatprep.subr.mxu0 0.0
    %4443 = vmatpush1.msra.mxu0 0.0
    %4444 = vmatprep.subr.mxu0 0.0
    %4445 = vmatpush1.msra.mxu0 0.0
    %4446 = vmatprep.subr.mxu0 0.0
    %4447 = vmatpush1.msra.mxu0 0.0
    %4448 = vmatprep.subr.mxu0 0.0
    %4449 = vmatpush1.msra.mxu0 0.0
    %4450 = vmatprep.subr.mxu0 0.0
    %4451 = vmatpush1.msra.mxu0 0.0
    %4452 = vmatprep.subr.mxu0 0.0
    %4453 = vmatpush1.msra.mxu0 0.0
    %4454 = vmatprep.subr.mxu0 0.0
    %4455 = vmatpush1.msra.mxu0 0.0
    %4456 = vmatprep.subr.mxu0 0.0
    %4457 = vmatpush1.msra.mxu0 0.0
    %4458 = vmatprep.subr.mxu0 0.0
    %4459 = vmatpush1.msra.mxu0 0.0
    %4460 = vmatprep.subr.mxu0 0.0
    %4461 = vmatpush1.msra.mxu0 0.0
    %4462 = vmatprep.subr.mxu0 0.0
    %4463 = vmatpush1.msra.mxu0 0.0
    %4464 = vmatprep.subr.mxu0 0.0
    %4465 = vmatpush1.msra.mxu0 0.0
    %4466 = vmatprep.subr.mxu0 0.0
    %4467 = vmatpush1.msra.mxu0 0.0
    %4468 = vmatprep.subr.mxu0 0.0
    %4469 = vmatpush1.msra.mxu0 0.0
    %4470 = vmatprep.subr.mxu0 0.0
    %4471 = vmatpush1.msra.mxu0 0.0
    %4472 = vmatprep.subr.mxu0 0.0
    %4473 = vmatpush1.msra.mxu0 0.0
    %4474 = vmatprep.subr.mxu0 0.0
    %4475 = vmatpush1.msra.mxu0 0.0
    %4476 = vmatprep.subr.mxu0 0.0
    %4477 = vmatpush1.msra.mxu0 0.0
    %4478 = vmatprep.subr.mxu0 0.0
    %4479 = vmatpush1.msra.mxu0 0.0
    %4480 = vmatprep.subr.mxu0 0.0
    %4481 = vmatpush1.msra.mxu0 0.0
    %4482 = vmatprep.subr.mxu0 0.0
    %4483 = vmatpush1.msra.mxu0 0.0
    %4484 = vmatprep.subr.mxu0 0.0
    %4485 = vmatpush1.msra.mxu0 0.0
    %4486 = vmatprep.subr.mxu0 0.0
    %4487 = vmatpush1.msra.mxu0 0.0
    %4488 = vmatprep.subr.mxu0 0.0
    %4489 = vmatpush1.msra.mxu0 0.0
    %4490 = vmatprep.subr.mxu0 0.0
    %4491 = vmatpush1.msra.mxu0 0.0
    %4492 = vmatprep.subr.mxu0 0.0
    %4493 = vmatpush1.msra.mxu0 0.0
    %4494 = vmatprep.subr.mxu0 0.0
    %4495 = vmatpush1.msra.mxu0 0.0
    %4496 = vmatprep.mubr.f32.mxu0 0.0
    %4497 = vmatmul.mubr.f32.gmra.mrb[0].mxu0 %v4430
    %v4498 = vpop.f32.mrb[0].mxu0
    %v4499 = vadd.f32 0.0, %v4498
    %v4500 = vpop.f32.mrb[0].mxu0
    %v4501 = vadd.f32 0.0, %v4500
    %4502 = vdwg.mxu0
    %s4503 = scalar_lea.vmem %s7, 768
    %v4504 = vld [vmem:[%s4503] sm:$0xff]
    %v4505 = vld [vmem:[%s4503 + $0x8] sm:$0xff]
    %v4506 = vld [vmem:[%s4503 + $0x10] sm:$0xff]
    %v4507 = vld [vmem:[%s4503 + $0x18] sm:$0xff]
    %v4508 = vld [vmem:[%s4503 + $0x20] sm:$0xff]
    %v4509 = vld [vmem:[%s4503 + $0x28] sm:$0xff]
    %v4510 = vld [vmem:[%s4503 + $0x30] sm:$0xff]
    %v4511 = vld [vmem:[%s4503 + $0x38] sm:$0xff]
    %v4512 = vld [vmem:[%s4503 + $0x40] sm:$0xff]
    %v4513 = vld [vmem:[%s4503 + $0x48] sm:$0xff]
    %v4514 = vld [vmem:[%s4503 + $0x50] sm:$0xff]
    %v4515 = vld [vmem:[%s4503 + $0x58] sm:$0xff]
    %v4516 = vld [vmem:[%s4503 + $0x60] sm:$0xff]
    %v4517 = vld [vmem:[%s4503 + $0x68] sm:$0xff]
    %v4518 = vld [vmem:[%s4503 + $0x70] sm:$0xff]
    %v4519 = vld [vmem:[%s4503 + $0x78] sm:$0xff]
    %v4520 = vld [vmem:[%s4503 + $0x80] sm:$0xff]
    %v4521 = vld [vmem:[%s4503 + $0x88] sm:$0xff]
    %v4522 = vld [vmem:[%s4503 + $0x90] sm:$0xff]
    %v4523 = vld [vmem:[%s4503 + $0x98] sm:$0xff]
    %v4524 = vld [vmem:[%s4503 + $0xa0] sm:$0xff]
    %v4525 = vld [vmem:[%s4503 + $0xa8] sm:$0xff]
    %v4526 = vld [vmem:[%s4503 + $0xb0] sm:$0xff]
    %v4527 = vld [vmem:[%s4503 + $0xb8] sm:$0xff]
    %v4528 = vld [vmem:[%s4503 + $0xc0] sm:$0xff]
    %v4529 = vld [vmem:[%s4503 + $0xc8] sm:$0xff]
    %v4530 = vld [vmem:[%s4503 + $0xd0] sm:$0xff]
    %v4531 = vld [vmem:[%s4503 + $0xd8] sm:$0xff]
    %v4532 = vld [vmem:[%s4503 + $0xe0] sm:$0xff]
    %v4533 = vld [vmem:[%s4503 + $0xe8] sm:$0xff]
    %v4534 = vld [vmem:[%s4503 + $0xf0] sm:$0xff]
    %v4535 = vld [vmem:[%s4503 + $0xf8] sm:$0xff]
    %4536 = vmatprep.subr.mxu0 0.0
    %4537 = vmatpush1.msra.mxu0 %v4504
    %4538 = vmatprep.subr.mxu0 0.0
    %4539 = vmatpush1.msra.mxu0 %v4505
    %4540 = vmatprep.subr.mxu0 0.0
    %4541 = vmatpush1.msra.mxu0 %v4506
    %4542 = vmatprep.subr.mxu0 0.0
    %4543 = vmatpush1.msra.mxu0 %v4507
    %4544 = vmatprep.subr.mxu0 0.0
    %4545 = vmatpush1.msra.mxu0 %v4508
    %4546 = vmatprep.subr.mxu0 0.0
    %4547 = vmatpush1.msra.mxu0 %v4509
    %4548 = vmatprep.subr.mxu0 0.0
    %4549 = vmatpush1.msra.mxu0 %v4510
    %4550 = vmatprep.subr.mxu0 0.0
    %4551 = vmatpush1.msra.mxu0 %v4511
    %4552 = vmatprep.subr.mxu0 0.0
    %4553 = vmatpush1.msra.mxu0 %v4512
    %4554 = vmatprep.subr.mxu0 0.0
    %4555 = vmatpush1.msra.mxu0 %v4513
    %4556 = vmatprep.subr.mxu0 0.0
    %4557 = vmatpush1.msra.mxu0 %v4514
    %4558 = vmatprep.subr.mxu0 0.0
    %4559 = vmatpush1.msra.mxu0 %v4515
    %4560 = vmatprep.subr.mxu0 0.0
    %4561 = vmatpush1.msra.mxu0 %v4516
    %4562 = vmatprep.subr.mxu0 0.0
    %4563 = vmatpush1.msra.mxu0 %v4517
    %4564 = vmatprep.subr.mxu0 0.0
    %4565 = vmatpush1.msra.mxu0 %v4518
    %4566 = vmatprep.subr.mxu0 0.0
    %4567 = vmatpush1.msra.mxu0 %v4519
    %4568 = vmatprep.subr.mxu0 0.0
    %4569 = vmatpush1.msra.mxu0 %v4520
    %4570 = vmatprep.subr.mxu0 0.0
    %4571 = vmatpush1.msra.mxu0 %v4521
    %4572 = vmatprep.subr.mxu0 0.0
    %4573 = vmatpush1.msra.mxu0 %v4522
    %4574 = vmatprep.subr.mxu0 0.0
    %4575 = vmatpush1.msra.mxu0 %v4523
    %4576 = vmatprep.subr.mxu0 0.0
    %4577 = vmatpush1.msra.mxu0 %v4524
    %4578 = vmatprep.subr.mxu0 0.0
    %4579 = vmatpush1.msra.mxu0 %v4525
    %4580 = vmatprep.subr.mxu0 0.0
    %4581 = vmatpush1.msra.mxu0 %v4526
    %4582 = vmatprep.subr.mxu0 0.0
    %4583 = vmatpush1.msra.mxu0 %v4527
    %4584 = vmatprep.subr.mxu0 0.0
    %4585 = vmatpush1.msra.mxu0 %v4528
    %4586 = vmatprep.subr.mxu0 0.0
    %4587 = vmatpush1.msra.mxu0 %v4529
    %4588 = vmatprep.subr.mxu0 0.0
    %4589 = vmatpush1.msra.mxu0 %v4530
    %4590 = vmatprep.subr.mxu0 0.0
    %4591 = vmatpush1.msra.mxu0 %v4531
    %4592 = vmatprep.subr.mxu0 0.0
    %4593 = vmatpush1.msra.mxu0 %v4532
    %4594 = vmatprep.subr.mxu0 0.0
    %4595 = vmatpush1.msra.mxu0 %v4533
    %4596 = vmatprep.subr.mxu0 0.0
    %4597 = vmatpush1.msra.mxu0 %v4534
    %4598 = vmatprep.subr.mxu0 0.0
    %4599 = vmatpush1.msra.mxu0 %v4535
    %4600 = vmatprep.mubr.f32.mxu0 %v4501
    %4601 = vmatmul.mubr.f32.gmra.mrb[0].mxu0 %v4499
    %v4602 = vpop.f32.mrb[0].mxu0
    %v4603 = vadd.f32 0.0, %v4602
    %v4604 = vpop.f32.mrb[0].mxu0
    %4605 = vdwg.mxu0
    %v4606 = vadd.f32 %v4426, %v4603
    %s4607 = scalar_lea.vmem %s8, 16
    %v4608 = vld [vmem:[%s4607] sm:$0xf]
    %v4610 = vsel %vm3884, %v4608, 0
    %4612 = vmatprep.subr.mxu0 %v3880
    %4613 = vmatpush1.msra.mxu0 %v3879
    %4614 = vmatprep.subr.mxu0 %v3893
    %4615 = vmatpush1.msra.mxu0 %v3890
    %4616 = vmatprep.subr.mxu0 0.0
    %4617 = vmatpush1.msra.mxu0 0.0
    %4618 = vmatprep.subr.mxu0 0.0
    %4619 = vmatpush1.msra.mxu0 0.0
    %4620 = vmatprep.subr.mxu0 0.0
    %4621 = vmatpush1.msra.mxu0 0.0
    %4622 = vmatprep.subr.mxu0 0.0
    %4623 = vmatpush1.msra.mxu0 0.0
    %4624 = vmatprep.subr.mxu0 0.0
    %4625 = vmatpush1.msra.mxu0 0.0
    %4626 = vmatprep.subr.mxu0 0.0
    %4627 = vmatpush1.msra.mxu0 0.0
    %4628 = vmatprep.subr.mxu0 0.0
    %4629 = vmatpush1.msra.mxu0 0.0
    %4630 = vmatprep.subr.mxu0 0.0
    %4631 = vmatpush1.msra.mxu0 0.0
    %4632 = vmatprep.subr.mxu0 0.0
    %4633 = vmatpush1.msra.mxu0 0.0
    %4634 = vmatprep.subr.mxu0 0.0
    %4635 = vmatpush1.msra.mxu0 0.0
    %4636 = vmatprep.subr.mxu0 0.0
    %4637 = vmatpush1.msra.mxu0 0.0
    %4638 = vmatprep.subr.mxu0 0.0
    %4639 = vmatpush1.msra.mxu0 0.0
    %4640 = vmatprep.subr.mxu0 0.0
    %4641 = vmatpush1.msra.mxu0 0.0
    %4642 = vmatprep.subr.mxu0 0.0
    %4643 = vmatpush1.msra.mxu0 0.0
    %4644 = vmatprep.subr.mxu0 0.0
    %4645 = vmatpush1.msra.mxu0 0.0
    %4646 = vmatprep.subr.mxu0 0.0
    %4647 = vmatpush1.msra.mxu0 0.0
    %4648 = vmatprep.subr.mxu0 0.0
    %4649 = vmatpush1.msra.mxu0 0.0
    %4650 = vmatprep.subr.mxu0 0.0
    %4651 = vmatpush1.msra.mxu0 0.0
    %4652 = vmatprep.subr.mxu0 0.0
    %4653 = vmatpush1.msra.mxu0 0.0
    %4654 = vmatprep.subr.mxu0 0.0
    %4655 = vmatpush1.msra.mxu0 0.0
    %4656 = vmatprep.subr.mxu0 0.0
    %4657 = vmatpush1.msra.mxu0 0.0
    %4658 = vmatprep.subr.mxu0 0.0
    %4659 = vmatpush1.msra.mxu0 0.0
    %4660 = vmatprep.subr.mxu0 0.0
    %4661 = vmatpush1.msra.mxu0 0.0
    %4662 = vmatprep.subr.mxu0 0.0
    %4663 = vmatpush1.msra.mxu0 0.0
    %4664 = vmatprep.subr.mxu0 0.0
    %4665 = vmatpush1.msra.mxu0 0.0
    %4666 = vmatprep.subr.mxu0 0.0
    %4667 = vmatpush1.msra.mxu0 0.0
    %4668 = vmatprep.subr.mxu0 0.0
    %4669 = vmatpush1.msra.mxu0 0.0
    %4670 = vmatprep.subr.mxu0 0.0
    %4671 = vmatpush1.msra.mxu0 0.0
    %4672 = vmatprep.subr.mxu0 0.0
    %4673 = vmatpush1.msra.mxu0 0.0
    %4674 = vmatprep.subr.mxu0 0.0
    %4675 = vmatpush1.msra.mxu0 0.0
    %4676 = vmatprep.mubr.f32.mxu0 0.0
    %4677 = vmatmul.mubr.f32.gmra.mrb[0].mxu0 %v4610
    %v4678 = vpop.f32.mrb[0].mxu0
    %v4679 = vadd.f32 0.0, %v4678
    %v4680 = vpop.f32.mrb[0].mxu0
    %v4681 = vadd.f32 0.0, %v4680
    %4682 = vdwg.mxu0
    %s4683 = scalar_lea.vmem %s7, 1024
    %v4684 = vld [vmem:[%s4683] sm:$0xff]
    %v4685 = vld [vmem:[%s4683 + $0x8] sm:$0xff]
    %v4686 = vld [vmem:[%s4683 + $0x10] sm:$0xff]
    %v4687 = vld [vmem:[%s4683 + $0x18] sm:$0xff]
    %v4688 = vld [vmem:[%s4683 + $0x20] sm:$0xff]
    %v4689 = vld [vmem:[%s4683 + $0x28] sm:$0xff]
    %v4690 = vld [vmem:[%s4683 + $0x30] sm:$0xff]
    %v4691 = vld [vmem:[%s4683 + $0x38] sm:$0xff]
    %v4692 = vld [vmem:[%s4683 + $0x40] sm:$0xff]
    %v4693 = vld [vmem:[%s4683 + $0x48] sm:$0xff]
    %v4694 = vld [vmem:[%s4683 + $0x50] sm:$0xff]
    %v4695 = vld [vmem:[%s4683 + $0x58] sm:$0xff]
    %v4696 = vld [vmem:[%s4683 + $0x60] sm:$0xff]
    %v4697 = vld [vmem:[%s4683 + $0x68] sm:$0xff]
    %v4698 = vld [vmem:[%s4683 + $0x70] sm:$0xff]
    %v4699 = vld [vmem:[%s4683 + $0x78] sm:$0xff]
    %v4700 = vld [vmem:[%s4683 + $0x80] sm:$0xff]
    %v4701 = vld [vmem:[%s4683 + $0x88] sm:$0xff]
    %v4702 = vld [vmem:[%s4683 + $0x90] sm:$0xff]
    %v4703 = vld [vmem:[%s4683 + $0x98] sm:$0xff]
    %v4704 = vld [vmem:[%s4683 + $0xa0] sm:$0xff]
    %v4705 = vld [vmem:[%s4683 + $0xa8] sm:$0xff]
    %v4706 = vld [vmem:[%s4683 + $0xb0] sm:$0xff]
    %v4707 = vld [vmem:[%s4683 + $0xb8] sm:$0xff]
    %v4708 = vld [vmem:[%s4683 + $0xc0] sm:$0xff]
    %v4709 = vld [vmem:[%s4683 + $0xc8] sm:$0xff]
    %v4710 = vld [vmem:[%s4683 + $0xd0] sm:$0xff]
    %v4711 = vld [vmem:[%s4683 + $0xd8] sm:$0xff]
    %v4712 = vld [vmem:[%s4683 + $0xe0] sm:$0xff]
    %v4713 = vld [vmem:[%s4683 + $0xe8] sm:$0xff]
    %v4714 = vld [vmem:[%s4683 + $0xf0] sm:$0xff]
    %v4715 = vld [vmem:[%s4683 + $0xf8] sm:$0xff]
    %4716 = vmatprep.subr.mxu0 0.0
    %4717 = vmatpush1.msra.mxu0 %v4684
    %4718 = vmatprep.subr.mxu0 0.0
    %4719 = vmatpush1.msra.mxu0 %v4685
    %4720 = vmatprep.subr.mxu0 0.0
    %4721 = vmatpush1.msra.mxu0 %v4686
    %4722 = vmatprep.subr.mxu0 0.0
    %4723 = vmatpush1.msra.mxu0 %v4687
    %4724 = vmatprep.subr.mxu0 0.0
    %4725 = vmatpush1.msra.mxu0 %v4688
    %4726 = vmatprep.subr.mxu0 0.0
    %4727 = vmatpush1.msra.mxu0 %v4689
    %4728 = vmatprep.subr.mxu0 0.0
    %4729 = vmatpush1.msra.mxu0 %v4690
    %4730 = vmatprep.subr.mxu0 0.0
    %4731 = vmatpush1.msra.mxu0 %v4691
    %4732 = vmatprep.subr.mxu0 0.0
    %4733 = vmatpush1.msra.mxu0 %v4692
    %4734 = vmatprep.subr.mxu0 0.0
    %4735 = vmatpush1.msra.mxu0 %v4693
    %4736 = vmatprep.subr.mxu0 0.0
    %4737 = vmatpush1.msra.mxu0 %v4694
    %4738 = vmatprep.subr.mxu0 0.0
    %4739 = vmatpush1.msra.mxu0 %v4695
    %4740 = vmatprep.subr.mxu0 0.0
    %4741 = vmatpush1.msra.mxu0 %v4696
    %4742 = vmatprep.subr.mxu0 0.0
    %4743 = vmatpush1.msra.mxu0 %v4697
    %4744 = vmatprep.subr.mxu0 0.0
    %4745 = vmatpush1.msra.mxu0 %v4698
    %4746 = vmatprep.subr.mxu0 0.0
    %4747 = vmatpush1.msra.mxu0 %v4699
    %4748 = vmatprep.subr.mxu0 0.0
    %4749 = vmatpush1.msra.mxu0 %v4700
    %4750 = vmatprep.subr.mxu0 0.0
    %4751 = vmatpush1.msra.mxu0 %v4701
    %4752 = vmatprep.subr.mxu0 0.0
    %4753 = vmatpush1.msra.mxu0 %v4702
    %4754 = vmatprep.subr.mxu0 0.0
    %4755 = vmatpush1.msra.mxu0 %v4703
    %4756 = vmatprep.subr.mxu0 0.0
    %4757 = vmatpush1.msra.mxu0 %v4704
    %4758 = vmatprep.subr.mxu0 0.0
    %4759 = vmatpush1.msra.mxu0 %v4705
    %4760 = vmatprep.subr.mxu0 0.0
    %4761 = vmatpush1.msra.mxu0 %v4706
    %4762 = vmatprep.subr.mxu0 0.0
    %4763 = vmatpush1.msra.mxu0 %v4707
    %4764 = vmatprep.subr.mxu0 0.0
    %4765 = vmatpush1.msra.mxu0 %v4708
    %4766 = vmatprep.subr.mxu0 0.0
    %4767 = vmatpush1.msra.mxu0 %v4709
    %4768 = vmatprep.subr.mxu0 0.0
    %4769 = vmatpush1.msra.mxu0 %v4710
    %4770 = vmatprep.subr.mxu0 0.0
    %4771 = vmatpush1.msra.mxu0 %v4711
    %4772 = vmatprep.subr.mxu0 0.0
    %4773 = vmatpush1.msra.mxu0 %v4712
    %4774 = vmatprep.subr.mxu0 0.0
    %4775 = vmatpush1.msra.mxu0 %v4713
    %4776 = vmatprep.subr.mxu0 0.0
    %4777 = vmatpush1.msra.mxu0 %v4714
    %4778 = vmatprep.subr.mxu0 0.0
    %4779 = vmatpush1.msra.mxu0 %v4715
    %4780 = vmatprep.mubr.f32.mxu0 %v4681
    %4781 = vmatmul.mubr.f32.gmra.mrb[0].mxu0 %v4679
    %v4782 = vpop.f32.mrb[0].mxu0
    %v4783 = vadd.f32 0.0, %v4782
    %v4784 = vpop.f32.mrb[0].mxu0
    %4785 = vdwg.mxu0
    %v4786 = vadd.f32 %v4606, %v4783
    %v4787 = vld [vmem:[%s9] sm:$0x1]
    %v4789 = vlaneseq
    %v4790 = vshrl.u32 %v4789, 7
    %v4791 = vsub.s32 0, %v4790
    %v4792 = vrot.slane %v4787, %v4791
    %v4794 = vadd.f32 %v4786, %v4792
    %v4795 = vmax.f32 %v4794, 0.0
    %v4796 = vld [vmem:[%s10] sm:$0x3]
    %vm4797 = vcmask 31744
    %v4799 = vsel %vm4797, %v4796, 0
    %v4802 = vsel %vm1791, %v4795, 0
    %4804 = vmatprep.subr.mxu0 0.0
    %4805 = vmatpush1.msra.mxu0 %v4802
    %4806 = vmatprep.subr.mxu0 0.0
    %4807 = vmatpush1.msra.mxu0 0.0
    %4808 = vmatprep.subr.mxu0 0.0
    %4809 = vmatpush1.msra.mxu0 0.0
    %4810 = vmatprep.subr.mxu0 0.0
    %4811 = vmatpush1.msra.mxu0 0.0
    %4812 = vmatprep.subr.mxu0 0.0
    %4813 = vmatpush1.msra.mxu0 0.0
    %4814 = vmatprep.subr.mxu0 0.0
    %4815 = vmatpush1.msra.mxu0 0.0
    %4816 = vmatprep.subr.mxu0 0.0
    %4817 = vmatpush1.msra.mxu0 0.0
    %4818 = vmatprep.subr.mxu0 0.0
    %4819 = vmatpush1.msra.mxu0 0.0
    %4820 = vmatprep.subr.mxu0 0.0
    %4821 = vmatpush1.msra.mxu0 0.0
    %4822 = vmatprep.subr.mxu0 0.0
    %4823 = vmatpush1.msra.mxu0 0.0
    %4824 = vmatprep.subr.mxu0 0.0
    %4825 = vmatpush1.msra.mxu0 0.0
    %4826 = vmatprep.subr.mxu0 0.0
    %4827 = vmatpush1.msra.mxu0 0.0
    %4828 = vmatprep.subr.mxu0 0.0
    %4829 = vmatpush1.msra.mxu0 0.0
    %4830 = vmatprep.subr.mxu0 0.0
    %4831 = vmatpush1.msra.mxu0 0.0
    %4832 = vmatprep.subr.mxu0 0.0
    %4833 = vmatpush1.msra.mxu0 0.0
    %4834 = vmatprep.subr.mxu0 0.0
    %4835 = vmatpush1.msra.mxu0 0.0
    %4836 = vmatprep.subr.mxu0 0.0
    %4837 = vmatpush1.msra.mxu0 0.0
    %4838 = vmatprep.subr.mxu0 0.0
    %4839 = vmatpush1.msra.mxu0 0.0
    %4840 = vmatprep.subr.mxu0 0.0
    %4841 = vmatpush1.msra.mxu0 0.0
    %4842 = vmatprep.subr.mxu0 0.0
    %4843 = vmatpush1.msra.mxu0 0.0
    %4844 = vmatprep.subr.mxu0 0.0
    %4845 = vmatpush1.msra.mxu0 0.0
    %4846 = vmatprep.subr.mxu0 0.0
    %4847 = vmatpush1.msra.mxu0 0.0
    %4848 = vmatprep.subr.mxu0 0.0
    %4849 = vmatpush1.msra.mxu0 0.0
    %4850 = vmatprep.subr.mxu0 0.0
    %4851 = vmatpush1.msra.mxu0 0.0
    %4852 = vmatprep.subr.mxu0 0.0
    %4853 = vmatpush1.msra.mxu0 0.0
    %4854 = vmatprep.subr.mxu0 0.0
    %4855 = vmatpush1.msra.mxu0 0.0
    %4856 = vmatprep.subr.mxu0 0.0
    %4857 = vmatpush1.msra.mxu0 0.0
    %4858 = vmatprep.subr.mxu0 0.0
    %4859 = vmatpush1.msra.mxu0 0.0
    %4860 = vmatprep.subr.mxu0 0.0
    %4861 = vmatpush1.msra.mxu0 0.0
    %4862 = vmatprep.subr.mxu0 0.0
    %4863 = vmatpush1.msra.mxu0 0.0
    %4864 = vmatprep.subr.mxu0 0.0
    %4865 = vmatpush1.msra.mxu0 0.0
    %4866 = vmatprep.subr.mxu0 0.0
    %4867 = vmatpush1.msra.mxu0 0.0
    %4868 = vmatprep.mubr.f32.mxu0 0.0
    %4869 = vmatmul.mubr.f32.gmra.mrb[0].mxu0 %v4799
    %v4870 = vpop.f32.mrb[0].mxu0
    %v4871 = vadd.f32 0.0, %v4870
    %v4872 = vpop.f32.mrb[0].mxu0
    %4873 = vdwg.mxu0
    %v4874 = vld [vmem:[%s11] sm:$0xff]
    %v4875 = vld [vmem:[%s11 + $0x8] sm:$0xff]
    %v4876 = vld [vmem:[%s11 + $0x10] sm:$0xff]
    %v4877 = vld [vmem:[%s11 + $0x18] sm:$0xff]
    %v4878 = vld [vmem:[%s11 + $0x20] sm:$0xff]
    %v4879 = vld [vmem:[%s11 + $0x28] sm:$0xff]
    %v4880 = vld [vmem:[%s11 + $0x30] sm:$0xff]
    %v4881 = vld [vmem:[%s11 + $0x38] sm:$0xff]
    %v4882 = vld [vmem:[%s11 + $0x40] sm:$0xff]
    %v4883 = vld [vmem:[%s11 + $0x48] sm:$0xff]
    %v4884 = vld [vmem:[%s11 + $0x50] sm:$0xff]
    %v4885 = vld [vmem:[%s11 + $0x58] sm:$0xff]
    %v4886 = vld [vmem:[%s11 + $0x60] sm:$0xff]
    %v4887 = vld [vmem:[%s11 + $0x68] sm:$0xff]
    %v4888 = vld [vmem:[%s11 + $0x70] sm:$0xff]
    %v4889 = vld [vmem:[%s11 + $0x78] sm:$0xff]
    %s4890 = scalar_lea.vmem %s10, 2
    %v4891 = vld [vmem:[%s4890] sm:$0x3]
    %v4893 = vsel %vm4797, %v4891, 0
    %4895 = vmatprep.subr.mxu0 0.0
    %4896 = vmatpush1.msra.mxu0 %v4802
    %4897 = vmatprep.subr.mxu0 0.0
    %4898 = vmatpush1.msra.mxu0 0.0
    %4899 = vmatprep.subr.mxu0 0.0
    %4900 = vmatpush1.msra.mxu0 0.0
    %4901 = vmatprep.subr.mxu0 0.0
    %4902 = vmatpush1.msra.mxu0 0.0
    %4903 = vmatprep.subr.mxu0 0.0
    %4904 = vmatpush1.msra.mxu0 0.0
    %4905 = vmatprep.subr.mxu0 0.0
    %4906 = vmatpush1.msra.mxu0 0.0
    %4907 = vmatprep.subr.mxu0 0.0
    %4908 = vmatpush1.msra.mxu0 0.0
    %4909 = vmatprep.subr.mxu0 0.0
    %4910 = vmatpush1.msra.mxu0 0.0
    %4911 = vmatprep.subr.mxu0 0.0
    %4912 = vmatpush1.msra.mxu0 0.0
    %4913 = vmatprep.subr.mxu0 0.0
    %4914 = vmatpush1.msra.mxu0 0.0
    %4915 = vmatprep.subr.mxu0 0.0
    %4916 = vmatpush1.msra.mxu0 0.0
    %4917 = vmatprep.subr.mxu0 0.0
    %4918 = vmatpush1.msra.mxu0 0.0
    %4919 = vmatprep.subr.mxu0 0.0
    %4920 = vmatpush1.msra.mxu0 0.0
    %4921 = vmatprep.subr.mxu0 0.0
    %4922 = vmatpush1.msra.mxu0 0.0
    %4923 = vmatprep.subr.mxu0 0.0
    %4924 = vmatpush1.msra.mxu0 0.0
    %4925 = vmatprep.subr.mxu0 0.0
    %4926 = vmatpush1.msra.mxu0 0.0
    %4927 = vmatprep.subr.mxu0 0.0
    %4928 = vmatpush1.msra.mxu0 0.0
    %4929 = vmatprep.subr.mxu0 0.0
    %4930 = vmatpush1.msra.mxu0 0.0
    %4931 = vmatprep.subr.mxu0 0.0
    %4932 = vmatpush1.msra.mxu0 0.0
    %4933 = vmatprep.subr.mxu0 0.0
    %4934 = vmatpush1.msra.mxu0 0.0
    %4935 = vmatprep.subr.mxu0 0.0
    %4936 = vmatpush1.msra.mxu0 0.0
    %4937 = vmatprep.subr.mxu0 0.0
    %4938 = vmatpush1.msra.mxu0 0.0
    %4939 = vmatprep.subr.mxu0 0.0
    %4940 = vmatpush1.msra.mxu0 0.0
    %4941 = vmatprep.subr.mxu0 0.0
    %4942 = vmatpush1.msra.mxu0 0.0
    %4943 = vmatprep.subr.mxu0 0.0
    %4944 = vmatpush1.msra.mxu0 0.0
    %4945 = vmatprep.subr.mxu0 0.0
    %4946 = vmatpush1.msra.mxu0 0.0
    %4947 = vmatprep.subr.mxu0 0.0
    %4948 = vmatpush1.msra.mxu0 0.0
    %4949 = vmatprep.subr.mxu0 0.0
    %4950 = vmatpush1.msra.mxu0 0.0
    %4951 = vmatprep.subr.mxu0 0.0
    %4952 = vmatpush1.msra.mxu0 0.0
    %4953 = vmatprep.subr.mxu0 0.0
    %4954 = vmatpush1.msra.mxu0 0.0
    %4955 = vmatprep.subr.mxu0 0.0
    %4956 = vmatpush1.msra.mxu0 0.0
    %4957 = vmatprep.subr.mxu0 0.0
    %4958 = vmatpush1.msra.mxu0 0.0
    %4959 = vmatprep.mubr.f32.mxu0 0.0
    %4960 = vmatmul.mubr.f32.gmra.mrb[0].mxu0 %v4893
    %v4961 = vpop.f32.mrb[0].mxu0
    %v4962 = vadd.f32 0.0, %v4961
    %v4963 = vpop.f32.mrb[0].mxu0
    %4964 = vdwg.mxu0
    %s4965 = scalar_lea.vmem %s11, 128
    %v4966 = vld [vmem:[%s4965] sm:$0xff]
    %v4967 = vld [vmem:[%s4965 + $0x8] sm:$0xff]
    %v4968 = vld [vmem:[%s4965 + $0x10] sm:$0xff]
    %v4969 = vld [vmem:[%s4965 + $0x18] sm:$0xff]
    %v4970 = vld [vmem:[%s4965 + $0x20] sm:$0xff]
    %v4971 = vld [vmem:[%s4965 + $0x28] sm:$0xff]
    %v4972 = vld [vmem:[%s4965 + $0x30] sm:$0xff]
    %v4973 = vld [vmem:[%s4965 + $0x38] sm:$0xff]
    %v4974 = vld [vmem:[%s4965 + $0x40] sm:$0xff]
    %v4975 = vld [vmem:[%s4965 + $0x48] sm:$0xff]
    %v4976 = vld [vmem:[%s4965 + $0x50] sm:$0xff]
    %v4977 = vld [vmem:[%s4965 + $0x58] sm:$0xff]
    %v4978 = vld [vmem:[%s4965 + $0x60] sm:$0xff]
    %v4979 = vld [vmem:[%s4965 + $0x68] sm:$0xff]
    %v4980 = vld [vmem:[%s4965 + $0x70] sm:$0xff]
    %v4981 = vld [vmem:[%s4965 + $0x78] sm:$0xff]
    %4982 = vmatprep.subr.mxu0 0.0
    %4983 = vmatpush1.msra.mxu0 %v4966
    %4984 = vmatprep.subr.mxu0 0.0
    %4985 = vmatpush1.msra.mxu0 %v4967
    %4986 = vmatprep.subr.mxu0 0.0
    %4987 = vmatpush1.msra.mxu0 %v4968
    %4988 = vmatprep.subr.mxu0 0.0
    %4989 = vmatpush1.msra.mxu0 %v4969
    %4990 = vmatprep.subr.mxu0 0.0
    %4991 = vmatpush1.msra.mxu0 %v4970
    %4992 = vmatprep.subr.mxu0 0.0
    %4993 = vmatpush1.msra.mxu0 %v4971
    %4994 = vmatprep.subr.mxu0 0.0
    %4995 = vmatpush1.msra.mxu0 %v4972
    %4996 = vmatprep.subr.mxu0 0.0
    %4997 = vmatpush1.msra.mxu0 %v4973
    %4998 = vmatprep.subr.mxu0 0.0
    %4999 = vmatpush1.msra.mxu0 %v4974
    %5000 = vmatprep.subr.mxu0 0.0
    %5001 = vmatpush1.msra.mxu0 %v4975
    %5002 = vmatprep.subr.mxu0 0.0
    %5003 = vmatpush1.msra.mxu0 %v4976
    %5004 = vmatprep.subr.mxu0 0.0
    %5005 = vmatpush1.msra.mxu0 %v4977
    %5006 = vmatprep.subr.mxu0 0.0
    %5007 = vmatpush1.msra.mxu0 %v4978
    %5008 = vmatprep.subr.mxu0 0.0
    %5009 = vmatpush1.msra.mxu0 %v4979
    %5010 = vmatprep.subr.mxu0 0.0
    %5011 = vmatpush1.msra.mxu0 %v4980
    %5012 = vmatprep.subr.mxu0 0.0
    %5013 = vmatpush1.msra.mxu0 %v4981
    %5014 = vmatprep.subr.mxu0 0.0
    %5015 = vmatpush1.msra.mxu0 0.0
    %5016 = vmatprep.subr.mxu0 0.0
    %5017 = vmatpush1.msra.mxu0 0.0
    %5018 = vmatprep.subr.mxu0 0.0
    %5019 = vmatpush1.msra.mxu0 0.0
    %5020 = vmatprep.subr.mxu0 0.0
    %5021 = vmatpush1.msra.mxu0 0.0
    %5022 = vmatprep.subr.mxu0 0.0
    %5023 = vmatpush1.msra.mxu0 0.0
    %5024 = vmatprep.subr.mxu0 0.0
    %5025 = vmatpush1.msra.mxu0 0.0
    %5026 = vmatprep.subr.mxu0 0.0
    %5027 = vmatpush1.msra.mxu0 0.0
    %5028 = vmatprep.subr.mxu0 0.0
    %5029 = vmatpush1.msra.mxu0 0.0
    %5030 = vmatprep.subr.mxu0 0.0
    %5031 = vmatpush1.msra.mxu0 0.0
    %5032 = vmatprep.subr.mxu0 0.0
    %5033 = vmatpush1.msra.mxu0 0.0
    %5034 = vmatprep.subr.mxu0 0.0
    %5035 = vmatpush1.msra.mxu0 0.0
    %5036 = vmatprep.subr.mxu0 0.0
    %5037 = vmatpush1.msra.mxu0 0.0
    %5038 = vmatprep.subr.mxu0 0.0
    %5039 = vmatpush1.msra.mxu0 0.0
    %5040 = vmatprep.subr.mxu0 0.0
    %5041 = vmatpush1.msra.mxu0 0.0
    %5042 = vmatprep.subr.mxu0 0.0
    %5043 = vmatpush1.msra.mxu0 0.0
    %5044 = vmatprep.subr.mxu0 0.0
    %5045 = vmatpush1.msra.mxu0 0.0
    %5046 = vmatprep.mubr.f32.mxu0 0.0
    %5047 = vmatmul.mubr.f32.gmra.mrb[0].mxu0 %v4962
    %v5048 = vpop.f32.mrb[0].mxu0
    %v5049 = vadd.f32 0.0, %v5048
    %v5050 = vpop.f32.mrb[0].mxu0
    %5051 = vdwg.mxu0
    %5052 = vmatprep.subr.mxu0 0.0
    %5053 = vmatpush1.msra.mxu0 %v4874
    %5054 = vmatprep.subr.mxu0 0.0
    %5055 = vmatpush1.msra.mxu0 %v4875
    %5056 = vmatprep.subr.mxu0 0.0
    %5057 = vmatpush1.msra.mxu0 %v4876
    %5058 = vmatprep.subr.mxu0 0.0
    %5059 = vmatpush1.msra.mxu0 %v4877
    %5060 = vmatprep.subr.mxu0 0.0
    %5061 = vmatpush1.msra.mxu0 %v4878
    %5062 = vmatprep.subr.mxu0 0.0
    %5063 = vmatpush1.msra.mxu0 %v4879
    %5064 = vmatprep.subr.mxu0 0.0
    %5065 = vmatpush1.msra.mxu0 %v4880
    %5066 = vmatprep.subr.mxu0 0.0
    %5067 = vmatpush1.msra.mxu0 %v4881
    %5068 = vmatprep.subr.mxu0 0.0
    %5069 = vmatpush1.msra.mxu0 %v4882
    %5070 = vmatprep.subr.mxu0 0.0
    %5071 = vmatpush1.msra.mxu0 %v4883
    %5072 = vmatprep.subr.mxu0 0.0
    %5073 = vmatpush1.msra.mxu0 %v4884
    %5074 = vmatprep.subr.mxu0 0.0
    %5075 = vmatpush1.msra.mxu0 %v4885
    %5076 = vmatprep.subr.mxu0 0.0
    %5077 = vmatpush1.msra.mxu0 %v4886
    %5078 = vmatprep.subr.mxu0 0.0
    %5079 = vmatpush1.msra.mxu0 %v4887
    %5080 = vmatprep.subr.mxu0 0.0
    %5081 = vmatpush1.msra.mxu0 %v4888
    %5082 = vmatprep.subr.mxu0 0.0
    %5083 = vmatpush1.msra.mxu0 %v4889
    %5084 = vmatprep.subr.mxu0 0.0
    %5085 = vmatpush1.msra.mxu0 0.0
    %5086 = vmatprep.subr.mxu0 0.0
    %5087 = vmatpush1.msra.mxu0 0.0
    %5088 = vmatprep.subr.mxu0 0.0
    %5089 = vmatpush1.msra.mxu0 0.0
    %5090 = vmatprep.subr.mxu0 0.0
    %5091 = vmatpush1.msra.mxu0 0.0
    %5092 = vmatprep.subr.mxu0 0.0
    %5093 = vmatpush1.msra.mxu0 0.0
    %5094 = vmatprep.subr.mxu0 0.0
    %5095 = vmatpush1.msra.mxu0 0.0
    %5096 = vmatprep.subr.mxu0 0.0
    %5097 = vmatpush1.msra.mxu0 0.0
    %5098 = vmatprep.subr.mxu0 0.0
    %5099 = vmatpush1.msra.mxu0 0.0
    %5100 = vmatprep.subr.mxu0 0.0
    %5101 = vmatpush1.msra.mxu0 0.0
    %5102 = vmatprep.subr.mxu0 0.0
    %5103 = vmatpush1.msra.mxu0 0.0
    %5104 = vmatprep.subr.mxu0 0.0
    %5105 = vmatpush1.msra.mxu0 0.0
    %5106 = vmatprep.subr.mxu0 0.0
    %5107 = vmatpush1.msra.mxu0 0.0
    %5108 = vmatprep.subr.mxu0 0.0
    %5109 = vmatpush1.msra.mxu0 0.0
    %5110 = vmatprep.subr.mxu0 0.0
    %5111 = vmatpush1.msra.mxu0 0.0
    %5112 = vmatprep.subr.mxu0 0.0
    %5113 = vmatpush1.msra.mxu0 0.0
    %5114 = vmatprep.subr.mxu0 0.0
    %5115 = vmatpush1.msra.mxu0 0.0
    %5116 = vmatprep.mubr.f32.mxu0 0.0
    %5117 = vmatmul.mubr.f32.gmra.mrb[0].mxu0 %v4871
    %v5118 = vpop.f32.mrb[0].mxu0
    %v5119 = vadd.f32 %v5049, %v5118
    %v5120 = vpop.f32.mrb[0].mxu0
    %5121 = vdwg.mxu0
    %v5122 = vld [vmem:[%s12] sm:$0x1]
    %v5124 = vlaneseq
    %v5125 = vshrl.u32 %v5124, 7
    %v5126 = vsub.s32 0, %v5125
    %v5127 = vrot.slane %v5122, %v5126
    %v5129 = vadd.f32 %v5119, %v5127
    %5130 = vst [vmem:[#allocation2] sm:$0x3] %v5129
    // Predicated region
    $region54: #{dqn_forward_pallas.1} parent=1 // pred_check
      _
    $region55: #{dqn_forward_pallas.1} parent=1 // pred_check_branch
      %5132 = sbr.rel (0) target = $region57
    $region56: #{dqn_forward_pallas.1} parent=1 // pred_region
      %s5134 = ssub.s32 32, 32
      %5135 = vsyncadd [#allocation3], %s5134
      %s5137 = sshll.u32 [#allocation2], 4
      %s5138 = int_to_ptr.vmem [resolvable:$true] %s5137
      %5140 = dma.vmem_to_hbm [thread:$0]  %s5138, 32, %s13, [#allocation3]
    $region57: #{dqn_forward_pallas.1} parent=1 // pred_fallthru
      _
    // Predicated region
    $region58: #{dqn_forward_pallas.1} parent=1 // pred_check
      _
    $region59: #{dqn_forward_pallas.1} parent=1 // pred_check_branch
      %5142 = sbr.rel (0) target = $region61
    $region60: #{dqn_forward_pallas.1} parent=1 // pred_region
      %5143 = dma.done [#allocation3], 32
    $region61: #{dqn_forward_pallas.1} parent=1 // pred_fallthru
      _
    %5144 = vsyncpa [#allocation3], 1

</llo_original>
